<compile_context>
chip_gen: v6e
topology: v6e:2x2x1
jax: 0.10.0
libtpu: 0.0.40
codegen_flags: <defaults>
</compile_context>

<pallas_src>
import jax
import jax.numpy as jnp
from jax.experimental import pallas as pl
from jax.experimental.pallas import tpu as pltpu


def _round_up(n, m):
    return -(-n // m) * m


# ----------------------------------------------------------------------------
# Banded ("implicit GEMM") weight construction -- trace/host side, per cell.
# ----------------------------------------------------------------------------
def _band_one(w, Wdim, lane=128):
    """w: (K, K, Cs, Ch) HWIO conv weight for one gate and one source.

    Returns B of shape (K * Wrow, Wdim * Ch), with Wrow = round_up(Wp*Cs, lane),
    Wp = Wdim + 2*(K//2), such that

      B[dy*Wrow + xp*Cs + ci, x*Ch + co] = w[dy, xp - x, ci, co]  if 0 <= xp-x < K
                                           0                      otherwise

    so that (K stacked padded rows of the source) @ B equals the "same" conv of the
    source with w, with the output already in the lane-dense (W*Ch) collapsed layout.
    """
    K, _, Cs, Ch = w.shape
    P = K // 2
    Wp = Wdim + 2 * P
    row_w = Wp * Cs
    row_wp = _round_up(row_w, lane)
    eye = jnp.eye(Wdim, dtype=w.dtype)
    band = jnp.zeros((K, Wp, Cs, Wdim, Ch), w.dtype)
    for dx in range(K):
        # blk[dy, s, ci, x, co] = w[dy, dx, ci, co] * (s == x); placed at xp = x + dx.
        blk = jnp.einsum('kic,sx->ksixc', w[:, dx], eye)
        band = band.at[:, dx:dx + Wdim].add(blk)
    band = band.reshape(K, row_w, Wdim * Ch)
    if row_wp != row_w:  # zero rows matching the lane-padded scratch columns
        band = jnp.pad(band, ((0, 0), (0, row_wp - row_w), (0, 0)))
    return band.reshape(K * row_wp, Wdim * Ch)


def _prepare_cell(p, Wdim, mxu_dtype):
    """Fused banded weights + fused bias for one ConvGRU cell at spatial width Wdim."""
    wr, wu, wo = p["wr"], p["wu"], p["wo"]          # (K, K, Cin+Ch, Ch)
    K = wr.shape[0]
    Ch = wr.shape[-1]
    Cin = wr.shape[2] - Ch
    # x-source rows feed [r | u | o_x]; h-source rows feed [r | u | 0] (gate-major).
    bx = jnp.concatenate([_band_one(wr[:, :, :Cin], Wdim),
                          _band_one(wu[:, :, :Cin], Wdim),
                          _band_one(wo[:, :, :Cin], Wdim)], axis=1)
    bh_r = _band_one(wr[:, :, Cin:], Wdim)
    bh_u = _band_one(wu[:, :, Cin:], Wdim)
    bh = jnp.concatenate([bh_r, bh_u, jnp.zeros_like(bh_r)], axis=1)
    w1 = jnp.concatenate([bx, bh], axis=0).astype(mxu_dtype)   # (K*(Wrx+Wrh), 3*W*Ch)
    wrh = _band_one(wo[:, :, Cin:], Wdim).astype(mxu_dtype)    # (K*Wrh, W*Ch)
    b1 = jnp.concatenate([jnp.tile(p["br"], (1, Wdim)),
                          jnp.tile(p["bu"], (1, Wdim)),
                          jnp.tile(p["bo"], (1, Wdim))], axis=1).astype(jnp.float32)
    return w1, wrh, b1, Cin, Ch, K


# ----------------------------------------------------------------------------
# Pallas kernel: fused ConvGRU cell step for Bt batch elements (M = Bt*H rows).
# ----------------------------------------------------------------------------
def _make_cell_kernel(Bt, H, W, Cin, Ch, K, mxu_dtype):
    P = K // 2
    Hp, Wp = H + 2 * P, W + 2 * P
    M = Bt * H
    WC = W * Ch

    def write_padded(ref, val, C):
        # ref: (Bt, Hp, Wrow) scratch (Wrow = lane-padded Wp*C);  val: (Bt, H, W*C).
        # Direct interior store + thin zero halo/pad-strip stores (full coverage,
        # no concatenate, no full-buffer zero fill).
        Wrow = ref.shape[-1]
        ref[:, 0:P, :] = jnp.zeros((Bt, P, Wrow), ref.dtype)
        ref[:, P + H:Hp, :] = jnp.zeros((Bt, P, Wrow), ref.dtype)
        ref[:, P:P + H, 0:P * C] = jnp.zeros((Bt, H, P * C), ref.dtype)
        ref[:, P:P + H, (P + W) * C:Wrow] = jnp.zeros(
            (Bt, H, Wrow - (P + W) * C), ref.dtype)
        ref[:, P:P + H, P * C:(P + W) * C] = val.astype(ref.dtype)

    def row_slab(ref):
        # K vertically shifted views of the padded rows, concatenated along lanes
        # (offsets are lane-aligned because Wrow is a multiple of 128):
        # (Bt, H, Wrow) x K  ->  (Bt*H, K*Wrow)
        return jnp.concatenate([ref[:, dy:dy + H, :] for dy in range(K)],
                               axis=-1).reshape(M, K * ref.shape[-1])

    def kernel(x_ref, h_ref, w1_ref, wrh_ref, b1_ref, out_ref,
               xpad_ref, hpad_ref, rhpad_ref):
        write_padded(xpad_ref, x_ref[...], Cin)
        write_padded(hpad_ref, h_ref[...], Ch)

        # One fused MXU matmul: r | u | o_x for every pixel, lane-dense output.
        lhs = jnp.concatenate([row_slab(xpad_ref), row_slab(hpad_ref)], axis=-1)
        acc = jnp.dot(lhs, w1_ref[...], preferred_element_type=jnp.float32)
        acc = acc + b1_ref[...]                       # (M, 3*W*Ch), f32

        h_wide = h_ref[...].astype(jnp.float32).reshape(M, WC)
        r = jax.nn.sigmoid(acc[:, 0:WC])
        u = jax.nn.sigmoid(acc[:, WC:2 * WC])

        # o-gate h-half uses r*h -> second banded matmul.
        write_padded(rhpad_ref, (r * h_wide).reshape(Bt, H, WC), Ch)
        acc_o = jnp.dot(row_slab(rhpad_ref), wrh_ref[...],
                        preferred_element_type=jnp.float32)

        o = jnp.tanh(acc[:, 2 * WC:] + acc_o)
        new_h = (1.0 - u) * h_wide + u * o
        out_ref[...] = new_h.reshape(Bt, H, WC).astype(out_ref.dtype)

    return kernel


def conv_gru_cell(x, h, p, *, mxu_dtype=jnp.bfloat16):
    """One ConvGRU cell step via the fused banded-matmul Pallas kernel.

    x, h: (B, H, W, C) NHWC activations.
    """
    B, H, W, Cx = x.shape
    w1, wrh, b1, Cin, Ch, K = _prepare_cell(p, W, mxu_dtype)
    assert Cx == Cin and h.shape == (B, H, W, Ch), (
        "requires input_size == hidden_size (as the PyTorch module implicitly does)")
    P = K // 2
    Hp, Wp = H + 2 * P, W + 2 * P
    wrow_x = _round_up(Wp * Cin, 128)
    wrow_h = _round_up(Wp * Ch, 128)

    # Fold batch into the matmul M dimension; keep at most 2 grid steps so both
    # TensorCores are used on v7x while per-step overhead stays negligible elsewhere.
    grid_b = 2 if (B >= 2 and B % 2 == 0) else 1
    Bt = B // grid_b

    # Lane-dense collapsed activation layout (last dim W*C -> full 128-lane stores).
    xc = x.reshape(B, H, W * Cin)
    hc = h.reshape(B, H, W * Ch)

    kernel = _make_cell_kernel(Bt, H, W, Cin, Ch, K, mxu_dtype)

    def resident(a):   # whole array, same block every grid step (stays VMEM-resident)
        return pl.BlockSpec(a.shape, lambda b, nd=a.ndim: (0,) * nd)

    def act_block(wc):
        return pl.BlockSpec((Bt, H, wc), lambda b: (b, 0, 0))

    # VMEM budget: resident weights + double-buffered activation blocks + scratches,
    # with 4x margin; stays far below v7x's 64 MiB physical VMEM.
    itm = jnp.dtype(mxu_dtype).itemsize
    footprint = (w1.size * itm + wrh.size * itm + b1.size * 4
                 + 2 * Bt * H * W * (Cin + 2 * Ch) * x.dtype.itemsize
                 + Bt * Hp * (wrow_x + 2 * wrow_h) * itm)
    vmem_bytes = int(min(48 * 2**20, max(8 * 2**20, 4 * footprint)))

    out = pl.pallas_call(
        kernel,
        out_shape=jax.ShapeDtypeStruct((B, H, W * Ch), x.dtype),
        grid=(grid_b,),
        in_specs=[act_block(W * Cin), act_block(W * Ch),
                  resident(w1), resident(wrh), resident(b1)],
        out_specs=act_block(W * Ch),
        scratch_shapes=[pltpu.VMEM((Bt, Hp, wrow_x), mxu_dtype),
                        pltpu.VMEM((Bt, Hp, wrow_h), mxu_dtype),
                        pltpu.VMEM((Bt, Hp, wrow_h), mxu_dtype)],
        compiler_params=pltpu.CompilerParams(
            dimension_semantics=("parallel",),
            vmem_limit_bytes=vmem_bytes),
    )(xc, hc, w1, wrh, b1)
    return out.reshape(B, H, W, Ch)


# ----------------------------------------------------------------------------
# ConvGRU stack / EncoderDecoder (mirrors the PyTorch module structure).
# ----------------------------------------------------------------------------
def conv_gru(x, h_list, layer_params, cell_fn):
    if h_list is None:
        h_list = [None] * len(layer_params)
    h_out = list(h_list)
    for i, p in enumerate(layer_params):
        h = h_out[i]
        if h is None:
            # PyTorch: zeros with the *input* tensor's channel count.
            h = jnp.zeros_like(x)
        x = cell_fn(x, h, p)
        h_out[i] = x
    return x, h_out


def encoder_decoder(x_enc, x_dec, enc_params, dec_params,
                    h_enc=None, h_dec=None, cell_fn=conv_gru_cell):
    _, h_enc = conv_gru(x_enc, h_enc, enc_params, cell_fn)
    out, _ = conv_gru(x_dec, h_enc, dec_params, cell_fn)
    return out


# ----------------------------------------------------------------------------
# Pure-JAX reference (mirrors the PyTorch code, full f32) for a correctness check.
# ----------------------------------------------------------------------------
def _conv2d_ref(x, w, b):
    y = jax.lax.conv_general_dilated(
        x, w, window_strides=(1, 1), padding="SAME",
        dimension_numbers=("NHWC", "HWIO", "NHWC"),
        precision=jax.lax.Precision.HIGHEST)
    return y + b.reshape(1, 1, 1, -1)


def _cell_ref(x, h, p):
    comb = jnp.concatenate([x, h], axis=-1)
    r = jax.nn.sigmoid(_conv2d_ref(comb, p["wr"], p["br"]))
    u = jax.nn.sigmoid(_conv2d_ref(comb, p["wu"], p["bu"]))
    comb_r = jnp.concatenate([x, r * h], axis=-1)
    o = jnp.tanh(_conv2d_ref(comb_r, p["wo"], p["bo"]))
    return (1.0 - u) * h + u * o


# ----------------------------------------------------------------------------
# Deterministic synthetic parameter init (shapes follow nn.Conv2d in the cell).
# ----------------------------------------------------------------------------
def init_cell_params(key, cin, ch, k):
    ks = jax.random.split(key, 6)
    s = 0.1

    def w(kk):
        return s * jax.random.normal(kk, (k, k, cin + ch, ch), jnp.float32)

    def b(kk):
        return s * jax.random.normal(kk, (1, ch), jnp.float32)

    return {"wr": w(ks[0]), "wu": w(ks[1]), "wo": w(ks[2]),
            "br": b(ks[3]), "bu": b(ks[4]), "bo": b(ks[5])}


if __name__ == "__main__":
    key = jax.random.PRNGKey(0)
    B, H, W, C = 2, 16, 16, 8
    K = 3
    num_layers = 2

    k_enc, k_dec, kx1, kx2 = jax.random.split(key, 4)
    enc_keys = jax.random.split(k_enc, num_layers)
    dec_keys = jax.random.split(k_dec, num_layers)

    # input_size == hidden_size for every layer (required by the module itself).
    enc_params = [init_cell_params(enc_keys[i], C, C, K) for i in range(num_layers)]
    dec_params = [init_cell_params(dec_keys[i], C, C, K) for i in range(num_layers)]

    x_enc = jax.random.normal(kx1, (B, H, W, C), jnp.float32)
    x_dec = jax.random.normal(kx2, (B, H, W, C), jnp.float32)

    run = jax.jit(encoder_decoder)
    out = jax.block_until_ready(run(x_enc, x_dec, enc_params, dec_params))

    ref = jax.block_until_ready(
        encoder_decoder(x_enc, x_dec, enc_params, dec_params, cell_fn=_cell_ref))

    assert out.shape == (B, H, W, C), out.shape
    # Pallas path uses bf16 MXU operands (f32 accumulation, f32 gate math) vs an
    # f32 HIGHEST-precision reference, hence the relaxed tolerance.
    assert bool(jnp.allclose(out, ref, atol=5e-2, rtol=5e-2)), (
        "Pallas result does not match reference")

    print("KERNEL_OK")
</pallas_src>

<mosaic_0001>
module attributes {stable_mosaic.version = 11 : i64} {
  func.func @kernel(%arg0: i32, %arg1: memref<1x16x128xf32, #tpu.memory_space<vmem>>, %arg2: memref<1x16x128xf32, #tpu.memory_space<vmem>>, %arg3: memref<1536x384xbf16, #tpu.memory_space<vmem>>, %arg4: memref<768x128xbf16, #tpu.memory_space<vmem>>, %arg5: memref<1x384xf32, #tpu.memory_space<vmem>>, %arg6: memref<1x16x128xf32, #tpu.memory_space<vmem>>, %arg7: memref<1x18x256xbf16, #tpu.memory_space<vmem>>, %arg8: memref<1x18x256xbf16, #tpu.memory_space<vmem>>, %arg9: memref<1x18x256xbf16, #tpu.memory_space<vmem>>) attributes {dimension_semantics = [#tpu.dimension_semantics<parallel>], iteration_bounds = array<i64: 2>, scalar_prefetch = 0 : i64, scratch_operands = 3 : i64, tpu.core_type = #tpu.core_type<tc>, window_params = [{transform_indices = @transform_0, window_bounds = array<i64: 1, 16, 128>}, {transform_indices = @transform_1, window_bounds = array<i64: 1, 16, 128>}, {pipeline_mode = #tpu.pipeline_mode<synchronous>, transform_indices = @transform_2, window_bounds = array<i64: 1536, 384>}, {pipeline_mode = #tpu.pipeline_mode<synchronous>, transform_indices = @transform_3, window_bounds = array<i64: 768, 128>}, {pipeline_mode = #tpu.pipeline_mode<synchronous>, transform_indices = @transform_4, window_bounds = array<i64: 1, 384>}, {transform_indices = @transform_5, window_bounds = array<i64: 1, 16, 128>}]} {
    %c0 = arith.constant 0 : index
    %c0_0 = arith.constant 0 : index
    %c0_1 = arith.constant 0 : index
    %0 = vector.load %arg1[%c0, %c0_0, %c0_1] : memref<1x16x128xf32, #tpu.memory_space<vmem>>, vector<1x16x128xf32>
    %cst = arith.constant 0.000000e+00 : bf16
    %1 = vector.broadcast %cst : bf16 to vector<1x1x256xbf16>
    %c0_2 = arith.constant 0 : index
    %c0_3 = arith.constant 0 : index
    %c0_4 = arith.constant 0 : index
    %2 = vector.load %arg7[%c0_2, %c0_3, %c0_4] : memref<1x18x256xbf16, #tpu.memory_space<vmem>>, vector<1x1x256xbf16>
    tpu.vector_store %arg7[%c0_2, %c0_3, %c0_4], %1 {strides = array<i32>} : memref<1x18x256xbf16, #tpu.memory_space<vmem>>, vector<1x1x256xbf16>,
    %cst_5 = arith.constant 0.000000e+00 : bf16
    %3 = vector.broadcast %cst_5 : bf16 to vector<1x1x256xbf16>
    %c0_6 = arith.constant 0 : index
    %c17 = arith.constant 17 : index
    %c0_7 = arith.constant 0 : index
    %4 = vector.load %arg7[%c0_6, %c17, %c0_7] : memref<1x18x256xbf16, #tpu.memory_space<vmem>>, vector<1x1x256xbf16>
    tpu.vector_store %arg7[%c0_6, %c17, %c0_7], %3 {strides = array<i32>} : memref<1x18x256xbf16, #tpu.memory_space<vmem>>, vector<1x1x256xbf16>,
    %cst_8 = arith.constant 0.000000e+00 : bf16
    %5 = vector.broadcast %cst_8 : bf16 to vector<1x16x8xbf16>
    %c0_9 = arith.constant 0 : index
    %c1 = arith.constant 1 : index
    %c0_10 = arith.constant 0 : index
    %6 = vector.load %arg7[%c0_9, %c1, %c0_10] : memref<1x18x256xbf16, #tpu.memory_space<vmem>>, vector<1x16x8xbf16>
    tpu.vector_store %arg7[%c0_9, %c1, %c0_10], %5 {strides = array<i32>} : memref<1x18x256xbf16, #tpu.memory_space<vmem>>, vector<1x16x8xbf16>,
    %cst_11 = arith.constant 0.000000e+00 : bf16
    %7 = vector.broadcast %cst_11 : bf16 to vector<1x16x120xbf16>
    %c0_12 = arith.constant 0 : index
    %c1_13 = arith.constant 1 : index
    %c136 = arith.constant 136 : index
    %8 = vector.load %arg7[%c0_12, %c1_13, %c136] : memref<1x18x256xbf16, #tpu.memory_space<vmem>>, vector<1x16x120xbf16>
    tpu.vector_store %arg7[%c0_12, %c1_13, %c136], %7 {strides = array<i32>} : memref<1x18x256xbf16, #tpu.memory_space<vmem>>, vector<1x16x120xbf16>,
    %9 = arith.truncf %0 : vector<1x16x128xf32> to vector<1x16x128xbf16>
    %c0_14 = arith.constant 0 : index
    %c1_15 = arith.constant 1 : index
    %c8 = arith.constant 8 : index
    %10 = vector.load %arg7[%c0_14, %c1_15, %c8] : memref<1x18x256xbf16, #tpu.memory_space<vmem>>, vector<1x16x128xbf16>
    tpu.vector_store %arg7[%c0_14, %c1_15, %c8], %9 {strides = array<i32>} : memref<1x18x256xbf16, #tpu.memory_space<vmem>>, vector<1x16x128xbf16>,
    %c0_16 = arith.constant 0 : index
    %c0_17 = arith.constant 0 : index
    %c0_18 = arith.constant 0 : index
    %11 = vector.load %arg2[%c0_16, %c0_17, %c0_18] : memref<1x16x128xf32, #tpu.memory_space<vmem>>, vector<1x16x128xf32>
    %cst_19 = arith.constant 0.000000e+00 : bf16
    %12 = vector.broadcast %cst_19 : bf16 to vector<1x1x256xbf16>
    %c0_20 = arith.constant 0 : index
    %c0_21 = arith.constant 0 : index
    %c0_22 = arith.constant 0 : index
    %13 = vector.load %arg8[%c0_20, %c0_21, %c0_22] : memref<1x18x256xbf16, #tpu.memory_space<vmem>>, vector<1x1x256xbf16>
    tpu.vector_store %arg8[%c0_20, %c0_21, %c0_22], %12 {strides = array<i32>} : memref<1x18x256xbf16, #tpu.memory_space<vmem>>, vector<1x1x256xbf16>,
    %cst_23 = arith.constant 0.000000e+00 : bf16
    %14 = vector.broadcast %cst_23 : bf16 to vector<1x1x256xbf16>
    %c0_24 = arith.constant 0 : index
    %c17_25 = arith.constant 17 : index
    %c0_26 = arith.constant 0 : index
    %15 = vector.load %arg8[%c0_24, %c17_25, %c0_26] : memref<1x18x256xbf16, #tpu.memory_space<vmem>>, vector<1x1x256xbf16>
    tpu.vector_store %arg8[%c0_24, %c17_25, %c0_26], %14 {strides = array<i32>} : memref<1x18x256xbf16, #tpu.memory_space<vmem>>, vector<1x1x256xbf16>,
    %cst_27 = arith.constant 0.000000e+00 : bf16
    %16 = vector.broadcast %cst_27 : bf16 to vector<1x16x8xbf16>
    %c0_28 = arith.constant 0 : index
    %c1_29 = arith.constant 1 : index
    %c0_30 = arith.constant 0 : index
    %17 = vector.load %arg8[%c0_28, %c1_29, %c0_30] : memref<1x18x256xbf16, #tpu.memory_space<vmem>>, vector<1x16x8xbf16>
    tpu.vector_store %arg8[%c0_28, %c1_29, %c0_30], %16 {strides = array<i32>} : memref<1x18x256xbf16, #tpu.memory_space<vmem>>, vector<1x16x8xbf16>,
    %cst_31 = arith.constant 0.000000e+00 : bf16
    %18 = vector.broadcast %cst_31 : bf16 to vector<1x16x120xbf16>
    %c0_32 = arith.constant 0 : index
    %c1_33 = arith.constant 1 : index
    %c136_34 = arith.constant 136 : index
    %19 = vector.load %arg8[%c0_32, %c1_33, %c136_34] : memref<1x18x256xbf16, #tpu.memory_space<vmem>>, vector<1x16x120xbf16>
    tpu.vector_store %arg8[%c0_32, %c1_33, %c136_34], %18 {strides = array<i32>} : memref<1x18x256xbf16, #tpu.memory_space<vmem>>, vector<1x16x120xbf16>,
    %20 = arith.truncf %11 : vector<1x16x128xf32> to vector<1x16x128xbf16>
    %c0_35 = arith.constant 0 : index
    %c1_36 = arith.constant 1 : index
    %c8_37 = arith.constant 8 : index
    %21 = vector.load %arg8[%c0_35, %c1_36, %c8_37] : memref<1x18x256xbf16, #tpu.memory_space<vmem>>, vector<1x16x128xbf16>
    tpu.vector_store %arg8[%c0_35, %c1_36, %c8_37], %20 {strides = array<i32>} : memref<1x18x256xbf16, #tpu.memory_space<vmem>>, vector<1x16x128xbf16>,
    %c0_38 = arith.constant 0 : index
    %c0_39 = arith.constant 0 : index
    %c0_40 = arith.constant 0 : index
    %22 = vector.load %arg7[%c0_38, %c0_39, %c0_40] : memref<1x18x256xbf16, #tpu.memory_space<vmem>>, vector<1x16x256xbf16>
    %c0_41 = arith.constant 0 : index
    %c1_42 = arith.constant 1 : index
    %c0_43 = arith.constant 0 : index
    %23 = vector.load %arg7[%c0_41, %c1_42, %c0_43] : memref<1x18x256xbf16, #tpu.memory_space<vmem>>, vector<1x16x256xbf16>
    %c0_44 = arith.constant 0 : index
    %c2 = arith.constant 2 : index
    %c0_45 = arith.constant 0 : index
    %24 = vector.load %arg7[%c0_44, %c2, %c0_45] : memref<1x18x256xbf16, #tpu.memory_space<vmem>>, vector<1x16x256xbf16>
    %25 = tpu.concatenate %22, %23, %24 in 2 : vector<1x16x256xbf16>, vector<1x16x256xbf16>, vector<1x16x256xbf16> -> vector<1x16x768xbf16>
    %26 = vector.shape_cast %25 : vector<1x16x768xbf16> to vector<16x768xbf16>
    %c0_46 = arith.constant 0 : index
    %c0_47 = arith.constant 0 : index
    %c0_48 = arith.constant 0 : index
    %27 = vector.load %arg8[%c0_46, %c0_47, %c0_48] : memref<1x18x256xbf16, #tpu.memory_space<vmem>>, vector<1x16x256xbf16>
    %c0_49 = arith.constant 0 : index
    %c1_50 = arith.constant 1 : index
    %c0_51 = arith.constant 0 : index
    %28 = vector.load %arg8[%c0_49, %c1_50, %c0_51] : memref<1x18x256xbf16, #tpu.memory_space<vmem>>, vector<1x16x256xbf16>
    %c0_52 = arith.constant 0 : index
    %c2_53 = arith.constant 2 : index
    %c0_54 = arith.constant 0 : index
    %29 = vector.load %arg8[%c0_52, %c2_53, %c0_54] : memref<1x18x256xbf16, #tpu.memory_space<vmem>>, vector<1x16x256xbf16>
    %30 = tpu.concatenate %27, %28, %29 in 2 : vector<1x16x256xbf16>, vector<1x16x256xbf16>, vector<1x16x256xbf16> -> vector<1x16x768xbf16>
    %31 = vector.shape_cast %30 : vector<1x16x768xbf16> to vector<16x768xbf16>
    %32 = tpu.concatenate %26, %31 in 1 : vector<16x768xbf16>, vector<16x768xbf16> -> vector<16x1536xbf16>
    %c0_55 = arith.constant 0 : index
    %c0_56 = arith.constant 0 : index
    %33 = vector.load %arg3[%c0_55, %c0_56] : memref<1536x384xbf16, #tpu.memory_space<vmem>>, vector<1536x384xbf16>
    %cst_57 = arith.constant dense<0.000000e+00> : vector<16x384xf32>
    %34 = tpu.matmul %32, %33, %cst_57 {dimension_numbers = #tpu.dot_dimension_numbers<[1], [0], [0], [1], [0, 0, 1, 1], [], []>} : vector<16x1536xbf16>, vector<1536x384xbf16>, vector<16x384xf32> -> vector<16x384xf32>
    %c0_58 = arith.constant 0 : index
    %c0_59 = arith.constant 0 : index
    %35 = vector.load %arg5[%c0_58, %c0_59] : memref<1x384xf32, #tpu.memory_space<vmem>>, vector<1x384xf32>
    %36 = vector.broadcast %35 : vector<1x384xf32> to vector<16x384xf32>
    %37 = arith.addf %34, %36 : vector<16x384xf32>
    %c0_60 = arith.constant 0 : index
    %c0_61 = arith.constant 0 : index
    %c0_62 = arith.constant 0 : index
    %38 = vector.load %arg2[%c0_60, %c0_61, %c0_62] : memref<1x16x128xf32, #tpu.memory_space<vmem>>, vector<1x16x128xf32>
    %39 = vector.shape_cast %38 : vector<1x16x128xf32> to vector<16x128xf32>
    %40 = vector.extract_strided_slice %37 {offsets = [0, 0], sizes = [16, 128], strides = [1, 1]} : vector<16x384xf32> to vector<16x128xf32>
    %41 = arith.negf %40 : vector<16x128xf32>
    %42 = math.exp %41 : vector<16x128xf32>
    %cst_63 = arith.constant 1.000000e+00 : f32
    %43 = vector.broadcast %cst_63 : f32 to vector<16x128xf32>
    %44 = arith.addf %43, %42 : vector<16x128xf32>
    %45 = arith.divf %43, %44 : vector<16x128xf32>
    %46 = vector.extract_strided_slice %37 {offsets = [0, 128], sizes = [16, 128], strides = [1, 1]} : vector<16x384xf32> to vector<16x128xf32>
    %47 = arith.negf %46 : vector<16x128xf32>
    %48 = math.exp %47 : vector<16x128xf32>
    %cst_64 = arith.constant 1.000000e+00 : f32
    %49 = vector.broadcast %cst_64 : f32 to vector<16x128xf32>
    %50 = arith.addf %49, %48 : vector<16x128xf32>
    %51 = arith.divf %49, %50 : vector<16x128xf32>
    %52 = arith.mulf %45, %39 : vector<16x128xf32>
    %53 = vector.shape_cast %52 : vector<16x128xf32> to vector<1x16x128xf32>
    %cst_65 = arith.constant 0.000000e+00 : bf16
    %54 = vector.broadcast %cst_65 : bf16 to vector<1x1x256xbf16>
    %c0_66 = arith.constant 0 : index
    %c0_67 = arith.constant 0 : index
    %c0_68 = arith.constant 0 : index
    %55 = vector.load %arg9[%c0_66, %c0_67, %c0_68] : memref<1x18x256xbf16, #tpu.memory_space<vmem>>, vector<1x1x256xbf16>
    tpu.vector_store %arg9[%c0_66, %c0_67, %c0_68], %54 {strides = array<i32>} : memref<1x18x256xbf16, #tpu.memory_space<vmem>>, vector<1x1x256xbf16>,
    %cst_69 = arith.constant 0.000000e+00 : bf16
    %56 = vector.broadcast %cst_69 : bf16 to vector<1x1x256xbf16>
    %c0_70 = arith.constant 0 : index
    %c17_71 = arith.constant 17 : index
    %c0_72 = arith.constant 0 : index
    %57 = vector.load %arg9[%c0_70, %c17_71, %c0_72] : memref<1x18x256xbf16, #tpu.memory_space<vmem>>, vector<1x1x256xbf16>
    tpu.vector_store %arg9[%c0_70, %c17_71, %c0_72], %56 {strides = array<i32>} : memref<1x18x256xbf16, #tpu.memory_space<vmem>>, vector<1x1x256xbf16>,
    %cst_73 = arith.constant 0.000000e+00 : bf16
    %58 = vector.broadcast %cst_73 : bf16 to vector<1x16x8xbf16>
    %c0_74 = arith.constant 0 : index
    %c1_75 = arith.constant 1 : index
    %c0_76 = arith.constant 0 : index
    %59 = vector.load %arg9[%c0_74, %c1_75, %c0_76] : memref<1x18x256xbf16, #tpu.memory_space<vmem>>, vector<1x16x8xbf16>
    tpu.vector_store %arg9[%c0_74, %c1_75, %c0_76], %58 {strides = array<i32>} : memref<1x18x256xbf16, #tpu.memory_space<vmem>>, vector<1x16x8xbf16>,
    %cst_77 = arith.constant 0.000000e+00 : bf16
    %60 = vector.broadcast %cst_77 : bf16 to vector<1x16x120xbf16>
    %c0_78 = arith.constant 0 : index
    %c1_79 = arith.constant 1 : index
    %c136_80 = arith.constant 136 : index
    %61 = vector.load %arg9[%c0_78, %c1_79, %c136_80] : memref<1x18x256xbf16, #tpu.memory_space<vmem>>, vector<1x16x120xbf16>
    tpu.vector_store %arg9[%c0_78, %c1_79, %c136_80], %60 {strides = array<i32>} : memref<1x18x256xbf16, #tpu.memory_space<vmem>>, vector<1x16x120xbf16>,
    %62 = arith.truncf %53 : vector<1x16x128xf32> to vector<1x16x128xbf16>
    %c0_81 = arith.constant 0 : index
    %c1_82 = arith.constant 1 : index
    %c8_83 = arith.constant 8 : index
    %63 = vector.load %arg9[%c0_81, %c1_82, %c8_83] : memref<1x18x256xbf16, #tpu.memory_space<vmem>>, vector<1x16x128xbf16>
    tpu.vector_store %arg9[%c0_81, %c1_82, %c8_83], %62 {strides = array<i32>} : memref<1x18x256xbf16, #tpu.memory_space<vmem>>, vector<1x16x128xbf16>,
    %c0_84 = arith.constant 0 : index
    %c0_85 = arith.constant 0 : index
    %c0_86 = arith.constant 0 : index
    %64 = vector.load %arg9[%c0_84, %c0_85, %c0_86] : memref<1x18x256xbf16, #tpu.memory_space<vmem>>, vector<1x16x256xbf16>
    %c0_87 = arith.constant 0 : index
    %c1_88 = arith.constant 1 : index
    %c0_89 = arith.constant 0 : index
    %65 = vector.load %arg9[%c0_87, %c1_88, %c0_89] : memref<1x18x256xbf16, #tpu.memory_space<vmem>>, vector<1x16x256xbf16>
    %c0_90 = arith.constant 0 : index
    %c2_91 = arith.constant 2 : index
    %c0_92 = arith.constant 0 : index
    %66 = vector.load %arg9[%c0_90, %c2_91, %c0_92] : memref<1x18x256xbf16, #tpu.memory_space<vmem>>, vector<1x16x256xbf16>
    %67 = tpu.concatenate %64, %65, %66 in 2 : vector<1x16x256xbf16>, vector<1x16x256xbf16>, vector<1x16x256xbf16> -> vector<1x16x768xbf16>
    %68 = vector.shape_cast %67 : vector<1x16x768xbf16> to vector<16x768xbf16>
    %c0_93 = arith.constant 0 : index
    %c0_94 = arith.constant 0 : index
    %69 = vector.load %arg4[%c0_93, %c0_94] : memref<768x128xbf16, #tpu.memory_space<vmem>>, vector<768x128xbf16>
    %cst_95 = arith.constant dense<0.000000e+00> : vector<16x128xf32>
    %70 = tpu.matmul %68, %69, %cst_95 {dimension_numbers = #tpu.dot_dimension_numbers<[1], [0], [0], [1], [0, 0, 1, 1], [], []>} : vector<16x768xbf16>, vector<768x128xbf16>, vector<16x128xf32> -> vector<16x128xf32>
    %71 = vector.extract_strided_slice %37 {offsets = [0, 256], sizes = [16, 128], strides = [1, 1]} : vector<16x384xf32> to vector<16x128xf32>
    %72 = arith.addf %71, %70 : vector<16x128xf32>
    %73 = math.tanh %72 : vector<16x128xf32>
    %cst_96 = arith.constant 1.000000e+00 : f32
    %74 = vector.broadcast %cst_96 : f32 to vector<16x128xf32>
    %75 = arith.subf %74, %51 : vector<16x128xf32>
    %76 = arith.mulf %75, %39 : vector<16x128xf32>
    %77 = arith.mulf %51, %73 : vector<16x128xf32>
    %78 = arith.addf %76, %77 : vector<16x128xf32>
    %79 = vector.shape_cast %78 : vector<16x128xf32> to vector<1x16x128xf32>
    %c0_97 = arith.constant 0 : index
    %c0_98 = arith.constant 0 : index
    %c0_99 = arith.constant 0 : index
    %80 = vector.load %arg6[%c0_97, %c0_98, %c0_99] : memref<1x16x128xf32, #tpu.memory_space<vmem>>, vector<1x16x128xf32>
    tpu.vector_store %arg6[%c0_97, %c0_98, %c0_99], %79 {strides = array<i32>} : memref<1x16x128xf32, #tpu.memory_space<vmem>>, vector<1x16x128xf32>,
    return
  }
  func.func @transform_0(%arg0: i32) -> (i32, i32, i32) {
    %c0_i32 = arith.constant 0 : i32
    %c0_i32_0 = arith.constant 0 : i32
    %c0_i32_1 = arith.constant 0 : i32
    return %arg0, %c0_i32, %c0_i32_0 : i32, i32, i32
  }
  func.func @transform_1(%arg0: i32) -> (i32, i32, i32) {
    %c0_i32 = arith.constant 0 : i32
    %c0_i32_0 = arith.constant 0 : i32
    %c0_i32_1 = arith.constant 0 : i32
    return %arg0, %c0_i32, %c0_i32_0 : i32, i32, i32
  }
  func.func @transform_2(%arg0: i32) -> (i32, i32) {
    %c0_i32 = arith.constant 0 : i32
    %c0_i32_0 = arith.constant 0 : i32
    %c0_i32_1 = arith.constant 0 : i32
    return %c0_i32, %c0_i32_0 : i32, i32
  }
  func.func @transform_3(%arg0: i32) -> (i32, i32) {
    %c0_i32 = arith.constant 0 : i32
    %c0_i32_0 = arith.constant 0 : i32
    %c0_i32_1 = arith.constant 0 : i32
    return %c0_i32, %c0_i32_0 : i32, i32
  }
  func.func @transform_4(%arg0: i32) -> (i32, i32) {
    %c0_i32 = arith.constant 0 : i32
    %c0_i32_0 = arith.constant 0 : i32
    %c0_i32_1 = arith.constant 0 : i32
    return %c0_i32, %c0_i32_0 : i32, i32
  }
  func.func @transform_5(%arg0: i32) -> (i32, i32, i32) {
    %c0_i32 = arith.constant 0 : i32
    %c0_i32_0 = arith.constant 0 : i32
    %c0_i32_1 = arith.constant 0 : i32
    return %arg0, %c0_i32, %c0_i32_0 : i32, i32, i32
  }
}

</mosaic_0001>

<llo_original>
// kernel: encoder_decoder.4
$region0: #{encoder_decoder.4}
  #allocation0 [shape = 'u32[]', space=smem, size = 0x4, offset = 0x4, fixed_abs, tag = 'smem constant byte address 0x4 - core index']
  #allocation1 [shape = 'u32[144,128]{1,0:T(1,128)}', space=vmem, size = 0x12000, scoped, tag = 'internal scratch']
  #allocation2 [shape = 'bf16[1,18,256]{2,1,0:T(8,128)(2,1)}', space=vmem, size = 0x3000, scoped, tag = 'scratch operand']
  #allocation3 [shape = 'bf16[1,18,256]{2,1,0:T(8,128)(2,1)}', space=vmem, size = 0x3000, scoped, tag = 'scratch operand']
  #allocation4 [shape = 'bf16[1,18,256]{2,1,0:T(8,128)(2,1)}', space=vmem, size = 0x3000, scoped, tag = 'scratch operand']
  %s0 = inlined_call_operand.vmem [shape: f32[2,16,128], index: 0, kind: input, shape index: {}]
  %s1 = inlined_call_operand.vmem [shape: f32[2,16,128], index: 1, kind: input, shape index: {}]
  %s2 = inlined_call_operand.vmem [shape: bf16[1536,384], index: 2, kind: input, shape index: {}]
  %s3 = inlined_call_operand.vmem [shape: bf16[768,128], index: 3, kind: input, shape index: {}]
  %s4 = inlined_call_operand.vmem [shape: f32[1,384], index: 4, kind: input, shape index: {}]
  %s5 = inlined_call_operand.vmem [shape: f32[2,16,128], index: 5, kind: output, shape index: {}]
  %s6 = sld [smem:[#allocation0]]
  $region53: #{encoder_decoder.4} parent=0
    _
  %s8 = ssub.s32 1, %s6
  %s9 = scalar_select 0, %s8, %s6
  loop: start=0, step=1, limit=4
  $region2: #{encoder_decoder.4} parent=0 // loop_pre_header
    _
  $region3: #{encoder_decoder.4} parent=0 // loop_header
    %s11 = sphi 0, %s15
    %p12 = scmp.ge.s32.totalorder %s11, 4
    %s21 = sphi 0, %s23
    %s24 = sphi 0, %s21
    %s25 = sphi 0, %s24
    %s41 = sphi 0, %s25
    %s47 = sphi 0, %s49
    %s50 = sphi 0, %s47
    %s51 = sphi 0, %s50
    %s67 = sphi 0, %s51
    %s71 = sphi 0, %s71
    %s73 = sphi 0, %s71
    %s74 = sphi 0, %s73
    %s88 = sphi 0, %s74
    %s92 = sphi 0, %s92
    %s94 = sphi 0, %s92
    %s95 = sphi 0, %s94
    %s109 = sphi 0, %s95
    %s113 = sphi 0, %s113
    %s115 = sphi 0, %s113
    %s116 = sphi 0, %s115
    %s130 = sphi 0, %s116
    %s136 = sphi 0, %s138
    %s139 = sphi 0, %s136
    %s140 = sphi 0, %s139
    %s156 = sphi 0, %s140
  $region4: #{encoder_decoder.4} parent=0 // loop_header_branch
    %14 = sbr.rel (%p12) target = $region8
  $region5: #{encoder_decoder.4} parent=0 // loop_body
    %s16 = ssub.s32 %s11, 1
    %s17 = ssub.s32 %s11, 2
    %s18 = sadd.s32 %s11, 1
    %s19 = ssub.s32 %s11, %s18
    %p20 = scmp.eq.s32.totalorder %s19, 0
    %s22 = sadd.s32 %s21, 1
    %s23 = scalar_select %p20, %s21, %s22
    %p26 = pneg %p20
    %p27 = scmp.eq.s32.totalorder %s11, 1
    %p28 = por %p26, %p27
    %p29 = scmp.ne.s32.totalorder %s21, %s24
    %p30 = scmp.eq.s32.totalorder %s11, 0
    %p31 = por %p29, %p30
    %p32 = scmp.ne.s32.totalorder %s21, %s24
    %p33 = scmp.eq.s32.totalorder %s16, 1
    %p34 = por %p32, %p33
    %p35 = scmp.ne.s32.totalorder %s24, %s25
    %p36 = scmp.eq.s32.totalorder %s16, 0
    %p37 = por %p35, %p36
    %p38 = scmp.ne.s32.totalorder %s24, %s25
    %p39 = scmp.eq.s32.totalorder %s17, 1
    %p40 = por %p38, %p39
    %p42 = scmp.ne.s32.totalorder %s25, %s41
    %p43 = scmp.eq.s32.totalorder %s17, 0
    %p44 = por %p42, %p43
    %s45 = ssub.s32 %s11, %s18
    %p46 = scmp.eq.s32.totalorder %s45, 0
    %s48 = sadd.s32 %s47, 1
    %s49 = scalar_select %p46, %s47, %s48
    %p52 = pneg %p46
    %p53 = scmp.eq.s32.totalorder %s11, 1
    %p54 = por %p52, %p53
    %p55 = scmp.ne.s32.totalorder %s47, %s50
    %p56 = scmp.eq.s32.totalorder %s11, 0
    %p57 = por %p55, %p56
    %p58 = scmp.ne.s32.totalorder %s47, %s50
    %p59 = scmp.eq.s32.totalorder %s16, 1
    %p60 = por %p58, %p59
    %p61 = scmp.ne.s32.totalorder %s50, %s51
    %p62 = scmp.eq.s32.totalorder %s16, 0
    %p63 = por %p61, %p62
    %p64 = scmp.ne.s32.totalorder %s50, %s51
    %p65 = scmp.eq.s32.totalorder %s17, 1
    %p66 = por %p64, %p65
    %p68 = scmp.ne.s32.totalorder %s51, %s67
    %p69 = scmp.eq.s32.totalorder %s17, 0
    %p70 = por %p68, %p69
    %s72 = sadd.s32 %s71, 1
    %p75 = scmp.eq.s32.totalorder %s11, 1
    %p76 = scmp.ne.s32.totalorder %s71, %s73
    %p77 = scmp.eq.s32.totalorder %s11, 0
    %p78 = por %p76, %p77
    %p79 = scmp.ne.s32.totalorder %s71, %s73
    %p80 = scmp.eq.s32.totalorder %s16, 1
    %p81 = por %p79, %p80
    %p82 = scmp.ne.s32.totalorder %s73, %s74
    %p83 = scmp.eq.s32.totalorder %s16, 0
    %p84 = por %p82, %p83
    %p85 = scmp.ne.s32.totalorder %s73, %s74
    %p86 = scmp.eq.s32.totalorder %s17, 1
    %p87 = por %p85, %p86
    %p89 = scmp.ne.s32.totalorder %s74, %s88
    %p90 = scmp.eq.s32.totalorder %s17, 0
    %p91 = por %p89, %p90
    %s93 = sadd.s32 %s92, 1
    %p96 = scmp.eq.s32.totalorder %s11, 1
    %p97 = scmp.ne.s32.totalorder %s92, %s94
    %p98 = scmp.eq.s32.totalorder %s11, 0
    %p99 = por %p97, %p98
    %p100 = scmp.ne.s32.totalorder %s92, %s94
    %p101 = scmp.eq.s32.totalorder %s16, 1
    %p102 = por %p100, %p101
    %p103 = scmp.ne.s32.totalorder %s94, %s95
    %p104 = scmp.eq.s32.totalorder %s16, 0
    %p105 = por %p103, %p104
    %p106 = scmp.ne.s32.totalorder %s94, %s95
    %p107 = scmp.eq.s32.totalorder %s17, 1
    %p108 = por %p106, %p107
    %p110 = scmp.ne.s32.totalorder %s95, %s109
    %p111 = scmp.eq.s32.totalorder %s17, 0
    %p112 = por %p110, %p111
    %s114 = sadd.s32 %s113, 1
    %p117 = scmp.eq.s32.totalorder %s11, 1
    %p118 = scmp.ne.s32.totalorder %s113, %s115
    %p119 = scmp.eq.s32.totalorder %s11, 0
    %p120 = por %p118, %p119
    %p121 = scmp.ne.s32.totalorder %s113, %s115
    %p122 = scmp.eq.s32.totalorder %s16, 1
    %p123 = por %p121, %p122
    %p124 = scmp.ne.s32.totalorder %s115, %s116
    %p125 = scmp.eq.s32.totalorder %s16, 0
    %p126 = por %p124, %p125
    %p127 = scmp.ne.s32.totalorder %s115, %s116
    %p128 = scmp.eq.s32.totalorder %s17, 1
    %p129 = por %p127, %p128
    %p131 = scmp.ne.s32.totalorder %s116, %s130
    %p132 = scmp.eq.s32.totalorder %s17, 0
    %p133 = por %p131, %p132
    %s134 = ssub.s32 %s11, %s18
    %p135 = scmp.eq.s32.totalorder %s134, 0
    %s137 = sadd.s32 %s136, 1
    %s138 = scalar_select %p135, %s136, %s137
    %p141 = pneg %p135
    %p142 = scmp.eq.s32.totalorder %s11, 1
    %p143 = por %p141, %p142
    %p144 = scmp.ne.s32.totalorder %s136, %s139
    %p145 = scmp.eq.s32.totalorder %s11, 0
    %p146 = por %p144, %p145
    %p147 = scmp.ne.s32.totalorder %s136, %s139
    %p148 = scmp.eq.s32.totalorder %s16, 1
    %p149 = por %p147, %p148
    %p150 = scmp.ne.s32.totalorder %s139, %s140
    %p151 = scmp.eq.s32.totalorder %s16, 0
    %p152 = por %p150, %p151
    %p153 = scmp.ne.s32.totalorder %s139, %s140
    %p154 = scmp.eq.s32.totalorder %s17, 1
    %p155 = por %p153, %p154
    %p157 = scmp.ne.s32.totalorder %s140, %s156
    %p158 = scmp.eq.s32.totalorder %s17, 0
    %p159 = por %p157, %p158
    %p160 = scmp.le.s32.totalorder 1, %s11
    %p161 = scmp.lt.s32.totalorder %s11, 3
    %p162 = pnand %p160, %p161
    %p163 = pneg %p162
    // Predicated region
    $region9: #{encoder_decoder.4} parent=5 // pred_check
      _
    $region10: #{encoder_decoder.4} parent=5 // pred_check_branch
      %165 = sbr.rel (%p162) target = $region12
    $region11: #{encoder_decoder.4} parent=5 // pred_region
      %s166 = ssub.s32 %s11, 1
      // Predicated region
      $region13: #{encoder_decoder.4} parent=11 // pred_check
        %p167 = pneg %p84
      $region14: #{encoder_decoder.4} parent=11 // pred_check_branch
        %169 = sbr.rel (%p167) target = $region16
      $region15: #{encoder_decoder.4} parent=11 // pred_region
        _
      $region16: #{encoder_decoder.4} parent=11 // pred_fallthru
        _
      // Predicated region
      $region17: #{encoder_decoder.4} parent=11 // pred_check
        %p170 = pneg %p105
      $region18: #{encoder_decoder.4} parent=11 // pred_check_branch
        %172 = sbr.rel (%p170) target = $region20
      $region19: #{encoder_decoder.4} parent=11 // pred_region
        _
      $region20: #{encoder_decoder.4} parent=11 // pred_fallthru
        _
      // Predicated region
      $region21: #{encoder_decoder.4} parent=11 // pred_check
        %p173 = pneg %p126
      $region22: #{encoder_decoder.4} parent=11 // pred_check_branch
        %175 = sbr.rel (%p173) target = $region24
      $region23: #{encoder_decoder.4} parent=11 // pred_region
        _
      $region24: #{encoder_decoder.4} parent=11 // pred_fallthru
        _
    $region12: #{encoder_decoder.4} parent=5 // pred_fallthru
      _
    %p176 = scmp.lt.s32.totalorder %s11, 2
    // Predicated region
    $region25: #{encoder_decoder.4} parent=5 // pred_check
      %p177 = pneg %p176
    $region26: #{encoder_decoder.4} parent=5 // pred_check_branch
      %179 = sbr.rel (%p177) target = $region28
    $region27: #{encoder_decoder.4} parent=5 // pred_region
      // Predicated region
      $region29: #{encoder_decoder.4} parent=27 // pred_check
        %p180 = pneg %p31
      $region30: #{encoder_decoder.4} parent=27 // pred_check_branch
        %182 = sbr.rel (%p180) target = $region32
      $region31: #{encoder_decoder.4} parent=27 // pred_region
        %p183 = scmp.lt.s32.totalorder %s11, 1
        %s184 = scalar_select %p183, %s11, 1
        %s185 = smul.addr %s184, 2
        %s186 = smul.addr %s185, 8
        %s187 = scalar_lea.vmem %s0, %s186
      $region32: #{encoder_decoder.4} parent=27 // pred_fallthru
        _
      // Predicated region
      $region33: #{encoder_decoder.4} parent=27 // pred_check
        %p188 = pneg %p57
      $region34: #{encoder_decoder.4} parent=27 // pred_check_branch
        %190 = sbr.rel (%p188) target = $region36
      $region35: #{encoder_decoder.4} parent=27 // pred_region
        %p191 = scmp.lt.s32.totalorder %s11, 1
        %s192 = scalar_select %p191, %s11, 1
        %s193 = smul.addr %s192, 2
        %s194 = smul.addr %s193, 8
        %s195 = scalar_lea.vmem %s1, %s194
      $region36: #{encoder_decoder.4} parent=27 // pred_fallthru
        _
    $region28: #{encoder_decoder.4} parent=5 // pred_fallthru
      _
    %p196 = scmp.le.s32.totalorder 1, %s11
    %p197 = scmp.lt.s32.totalorder %s11, 3
    %p198 = pnand %p196, %p197
    %p199 = pneg %p198
    // Predicated region
    $region37: #{encoder_decoder.4} parent=5 // pred_check
      _
    $region38: #{encoder_decoder.4} parent=5 // pred_check_branch
      %201 = sbr.rel (%p198) target = $region40
    $region39: #{encoder_decoder.4} parent=5 // pred_region
      %s202 = ssub.s32 %s11, 1
      %p203 = scmp.lt.s32.totalorder %s16, 1
      %s204 = scalar_select %p203, %s16, 1
      %s205 = smul.addr %s204, 2
      %s206 = smul.addr %s205, 8
      %s207 = scalar_lea.vmem %s0, %s206
      %p208 = pneg %p37
      %p209 = pneg %p34
      %p210 = scmp.lt.s32.totalorder %s16, 1
      %s211 = scalar_select %p210, %s16, 1
      %s212 = smul.addr %s211, 2
      %s213 = smul.addr %s212, 8
      %s214 = scalar_lea.vmem %s1, %s213
      %p215 = pneg %p63
      %p216 = pneg %p60
      %p217 = pneg %p84
      %p218 = pneg %p81
      %p219 = pneg %p105
      %p220 = pneg %p102
      %p221 = pneg %p126
      %p222 = pneg %p123
      %p223 = pneg %p152
      %p224 = pneg %p149
      %p225 = scmp.lt.s32.totalorder %s16, 1
      %s226 = scalar_select %p225, %s16, 1
      %s227 = smul.addr %s226, 2
      %s228 = smul.addr %s227, 8
      %s229 = scalar_lea.vmem %s5, %s228
      %p230 = scmp.lt.s32.totalorder %s16, 1
      %s231 = scalar_select %p230, %s16, 1
      %s232 = smul.addr %s231, 2
      %s233 = smul.addr %s232, 8
      %s234 = scalar_lea.vmem %s0, %s233
      %p235 = scmp.lt.s32.totalorder %s16, 1
      %s236 = scalar_select %p235, %s16, 1
      %s237 = smul.addr %s236, 2
      %s238 = smul.addr %s237, 8
      %s239 = scalar_lea.vmem %s1, %s238
      %p240 = scmp.lt.s32.totalorder %s16, 1
      %s241 = scalar_select %p240, %s16, 1
      %s242 = smul.addr %s241, 2
      %s243 = smul.addr %s242, 8
      %s244 = scalar_lea.vmem %s5, %s243
      %v246 = vld [vmem:[%s234] sm:$0xff]
      %v247 = vld [vmem:[%s234 + $0x8] sm:$0xff]
      %vm248 = vcmask 1040384
      %vm249 = vsmask.f32 256
      %vm250 = vmand %vm248, %vm249
      %vm251 = vcmask 1044484
      %vm252 = vsmask.f32 4352
      %vm253 = vmand %vm251, %vm252
      %vm254 = vmor %vm253, %vm250
      %v255 = vld [vmem:[#allocation2] sm:$0x11]
      %v256 = vsel %vm254, 0, %v255
      %257 = vst [vmem:[#allocation2] sm:$0x11] %v256
      %vm258 = vsmask.f32 7938
      %vm259 = vmand %vm248, %vm258
      %vm260 = vsmask.f32 7954
      %vm261 = vmand %vm251, %vm260
      %vm262 = vmor %vm261, %vm259
      %v263 = vld [vmem:[#allocation2 + $0x10] sm:$0x11]
      %v264 = vsel %vm262, 0, %v263
      %265 = vst [vmem:[#allocation2 + $0x10] sm:$0x11] %v264
      %vm266 = vcmask 60416
      %vm267 = vmand %vm266, %vm258
      %v268 = vld [vmem:[#allocation2] sm:$0xf]
      %v269 = vsel %vm267, 0, %v268
      %270 = vst [vmem:[#allocation2] sm:$0xf] %v269
      %vm271 = vcmask 60416
      %272 = vst.msk [vmem:[#allocation2 + $0x8] sm:$0xf] %vm271, 0
      %vm273 = vcmask 57344
      %vm274 = vmand %vm273, %vm249
      %v275 = vld [vmem:[#allocation2 + $0x10] sm:$0x1]
      %v276 = vsel %vm274, 0, %v275
      %277 = vst [vmem:[#allocation2 + $0x10] sm:$0x1] %v276
      %vm278 = vcmask 1043520
      %vm279 = vmand %vm278, %vm258
      %v280 = vld [vmem:[#allocation2 + $0x4] sm:$0xf]
      %v281 = vsel %vm279, 0, %v280
      %282 = vst [vmem:[#allocation2 + $0x4] sm:$0xf] %v281
      %vm283 = vcmask 1043520
      %284 = vst.msk [vmem:[#allocation2 + $0xc] sm:$0xf] %vm283, 0
      %vm285 = vcmask 1040448
      %vm286 = vmand %vm285, %vm249
      %v287 = vld [vmem:[#allocation2 + $0x14] sm:$0x1]
      %v288 = vsel %vm286, 0, %v287
      %289 = vst [vmem:[#allocation2 + $0x14] sm:$0x1] %v288
      %v290 = vpack.c.bf16 %v247, %v246
      %v292 = vunpack.c.l.b16 %v290
      %v293 = vunpack.c.h.b16 %v290
      %v294 = vpack.c.b16 %v292, %v292
      %v295 = vpack.c.b16 %v293, %v293
      %vm296 = vsmask.f32 4368
      %vm297 = vmor %vm249, %vm296
      %v299 = vshrl.u32 %v294, 16
      %v301 = vrot.slane %v299, 7
      %v302 = vshll.u32 %v294, 16
      %v304 = vor.u32 %v301, %v302
      %v305 = vrot.slane %v301, 4
      %v307 = vshrl.u32 %v295, 16
      %v309 = vrot.slane %v307, 7
      %v310 = vshll.u32 %v295, 16
      %v312 = vor.u32 %v309, %v310
      %v313 = vsel %vm297, %v305, %v312
      %v314 = vrot.slane %v309, 4
      %315 = vrot.lane.b32.xlu0 %v304, 8
      %v316 = vpop.permute.xlu0 %315
      %317 = vrot.lane.b32.xlu0 %v313, 8
      %v318 = vpop.permute.xlu0 %317
      %319 = vrot.lane.b32.xlu0 %v314, 8
      %v320 = vpop.permute.xlu0 %319
      %v321 = vrot.slane %v316, 4
      %v322 = vrot.slane %v318, 4
      %v323 = vrot.slane %v320, 4
      %vm324 = vcmask 64512
      %v325 = vsel %vm324, %v321, %v316
      %v326 = vsel %vm324, %v322, %v318
      %v327 = vsel %vm324, %v323, %v320
      %vm331 = vcmask 64516
      %vm332 = vmand %vm331, %vm260
      %vm333 = vmor %vm332, %vm279
      %v334 = vld [vmem:[#allocation2] sm:$0xff]
      %v335 = vsel %vm333, %v325, %v334
      %336 = vst [vmem:[#allocation2] sm:$0xff] %v335
      %vm337 = vcmask 64516
      %vm338 = vmor %vm337, %vm283
      %339 = vst.msk [vmem:[#allocation2 + $0x8] sm:$0xff] %vm338, %v326
      %vm340 = vcmask 61444
      %vm341 = vmand %vm340, %vm252
      %vm342 = vmor %vm341, %vm286
      %v343 = vld [vmem:[#allocation2 + $0x10] sm:$0x11]
      %v344 = vsel %vm342, %v327, %v343
      %345 = vst [vmem:[#allocation2 + $0x10] sm:$0x11] %v344
      %v346 = vld [vmem:[%s239] sm:$0xff]
      %v347 = vld [vmem:[%s239 + $0x8] sm:$0xff]
      %v348 = vld [vmem:[#allocation3] sm:$0x11]
      %v349 = vsel %vm254, 0, %v348
      %350 = vst [vmem:[#allocation3] sm:$0x11] %v349
      %v351 = vld [vmem:[#allocation3 + $0x10] sm:$0x11]
      %v352 = vsel %vm262, 0, %v351
      %353 = vst [vmem:[#allocation3 + $0x10] sm:$0x11] %v352
      %v354 = vld [vmem:[#allocation3] sm:$0xf]
      %v355 = vsel %vm267, 0, %v354
      %356 = vst [vmem:[#allocation3] sm:$0xf] %v355
      %357 = vst.msk [vmem:[#allocation3 + $0x8] sm:$0xf] %vm271, 0
      %v358 = vld [vmem:[#allocation3 + $0x10] sm:$0x1]
      %v359 = vsel %vm274, 0, %v358
      %360 = vst [vmem:[#allocation3 + $0x10] sm:$0x1] %v359
      %v361 = vld [vmem:[#allocation3 + $0x4] sm:$0xf]
      %v362 = vsel %vm279, 0, %v361
      %363 = vst [vmem:[#allocation3 + $0x4] sm:$0xf] %v362
      %364 = vst.msk [vmem:[#allocation3 + $0xc] sm:$0xf] %vm283, 0
      %v365 = vld [vmem:[#allocation3 + $0x14] sm:$0x1]
      %v366 = vsel %vm286, 0, %v365
      %367 = vst [vmem:[#allocation3 + $0x14] sm:$0x1] %v366
      %v368 = vpack.c.bf16 %v347, %v346
      %v370 = vunpack.c.l.b16 %v368
      %v371 = vunpack.c.h.b16 %v368
      %v372 = vpack.c.b16 %v370, %v370
      %v373 = vpack.c.b16 %v371, %v371
      %v375 = vshrl.u32 %v372, 16
      %v377 = vrot.slane %v375, 7
      %v378 = vshll.u32 %v372, 16
      %v380 = vor.u32 %v377, %v378
      %v381 = vrot.slane %v377, 4
      %v383 = vshrl.u32 %v373, 16
      %v385 = vrot.slane %v383, 7
      %v386 = vshll.u32 %v373, 16
      %v388 = vor.u32 %v385, %v386
      %v389 = vsel %vm297, %v381, %v388
      %v390 = vrot.slane %v385, 4
      %391 = vrot.lane.b32.xlu0 %v380, 8
      %v392 = vpop.permute.xlu0 %391
      %393 = vrot.lane.b32.xlu0 %v389, 8
      %v394 = vpop.permute.xlu0 %393
      %395 = vrot.lane.b32.xlu0 %v390, 8
      %v396 = vpop.permute.xlu0 %395
      %v397 = vrot.slane %v392, 4
      %v398 = vrot.slane %v394, 4
      %v399 = vrot.slane %v396, 4
      %v400 = vsel %vm324, %v397, %v392
      %v401 = vsel %vm324, %v398, %v394
      %v402 = vsel %vm324, %v399, %v396
      %v406 = vld [vmem:[#allocation3] sm:$0xff]
      %v407 = vsel %vm333, %v400, %v406
      %408 = vst [vmem:[#allocation3] sm:$0xff] %v407
      %409 = vst.msk [vmem:[#allocation3 + $0x8] sm:$0xff] %vm338, %v401
      %v410 = vld [vmem:[#allocation3 + $0x10] sm:$0x11]
      %v411 = vsel %vm342, %v402, %v410
      %412 = vst [vmem:[#allocation3 + $0x10] sm:$0x11] %v411
      %v413 = vld [vmem:[#allocation2] sm:$0xff]
      %v414 = vld [vmem:[#allocation2 + $0x8] sm:$0xff]
      %v415 = vld [vmem:[#allocation2 + $0x10] sm:$0x11]
      %v416 = vld [vmem:[#allocation2] sm:$0xee]
      %v419 = vunpack.c.l.b16 %v413
      %v420 = vunpack.c.h.b16 %v413
      %v421 = vunpack.c.l.b16 %v414
      %v422 = vunpack.c.h.b16 %v414
      %v423 = vpack.c.b16 %v421, %v419
      %v424 = vpack.c.b16 %v422, %v420
      %v428 = vunpack.c.l.b16 %v415
      %v429 = vunpack.c.h.b16 %v415
      %v430 = vpack.c.b16 %v428, %v428
      %v431 = vpack.c.b16 %v429, %v429
      %vm432 = vsmask.f32 7424
      %v434 = vshrl.u32 %v423, 16
      %v436 = vshll.u32 %v423, 16
      %v438 = vrot.slane %v436, 1
      %v439 = vor.u32 %v434, %v438
      %v441 = vshll.u32 %v430, 16
      %v443 = vrot.slane %v441, 1
      %v444 = vsel %vm432, %v439, %v443
      %v446 = vshrl.u32 %v424, 16
      %v448 = vshll.u32 %v424, 16
      %v450 = vrot.slane %v448, 1
      %v451 = vor.u32 %v446, %v450
      %v453 = vshll.u32 %v431, 16
      %v455 = vrot.slane %v453, 1
      %v456 = vsel %vm432, %v451, %v455
      %v460 = vunpack.c.l.b16 %v416
      %v461 = vunpack.c.h.b16 %v416
      %v462 = vpack.c.b16 %v421, %v460
      %v463 = vpack.c.b16 %v422, %v461
      %vm464 = vcmask 1046528
      %v465 = vrot.slane %v462, 1
      %v466 = vrot.slane %v430, 1
      %v467 = vsel %vm464, %v465, %v466
      %v468 = vrot.slane %v463, 1
      %v469 = vrot.slane %v431, 1
      %v470 = vsel %vm464, %v468, %v469
      %v473 = vld [vmem:[#allocation3] sm:$0xff]
      %v474 = vld [vmem:[#allocation3 + $0x8] sm:$0xff]
      %v475 = vld [vmem:[#allocation3 + $0x10] sm:$0x11]
      %v476 = vld [vmem:[#allocation3] sm:$0xee]
      %v479 = vunpack.c.l.b16 %v473
      %v480 = vunpack.c.h.b16 %v473
      %v481 = vunpack.c.l.b16 %v474
      %v482 = vunpack.c.h.b16 %v474
      %v483 = vpack.c.b16 %v481, %v479
      %v484 = vpack.c.b16 %v482, %v480
      %v488 = vunpack.c.l.b16 %v475
      %v489 = vunpack.c.h.b16 %v475
      %v490 = vpack.c.b16 %v488, %v488
      %v491 = vpack.c.b16 %v489, %v489
      %v493 = vshrl.u32 %v483, 16
      %v495 = vshll.u32 %v483, 16
      %v497 = vrot.slane %v495, 1
      %v498 = vor.u32 %v493, %v497
      %v500 = vshll.u32 %v490, 16
      %v502 = vrot.slane %v500, 1
      %v503 = vsel %vm432, %v498, %v502
      %v505 = vshrl.u32 %v484, 16
      %v507 = vshll.u32 %v484, 16
      %v509 = vrot.slane %v507, 1
      %v510 = vor.u32 %v505, %v509
      %v512 = vshll.u32 %v491, 16
      %v514 = vrot.slane %v512, 1
      %v515 = vsel %vm432, %v510, %v514
      %v519 = vunpack.c.l.b16 %v476
      %v520 = vunpack.c.h.b16 %v476
      %v521 = vpack.c.b16 %v481, %v519
      %v522 = vpack.c.b16 %v482, %v520
      %v523 = vrot.slane %v521, 1
      %v524 = vrot.slane %v490, 1
      %v525 = vsel %vm464, %v523, %v524
      %v526 = vrot.slane %v522, 1
      %v527 = vrot.slane %v491, 1
      %v528 = vsel %vm464, %v526, %v527
      %v531 = vld [vmem:[%s2] sm:$0xff]
      %v532 = vld [vmem:[%s2 + $0x8] sm:$0xf]
      %v533 = vld [vmem:[%s2 + $0xc] sm:$0xff]
      %v534 = vld [vmem:[%s2 + $0x14] sm:$0xf]
      %v535 = vld [vmem:[%s2 + $0x18] sm:$0xff]
      %v536 = vld [vmem:[%s2 + $0x20] sm:$0xf]
      %v537 = vld [vmem:[%s2 + $0x24] sm:$0xff]
      %v538 = vld [vmem:[%s2 + $0x2c] sm:$0xf]
      %v539 = vld [vmem:[%s2 + $0x30] sm:$0xff]
      %v540 = vld [vmem:[%s2 + $0x38] sm:$0xf]
      %v541 = vld [vmem:[%s2 + $0x3c] sm:$0xff]
      %v542 = vld [vmem:[%s2 + $0x44] sm:$0xf]
      %v543 = vld [vmem:[%s2 + $0x48] sm:$0xff]
      %v544 = vld [vmem:[%s2 + $0x50] sm:$0xf]
      %v545 = vld [vmem:[%s2 + $0x54] sm:$0xff]
      %v546 = vld [vmem:[%s2 + $0x5c] sm:$0xf]
      %v547 = vld [vmem:[%s2 + $0x60] sm:$0xff]
      %v548 = vld [vmem:[%s2 + $0x68] sm:$0xf]
      %v549 = vld [vmem:[%s2 + $0x6c] sm:$0xff]
      %v550 = vld [vmem:[%s2 + $0x74] sm:$0xf]
      %v551 = vld [vmem:[%s2 + $0x78] sm:$0xff]
      %v552 = vld [vmem:[%s2 + $0x80] sm:$0xf]
      %v553 = vld [vmem:[%s2 + $0x84] sm:$0xff]
      %v554 = vld [vmem:[%s2 + $0x8c] sm:$0xf]
      %v555 = vld [vmem:[%s2 + $0x90] sm:$0xff]
      %v556 = vld [vmem:[%s2 + $0x98] sm:$0xf]
      %v557 = vld [vmem:[%s2 + $0x9c] sm:$0xff]
      %v558 = vld [vmem:[%s2 + $0xa4] sm:$0xf]
      %v559 = vld [vmem:[%s2 + $0xa8] sm:$0xff]
      %v560 = vld [vmem:[%s2 + $0xb0] sm:$0xf]
      %v561 = vld [vmem:[%s2 + $0xb4] sm:$0xff]
      %v562 = vld [vmem:[%s2 + $0xbc] sm:$0xf]
      %v563 = vld [vmem:[%s2 + $0xc0] sm:$0xff]
      %v564 = vld [vmem:[%s2 + $0xc8] sm:$0xf]
      %v565 = vld [vmem:[%s2 + $0xcc] sm:$0xff]
      %v566 = vld [vmem:[%s2 + $0xd4] sm:$0xf]
      %v567 = vld [vmem:[%s2 + $0xd8] sm:$0xff]
      %v568 = vld [vmem:[%s2 + $0xe0] sm:$0xf]
      %v569 = vld [vmem:[%s2 + $0xe4] sm:$0xff]
      %v570 = vld [vmem:[%s2 + $0xec] sm:$0xf]
      %v571 = vld [vmem:[%s2 + $0xf0] sm:$0xff]
      %v572 = vld [vmem:[%s2 + $0xf8] sm:$0xf]
      %v573 = vld [vmem:[%s2 + $0xfc] sm:$0xff]
      %v574 = vld [vmem:[%s2 + $0x104] sm:$0xf]
      %v575 = vld [vmem:[%s2 + $0x108] sm:$0xff]
      %v576 = vld [vmem:[%s2 + $0x110] sm:$0xf]
      %v577 = vld [vmem:[%s2 + $0x114] sm:$0xff]
      %v578 = vld [vmem:[%s2 + $0x11c] sm:$0xf]
      %v579 = vld [vmem:[%s2 + $0x120] sm:$0xff]
      %v580 = vld [vmem:[%s2 + $0x128] sm:$0xf]
      %v581 = vld [vmem:[%s2 + $0x12c] sm:$0xff]
      %v582 = vld [vmem:[%s2 + $0x134] sm:$0xf]
      %v583 = vld [vmem:[%s2 + $0x138] sm:$0xff]
      %v584 = vld [vmem:[%s2 + $0x140] sm:$0xf]
      %v585 = vld [vmem:[%s2 + $0x144] sm:$0xff]
      %v586 = vld [vmem:[%s2 + $0x14c] sm:$0xf]
      %v587 = vld [vmem:[%s2 + $0x150] sm:$0xff]
      %v588 = vld [vmem:[%s2 + $0x158] sm:$0xf]
      %v589 = vld [vmem:[%s2 + $0x15c] sm:$0xff]
      %v590 = vld [vmem:[%s2 + $0x164] sm:$0xf]
      %v591 = vld [vmem:[%s2 + $0x168] sm:$0xff]
      %v592 = vld [vmem:[%s2 + $0x170] sm:$0xf]
      %v593 = vld [vmem:[%s2 + $0x174] sm:$0xff]
      %v594 = vld [vmem:[%s2 + $0x17c] sm:$0xf]
      %v595 = vld [vmem:[%s2 + $0x180] sm:$0xff]
      %v596 = vld [vmem:[%s2 + $0x188] sm:$0xf]
      %v597 = vld [vmem:[%s2 + $0x18c] sm:$0xff]
      %v598 = vld [vmem:[%s2 + $0x194] sm:$0xf]
      %v599 = vld [vmem:[%s2 + $0x198] sm:$0xff]
      %v600 = vld [vmem:[%s2 + $0x1a0] sm:$0xf]
      %v601 = vld [vmem:[%s2 + $0x1a4] sm:$0xff]
      %v602 = vld [vmem:[%s2 + $0x1ac] sm:$0xf]
      %v603 = vld [vmem:[%s2 + $0x1b0] sm:$0xff]
      %v604 = vld [vmem:[%s2 + $0x1b8] sm:$0xf]
      %v605 = vld [vmem:[%s2 + $0x1bc] sm:$0xff]
      %v606 = vld [vmem:[%s2 + $0x1c4] sm:$0xf]
      %v607 = vld [vmem:[%s2 + $0x1c8] sm:$0xff]
      %v608 = vld [vmem:[%s2 + $0x1d0] sm:$0xf]
      %v609 = vld [vmem:[%s2 + $0x1d4] sm:$0xff]
      %v610 = vld [vmem:[%s2 + $0x1dc] sm:$0xf]
      %v611 = vld [vmem:[%s2 + $0x1e0] sm:$0xff]
      %v612 = vld [vmem:[%s2 + $0x1e8] sm:$0xf]
      %v613 = vld [vmem:[%s2 + $0x1ec] sm:$0xff]
      %v614 = vld [vmem:[%s2 + $0x1f4] sm:$0xf]
      %v615 = vld [vmem:[%s2 + $0x1f8] sm:$0xff]
      %v616 = vld [vmem:[%s2 + $0x200] sm:$0xf]
      %v617 = vld [vmem:[%s2 + $0x204] sm:$0xff]
      %v618 = vld [vmem:[%s2 + $0x20c] sm:$0xf]
      %v619 = vld [vmem:[%s2 + $0x210] sm:$0xff]
      %v620 = vld [vmem:[%s2 + $0x218] sm:$0xf]
      %v621 = vld [vmem:[%s2 + $0x21c] sm:$0xff]
      %v622 = vld [vmem:[%s2 + $0x224] sm:$0xf]
      %v623 = vld [vmem:[%s2 + $0x228] sm:$0xff]
      %v624 = vld [vmem:[%s2 + $0x230] sm:$0xf]
      %v625 = vld [vmem:[%s2 + $0x234] sm:$0xff]
      %v626 = vld [vmem:[%s2 + $0x23c] sm:$0xf]
      %v627 = vld [vmem:[%s2 + $0x240] sm:$0xff]
      %v628 = vld [vmem:[%s2 + $0x248] sm:$0xf]
      %v629 = vld [vmem:[%s2 + $0x24c] sm:$0xff]
      %v630 = vld [vmem:[%s2 + $0x254] sm:$0xf]
      %v631 = vld [vmem:[%s2 + $0x258] sm:$0xff]
      %v632 = vld [vmem:[%s2 + $0x260] sm:$0xf]
      %v633 = vld [vmem:[%s2 + $0x264] sm:$0xff]
      %v634 = vld [vmem:[%s2 + $0x26c] sm:$0xf]
      %v635 = vld [vmem:[%s2 + $0x270] sm:$0xff]
      %v636 = vld [vmem:[%s2 + $0x278] sm:$0xf]
      %v637 = vld [vmem:[%s2 + $0x27c] sm:$0xff]
      %v638 = vld [vmem:[%s2 + $0x284] sm:$0xf]
      %v639 = vld [vmem:[%s2 + $0x288] sm:$0xff]
      %v640 = vld [vmem:[%s2 + $0x290] sm:$0xf]
      %v641 = vld [vmem:[%s2 + $0x294] sm:$0xff]
      %v642 = vld [vmem:[%s2 + $0x29c] sm:$0xf]
      %v643 = vld [vmem:[%s2 + $0x2a0] sm:$0xff]
      %v644 = vld [vmem:[%s2 + $0x2a8] sm:$0xf]
      %v645 = vld [vmem:[%s2 + $0x2ac] sm:$0xff]
      %v646 = vld [vmem:[%s2 + $0x2b4] sm:$0xf]
      %v647 = vld [vmem:[%s2 + $0x2b8] sm:$0xff]
      %v648 = vld [vmem:[%s2 + $0x2c0] sm:$0xf]
      %v649 = vld [vmem:[%s2 + $0x2c4] sm:$0xff]
      %v650 = vld [vmem:[%s2 + $0x2cc] sm:$0xf]
      %v651 = vld [vmem:[%s2 + $0x2d0] sm:$0xff]
      %v652 = vld [vmem:[%s2 + $0x2d8] sm:$0xf]
      %v653 = vld [vmem:[%s2 + $0x2dc] sm:$0xff]
      %v654 = vld [vmem:[%s2 + $0x2e4] sm:$0xf]
      %v655 = vld [vmem:[%s2 + $0x2e8] sm:$0xff]
      %v656 = vld [vmem:[%s2 + $0x2f0] sm:$0xf]
      %v657 = vld [vmem:[%s2 + $0x2f4] sm:$0xff]
      %v658 = vld [vmem:[%s2 + $0x2fc] sm:$0xf]
      %v659 = vld [vmem:[%s2 + $0x300] sm:$0xff]
      %v660 = vld [vmem:[%s2 + $0x308] sm:$0xf]
      %v661 = vld [vmem:[%s2 + $0x30c] sm:$0xff]
      %v662 = vld [vmem:[%s2 + $0x314] sm:$0xf]
      %v663 = vld [vmem:[%s2 + $0x318] sm:$0xff]
      %v664 = vld [vmem:[%s2 + $0x320] sm:$0xf]
      %v665 = vld [vmem:[%s2 + $0x324] sm:$0xff]
      %v666 = vld [vmem:[%s2 + $0x32c] sm:$0xf]
      %v667 = vld [vmem:[%s2 + $0x330] sm:$0xff]
      %v668 = vld [vmem:[%s2 + $0x338] sm:$0xf]
      %v669 = vld [vmem:[%s2 + $0x33c] sm:$0xff]
      %v670 = vld [vmem:[%s2 + $0x344] sm:$0xf]
      %v671 = vld [vmem:[%s2 + $0x348] sm:$0xff]
      %v672 = vld [vmem:[%s2 + $0x350] sm:$0xf]
      %v673 = vld [vmem:[%s2 + $0x354] sm:$0xff]
      %v674 = vld [vmem:[%s2 + $0x35c] sm:$0xf]
      %v675 = vld [vmem:[%s2 + $0x360] sm:$0xff]
      %v676 = vld [vmem:[%s2 + $0x368] sm:$0xf]
      %v677 = vld [vmem:[%s2 + $0x36c] sm:$0xff]
      %v678 = vld [vmem:[%s2 + $0x374] sm:$0xf]
      %v679 = vld [vmem:[%s2 + $0x378] sm:$0xff]
      %v680 = vld [vmem:[%s2 + $0x380] sm:$0xf]
      %v681 = vld [vmem:[%s2 + $0x384] sm:$0xff]
      %v682 = vld [vmem:[%s2 + $0x38c] sm:$0xf]
      %v683 = vld [vmem:[%s2 + $0x390] sm:$0xff]
      %v684 = vld [vmem:[%s2 + $0x398] sm:$0xf]
      %v685 = vld [vmem:[%s2 + $0x39c] sm:$0xff]
      %v686 = vld [vmem:[%s2 + $0x3a4] sm:$0xf]
      %v687 = vld [vmem:[%s2 + $0x3a8] sm:$0xff]
      %v688 = vld [vmem:[%s2 + $0x3b0] sm:$0xf]
      %v689 = vld [vmem:[%s2 + $0x3b4] sm:$0xff]
      %v690 = vld [vmem:[%s2 + $0x3bc] sm:$0xf]
      %v691 = vld [vmem:[%s2 + $0x3c0] sm:$0xff]
      %v692 = vld [vmem:[%s2 + $0x3c8] sm:$0xf]
      %v693 = vld [vmem:[%s2 + $0x3cc] sm:$0xff]
      %v694 = vld [vmem:[%s2 + $0x3d4] sm:$0xf]
      %v695 = vld [vmem:[%s2 + $0x3d8] sm:$0xff]
      %v696 = vld [vmem:[%s2 + $0x3e0] sm:$0xf]
      %v697 = vld [vmem:[%s2 + $0x3e4] sm:$0xff]
      %v698 = vld [vmem:[%s2 + $0x3ec] sm:$0xf]
      %v699 = vld [vmem:[%s2 + $0x3f0] sm:$0xff]
      %v700 = vld [vmem:[%s2 + $0x3f8] sm:$0xf]
      %v701 = vld [vmem:[%s2 + $0x3fc] sm:$0xff]
      %v702 = vld [vmem:[%s2 + $0x404] sm:$0xf]
      %v703 = vld [vmem:[%s2 + $0x408] sm:$0xff]
      %v704 = vld [vmem:[%s2 + $0x410] sm:$0xf]
      %v705 = vld [vmem:[%s2 + $0x414] sm:$0xff]
      %v706 = vld [vmem:[%s2 + $0x41c] sm:$0xf]
      %v707 = vld [vmem:[%s2 + $0x420] sm:$0xff]
      %v708 = vld [vmem:[%s2 + $0x428] sm:$0xf]
      %v709 = vld [vmem:[%s2 + $0x42c] sm:$0xff]
      %v710 = vld [vmem:[%s2 + $0x434] sm:$0xf]
      %v711 = vld [vmem:[%s2 + $0x438] sm:$0xff]
      %v712 = vld [vmem:[%s2 + $0x440] sm:$0xf]
      %v713 = vld [vmem:[%s2 + $0x444] sm:$0xff]
      %v714 = vld [vmem:[%s2 + $0x44c] sm:$0xf]
      %v715 = vld [vmem:[%s2 + $0x450] sm:$0xff]
      %v716 = vld [vmem:[%s2 + $0x458] sm:$0xf]
      %v717 = vld [vmem:[%s2 + $0x45c] sm:$0xff]
      %v718 = vld [vmem:[%s2 + $0x464] sm:$0xf]
      %v719 = vld [vmem:[%s2 + $0x468] sm:$0xff]
      %v720 = vld [vmem:[%s2 + $0x470] sm:$0xf]
      %v721 = vld [vmem:[%s2 + $0x474] sm:$0xff]
      %v722 = vld [vmem:[%s2 + $0x47c] sm:$0xf]
      %v723 = vld [vmem:[%s2 + $0x480] sm:$0xff]
      %v724 = vld [vmem:[%s2 + $0x488] sm:$0xf]
      %v725 = vld [vmem:[%s2 + $0x48c] sm:$0xff]
      %v726 = vld [vmem:[%s2 + $0x494] sm:$0xf]
      %v727 = vld [vmem:[%s2 + $0x498] sm:$0xff]
      %v728 = vld [vmem:[%s2 + $0x4a0] sm:$0xf]
      %v729 = vld [vmem:[%s2 + $0x4a4] sm:$0xff]
      %v730 = vld [vmem:[%s2 + $0x4ac] sm:$0xf]
      %v731 = vld [vmem:[%s2 + $0x4b0] sm:$0xff]
      %v732 = vld [vmem:[%s2 + $0x4b8] sm:$0xf]
      %v733 = vld [vmem:[%s2 + $0x4bc] sm:$0xff]
      %v734 = vld [vmem:[%s2 + $0x4c4] sm:$0xf]
      %v735 = vld [vmem:[%s2 + $0x4c8] sm:$0xff]
      %v736 = vld [vmem:[%s2 + $0x4d0] sm:$0xf]
      %v737 = vld [vmem:[%s2 + $0x4d4] sm:$0xff]
      %v738 = vld [vmem:[%s2 + $0x4dc] sm:$0xf]
      %v739 = vld [vmem:[%s2 + $0x4e0] sm:$0xff]
      %v740 = vld [vmem:[%s2 + $0x4e8] sm:$0xf]
      %v741 = vld [vmem:[%s2 + $0x4ec] sm:$0xff]
      %v742 = vld [vmem:[%s2 + $0x4f4] sm:$0xf]
      %v743 = vld [vmem:[%s2 + $0x4f8] sm:$0xff]
      %v744 = vld [vmem:[%s2 + $0x500] sm:$0xf]
      %v745 = vld [vmem:[%s2 + $0x504] sm:$0xff]
      %v746 = vld [vmem:[%s2 + $0x50c] sm:$0xf]
      %v747 = vld [vmem:[%s2 + $0x510] sm:$0xff]
      %v748 = vld [vmem:[%s2 + $0x518] sm:$0xf]
      %v749 = vld [vmem:[%s2 + $0x51c] sm:$0xff]
      %v750 = vld [vmem:[%s2 + $0x524] sm:$0xf]
      %v751 = vld [vmem:[%s2 + $0x528] sm:$0xff]
      %v752 = vld [vmem:[%s2 + $0x530] sm:$0xf]
      %v753 = vld [vmem:[%s2 + $0x534] sm:$0xff]
      %v754 = vld [vmem:[%s2 + $0x53c] sm:$0xf]
      %v755 = vld [vmem:[%s2 + $0x540] sm:$0xff]
      %v756 = vld [vmem:[%s2 + $0x548] sm:$0xf]
      %v757 = vld [vmem:[%s2 + $0x54c] sm:$0xff]
      %v758 = vld [vmem:[%s2 + $0x554] sm:$0xf]
      %v759 = vld [vmem:[%s2 + $0x558] sm:$0xff]
      %v760 = vld [vmem:[%s2 + $0x560] sm:$0xf]
      %v761 = vld [vmem:[%s2 + $0x564] sm:$0xff]
      %v762 = vld [vmem:[%s2 + $0x56c] sm:$0xf]
      %v763 = vld [vmem:[%s2 + $0x570] sm:$0xff]
      %v764 = vld [vmem:[%s2 + $0x578] sm:$0xf]
      %v765 = vld [vmem:[%s2 + $0x57c] sm:$0xff]
      %v766 = vld [vmem:[%s2 + $0x584] sm:$0xf]
      %v767 = vld [vmem:[%s2 + $0x588] sm:$0xff]
      %v768 = vld [vmem:[%s2 + $0x590] sm:$0xf]
      %v769 = vld [vmem:[%s2 + $0x594] sm:$0xff]
      %v770 = vld [vmem:[%s2 + $0x59c] sm:$0xf]
      %v771 = vld [vmem:[%s2 + $0x5a0] sm:$0xff]
      %v772 = vld [vmem:[%s2 + $0x5a8] sm:$0xf]
      %v773 = vld [vmem:[%s2 + $0x5ac] sm:$0xff]
      %v774 = vld [vmem:[%s2 + $0x5b4] sm:$0xf]
      %v775 = vld [vmem:[%s2 + $0x5b8] sm:$0xff]
      %v776 = vld [vmem:[%s2 + $0x5c0] sm:$0xf]
      %v777 = vld [vmem:[%s2 + $0x5c4] sm:$0xff]
      %v778 = vld [vmem:[%s2 + $0x5cc] sm:$0xf]
      %v779 = vld [vmem:[%s2 + $0x5d0] sm:$0xff]
      %v780 = vld [vmem:[%s2 + $0x5d8] sm:$0xf]
      %v781 = vld [vmem:[%s2 + $0x5dc] sm:$0xff]
      %v782 = vld [vmem:[%s2 + $0x5e4] sm:$0xf]
      %v783 = vld [vmem:[%s2 + $0x5e8] sm:$0xff]
      %v784 = vld [vmem:[%s2 + $0x5f0] sm:$0xf]
      %v785 = vld [vmem:[%s2 + $0x5f4] sm:$0xff]
      %v786 = vld [vmem:[%s2 + $0x5fc] sm:$0xf]
      %v787 = vld [vmem:[%s2 + $0x600] sm:$0xff]
      %v788 = vld [vmem:[%s2 + $0x608] sm:$0xf]
      %v789 = vld [vmem:[%s2 + $0x60c] sm:$0xff]
      %v790 = vld [vmem:[%s2 + $0x614] sm:$0xf]
      %v791 = vld [vmem:[%s2 + $0x618] sm:$0xff]
      %v792 = vld [vmem:[%s2 + $0x620] sm:$0xf]
      %v793 = vld [vmem:[%s2 + $0x624] sm:$0xff]
      %v794 = vld [vmem:[%s2 + $0x62c] sm:$0xf]
      %v795 = vld [vmem:[%s2 + $0x630] sm:$0xff]
      %v796 = vld [vmem:[%s2 + $0x638] sm:$0xf]
      %v797 = vld [vmem:[%s2 + $0x63c] sm:$0xff]
      %v798 = vld [vmem:[%s2 + $0x644] sm:$0xf]
      %v799 = vld [vmem:[%s2 + $0x648] sm:$0xff]
      %v800 = vld [vmem:[%s2 + $0x650] sm:$0xf]
      %v801 = vld [vmem:[%s2 + $0x654] sm:$0xff]
      %v802 = vld [vmem:[%s2 + $0x65c] sm:$0xf]
      %v803 = vld [vmem:[%s2 + $0x660] sm:$0xff]
      %v804 = vld [vmem:[%s2 + $0x668] sm:$0xf]
      %v805 = vld [vmem:[%s2 + $0x66c] sm:$0xff]
      %v806 = vld [vmem:[%s2 + $0x674] sm:$0xf]
      %v807 = vld [vmem:[%s2 + $0x678] sm:$0xff]
      %v808 = vld [vmem:[%s2 + $0x680] sm:$0xf]
      %v809 = vld [vmem:[%s2 + $0x684] sm:$0xff]
      %v810 = vld [vmem:[%s2 + $0x68c] sm:$0xf]
      %v811 = vld [vmem:[%s2 + $0x690] sm:$0xff]
      %v812 = vld [vmem:[%s2 + $0x698] sm:$0xf]
      %v813 = vld [vmem:[%s2 + $0x69c] sm:$0xff]
      %v814 = vld [vmem:[%s2 + $0x6a4] sm:$0xf]
      %v815 = vld [vmem:[%s2 + $0x6a8] sm:$0xff]
      %v816 = vld [vmem:[%s2 + $0x6b0] sm:$0xf]
      %v817 = vld [vmem:[%s2 + $0x6b4] sm:$0xff]
      %v818 = vld [vmem:[%s2 + $0x6bc] sm:$0xf]
      %v819 = vld [vmem:[%s2 + $0x6c0] sm:$0xff]
      %v820 = vld [vmem:[%s2 + $0x6c8] sm:$0xf]
      %v821 = vld [vmem:[%s2 + $0x6cc] sm:$0xff]
      %v822 = vld [vmem:[%s2 + $0x6d4] sm:$0xf]
      %v823 = vld [vmem:[%s2 + $0x6d8] sm:$0xff]
      %v824 = vld [vmem:[%s2 + $0x6e0] sm:$0xf]
      %v825 = vld [vmem:[%s2 + $0x6e4] sm:$0xff]
      %v826 = vld [vmem:[%s2 + $0x6ec] sm:$0xf]
      %v827 = vld [vmem:[%s2 + $0x6f0] sm:$0xff]
      %v828 = vld [vmem:[%s2 + $0x6f8] sm:$0xf]
      %v829 = vld [vmem:[%s2 + $0x6fc] sm:$0xff]
      %v830 = vld [vmem:[%s2 + $0x704] sm:$0xf]
      %v831 = vld [vmem:[%s2 + $0x708] sm:$0xff]
      %v832 = vld [vmem:[%s2 + $0x710] sm:$0xf]
      %v833 = vld [vmem:[%s2 + $0x714] sm:$0xff]
      %v834 = vld [vmem:[%s2 + $0x71c] sm:$0xf]
      %v835 = vld [vmem:[%s2 + $0x720] sm:$0xff]
      %v836 = vld [vmem:[%s2 + $0x728] sm:$0xf]
      %v837 = vld [vmem:[%s2 + $0x72c] sm:$0xff]
      %v838 = vld [vmem:[%s2 + $0x734] sm:$0xf]
      %v839 = vld [vmem:[%s2 + $0x738] sm:$0xff]
      %v840 = vld [vmem:[%s2 + $0x740] sm:$0xf]
      %v841 = vld [vmem:[%s2 + $0x744] sm:$0xff]
      %v842 = vld [vmem:[%s2 + $0x74c] sm:$0xf]
      %v843 = vld [vmem:[%s2 + $0x750] sm:$0xff]
      %v844 = vld [vmem:[%s2 + $0x758] sm:$0xf]
      %v845 = vld [vmem:[%s2 + $0x75c] sm:$0xff]
      %v846 = vld [vmem:[%s2 + $0x764] sm:$0xf]
      %v847 = vld [vmem:[%s2 + $0x768] sm:$0xff]
      %v848 = vld [vmem:[%s2 + $0x770] sm:$0xf]
      %v849 = vld [vmem:[%s2 + $0x774] sm:$0xff]
      %v850 = vld [vmem:[%s2 + $0x77c] sm:$0xf]
      %v851 = vld [vmem:[%s2 + $0x780] sm:$0xff]
      %v852 = vld [vmem:[%s2 + $0x788] sm:$0xf]
      %v853 = vld [vmem:[%s2 + $0x78c] sm:$0xff]
      %v854 = vld [vmem:[%s2 + $0x794] sm:$0xf]
      %v855 = vld [vmem:[%s2 + $0x798] sm:$0xff]
      %v856 = vld [vmem:[%s2 + $0x7a0] sm:$0xf]
      %v857 = vld [vmem:[%s2 + $0x7a4] sm:$0xff]
      %v858 = vld [vmem:[%s2 + $0x7ac] sm:$0xf]
      %v859 = vld [vmem:[%s2 + $0x7b0] sm:$0xff]
      %v860 = vld [vmem:[%s2 + $0x7b8] sm:$0xf]
      %v861 = vld [vmem:[%s2 + $0x7bc] sm:$0xff]
      %v862 = vld [vmem:[%s2 + $0x7c4] sm:$0xf]
      %v863 = vld [vmem:[%s2 + $0x7c8] sm:$0xff]
      %v864 = vld [vmem:[%s2 + $0x7d0] sm:$0xf]
      %v865 = vld [vmem:[%s2 + $0x7d4] sm:$0xff]
      %v866 = vld [vmem:[%s2 + $0x7dc] sm:$0xf]
      %v867 = vld [vmem:[%s2 + $0x7e0] sm:$0xff]
      %v868 = vld [vmem:[%s2 + $0x7e8] sm:$0xf]
      %v869 = vld [vmem:[%s2 + $0x7ec] sm:$0xff]
      %v870 = vld [vmem:[%s2 + $0x7f4] sm:$0xf]
      %v871 = vld [vmem:[%s2 + $0x7f8] sm:$0xff]
      %v872 = vld [vmem:[%s2 + $0x800] sm:$0xf]
      %v873 = vld [vmem:[%s2 + $0x804] sm:$0xff]
      %v874 = vld [vmem:[%s2 + $0x80c] sm:$0xf]
      %v875 = vld [vmem:[%s2 + $0x810] sm:$0xff]
      %v876 = vld [vmem:[%s2 + $0x818] sm:$0xf]
      %v877 = vld [vmem:[%s2 + $0x81c] sm:$0xff]
      %v878 = vld [vmem:[%s2 + $0x824] sm:$0xf]
      %v879 = vld [vmem:[%s2 + $0x828] sm:$0xff]
      %v880 = vld [vmem:[%s2 + $0x830] sm:$0xf]
      %v881 = vld [vmem:[%s2 + $0x834] sm:$0xff]
      %v882 = vld [vmem:[%s2 + $0x83c] sm:$0xf]
      %v883 = vld [vmem:[%s2 + $0x840] sm:$0xff]
      %v884 = vld [vmem:[%s2 + $0x848] sm:$0xf]
      %v885 = vld [vmem:[%s2 + $0x84c] sm:$0xff]
      %v886 = vld [vmem:[%s2 + $0x854] sm:$0xf]
      %v887 = vld [vmem:[%s2 + $0x858] sm:$0xff]
      %v888 = vld [vmem:[%s2 + $0x860] sm:$0xf]
      %v889 = vld [vmem:[%s2 + $0x864] sm:$0xff]
      %v890 = vld [vmem:[%s2 + $0x86c] sm:$0xf]
      %v891 = vld [vmem:[%s2 + $0x870] sm:$0xff]
      %v892 = vld [vmem:[%s2 + $0x878] sm:$0xf]
      %v893 = vld [vmem:[%s2 + $0x87c] sm:$0xff]
      %v894 = vld [vmem:[%s2 + $0x884] sm:$0xf]
      %v895 = vld [vmem:[%s2 + $0x888] sm:$0xff]
      %v896 = vld [vmem:[%s2 + $0x890] sm:$0xf]
      %v897 = vld [vmem:[%s2 + $0x894] sm:$0xff]
      %v898 = vld [vmem:[%s2 + $0x89c] sm:$0xf]
      %v899 = vld [vmem:[%s2 + $0x8a0] sm:$0xff]
      %v900 = vld [vmem:[%s2 + $0x8a8] sm:$0xf]
      %v901 = vld [vmem:[%s2 + $0x8ac] sm:$0xff]
      %v902 = vld [vmem:[%s2 + $0x8b4] sm:$0xf]
      %v903 = vld [vmem:[%s2 + $0x8b8] sm:$0xff]
      %v904 = vld [vmem:[%s2 + $0x8c0] sm:$0xf]
      %v905 = vld [vmem:[%s2 + $0x8c4] sm:$0xff]
      %v906 = vld [vmem:[%s2 + $0x8cc] sm:$0xf]
      %v907 = vld [vmem:[%s2 + $0x8d0] sm:$0xff]
      %v908 = vld [vmem:[%s2 + $0x8d8] sm:$0xf]
      %v909 = vld [vmem:[%s2 + $0x8dc] sm:$0xff]
      %v910 = vld [vmem:[%s2 + $0x8e4] sm:$0xf]
      %v911 = vld [vmem:[%s2 + $0x8e8] sm:$0xff]
      %v912 = vld [vmem:[%s2 + $0x8f0] sm:$0xf]
      %v913 = vld [vmem:[%s2 + $0x8f4] sm:$0xff]
      %v914 = vld [vmem:[%s2 + $0x8fc] sm:$0xf]
      %v915 = vld [vmem:[%s4] sm:$0x7]
      %v917 = vlaneseq
      %v918 = vshrl.u32 %v917, 7
      %v919 = vsub.s32 0, %v918
      %v920 = vrot.slane %v915, %v919
      %v921 = vlaneseq
      %v922 = vshrl.u32 %v921, 7
      %v923 = vsub.s32 1, %v922
      %v924 = vrot.slane %v915, %v923
      %v925 = vlaneseq
      %v926 = vshrl.u32 %v925, 7
      %v927 = vsub.s32 2, %v926
      %v928 = vrot.slane %v915, %v927
      %v1316 = vunpack.c.l.b16 %v531
      %v1317 = vunpack.c.h.b16 %v531
      %v1318 = vunpack.c.l.b16 %v532
      %v1319 = vunpack.c.l.b16 %v533
      %v1320 = vunpack.c.h.b16 %v533
      %v1321 = vunpack.c.l.b16 %v534
      %v1322 = vunpack.c.l.b16 %v535
      %v1323 = vunpack.c.h.b16 %v535
      %v1324 = vunpack.c.l.b16 %v536
      %v1325 = vunpack.c.l.b16 %v537
      %v1326 = vunpack.c.h.b16 %v537
      %v1327 = vunpack.c.l.b16 %v538
      %v1328 = vunpack.c.l.b16 %v539
      %v1329 = vunpack.c.h.b16 %v539
      %v1330 = vunpack.c.l.b16 %v540
      %v1331 = vunpack.c.l.b16 %v541
      %v1332 = vunpack.c.h.b16 %v541
      %v1333 = vunpack.c.l.b16 %v542
      %v1334 = vunpack.c.l.b16 %v543
      %v1335 = vunpack.c.h.b16 %v543
      %v1336 = vunpack.c.l.b16 %v544
      %v1337 = vunpack.c.l.b16 %v545
      %v1338 = vunpack.c.h.b16 %v545
      %v1339 = vunpack.c.l.b16 %v546
      %v1340 = vunpack.c.l.b16 %v547
      %v1341 = vunpack.c.h.b16 %v547
      %v1342 = vunpack.c.l.b16 %v548
      %v1343 = vunpack.c.l.b16 %v549
      %v1344 = vunpack.c.h.b16 %v549
      %v1345 = vunpack.c.l.b16 %v550
      %v1346 = vunpack.c.l.b16 %v551
      %v1347 = vunpack.c.h.b16 %v551
      %v1348 = vunpack.c.l.b16 %v552
      %v1349 = vunpack.c.l.b16 %v553
      %v1350 = vunpack.c.h.b16 %v553
      %v1351 = vunpack.c.l.b16 %v554
      %v1352 = vunpack.c.l.b16 %v555
      %v1353 = vunpack.c.h.b16 %v555
      %v1354 = vunpack.c.l.b16 %v556
      %v1355 = vunpack.c.l.b16 %v557
      %v1356 = vunpack.c.h.b16 %v557
      %v1357 = vunpack.c.l.b16 %v558
      %v1358 = vunpack.c.l.b16 %v559
      %v1359 = vunpack.c.h.b16 %v559
      %v1360 = vunpack.c.l.b16 %v560
      %v1361 = vunpack.c.l.b16 %v561
      %v1362 = vunpack.c.h.b16 %v561
      %v1363 = vunpack.c.l.b16 %v562
      %v1364 = vunpack.c.l.b16 %v563
      %v1365 = vunpack.c.h.b16 %v563
      %v1366 = vunpack.c.l.b16 %v564
      %v1367 = vunpack.c.l.b16 %v565
      %v1368 = vunpack.c.h.b16 %v565
      %v1369 = vunpack.c.l.b16 %v566
      %v1370 = vunpack.c.l.b16 %v567
      %v1371 = vunpack.c.h.b16 %v567
      %v1372 = vunpack.c.l.b16 %v568
      %v1373 = vunpack.c.l.b16 %v569
      %v1374 = vunpack.c.h.b16 %v569
      %v1375 = vunpack.c.l.b16 %v570
      %v1376 = vunpack.c.l.b16 %v571
      %v1377 = vunpack.c.h.b16 %v571
      %v1378 = vunpack.c.l.b16 %v572
      %v1379 = vunpack.c.l.b16 %v573
      %v1380 = vunpack.c.h.b16 %v573
      %v1381 = vunpack.c.l.b16 %v574
      %v1382 = vunpack.c.l.b16 %v575
      %v1383 = vunpack.c.h.b16 %v575
      %v1384 = vunpack.c.l.b16 %v576
      %v1385 = vunpack.c.l.b16 %v577
      %v1386 = vunpack.c.h.b16 %v577
      %v1387 = vunpack.c.l.b16 %v578
      %v1388 = vunpack.c.l.b16 %v579
      %v1389 = vunpack.c.h.b16 %v579
      %v1390 = vunpack.c.l.b16 %v580
      %v1391 = vunpack.c.l.b16 %v581
      %v1392 = vunpack.c.h.b16 %v581
      %v1393 = vunpack.c.l.b16 %v582
      %v1394 = vunpack.c.l.b16 %v583
      %v1395 = vunpack.c.h.b16 %v583
      %v1396 = vunpack.c.l.b16 %v584
      %v1397 = vunpack.c.l.b16 %v585
      %v1398 = vunpack.c.h.b16 %v585
      %v1399 = vunpack.c.l.b16 %v586
      %v1400 = vunpack.c.l.b16 %v587
      %v1401 = vunpack.c.h.b16 %v587
      %v1402 = vunpack.c.l.b16 %v588
      %v1403 = vunpack.c.l.b16 %v589
      %v1404 = vunpack.c.h.b16 %v589
      %v1405 = vunpack.c.l.b16 %v590
      %v1406 = vunpack.c.l.b16 %v591
      %v1407 = vunpack.c.h.b16 %v591
      %v1408 = vunpack.c.l.b16 %v592
      %v1409 = vunpack.c.l.b16 %v593
      %v1410 = vunpack.c.h.b16 %v593
      %v1411 = vunpack.c.l.b16 %v594
      %v1412 = vunpack.c.l.b16 %v595
      %v1413 = vunpack.c.h.b16 %v595
      %v1414 = vunpack.c.l.b16 %v596
      %v1415 = vunpack.c.l.b16 %v597
      %v1416 = vunpack.c.h.b16 %v597
      %v1417 = vunpack.c.l.b16 %v598
      %v1418 = vunpack.c.l.b16 %v599
      %v1419 = vunpack.c.h.b16 %v599
      %v1420 = vunpack.c.l.b16 %v600
      %v1421 = vunpack.c.l.b16 %v601
      %v1422 = vunpack.c.h.b16 %v601
      %v1423 = vunpack.c.l.b16 %v602
      %v1424 = vunpack.c.l.b16 %v603
      %v1425 = vunpack.c.h.b16 %v603
      %v1426 = vunpack.c.l.b16 %v604
      %v1427 = vunpack.c.l.b16 %v605
      %v1428 = vunpack.c.h.b16 %v605
      %v1429 = vunpack.c.l.b16 %v606
      %v1430 = vunpack.c.l.b16 %v607
      %v1431 = vunpack.c.h.b16 %v607
      %v1432 = vunpack.c.l.b16 %v608
      %v1433 = vunpack.c.l.b16 %v609
      %v1434 = vunpack.c.h.b16 %v609
      %v1435 = vunpack.c.l.b16 %v610
      %v1436 = vunpack.c.l.b16 %v611
      %v1437 = vunpack.c.h.b16 %v611
      %v1438 = vunpack.c.l.b16 %v612
      %v1439 = vunpack.c.l.b16 %v613
      %v1440 = vunpack.c.h.b16 %v613
      %v1441 = vunpack.c.l.b16 %v614
      %v1442 = vunpack.c.l.b16 %v615
      %v1443 = vunpack.c.h.b16 %v615
      %v1444 = vunpack.c.l.b16 %v616
      %v1445 = vunpack.c.l.b16 %v617
      %v1446 = vunpack.c.h.b16 %v617
      %v1447 = vunpack.c.l.b16 %v618
      %v1448 = vunpack.c.l.b16 %v619
      %v1449 = vunpack.c.h.b16 %v619
      %v1450 = vunpack.c.l.b16 %v620
      %v1451 = vunpack.c.l.b16 %v621
      %v1452 = vunpack.c.h.b16 %v621
      %v1453 = vunpack.c.l.b16 %v622
      %v1454 = vunpack.c.l.b16 %v623
      %v1455 = vunpack.c.h.b16 %v623
      %v1456 = vunpack.c.l.b16 %v624
      %v1457 = vunpack.c.l.b16 %v625
      %v1458 = vunpack.c.h.b16 %v625
      %v1459 = vunpack.c.l.b16 %v626
      %v1460 = vunpack.c.l.b16 %v627
      %v1461 = vunpack.c.h.b16 %v627
      %v1462 = vunpack.c.l.b16 %v628
      %v1463 = vunpack.c.l.b16 %v629
      %v1464 = vunpack.c.h.b16 %v629
      %v1465 = vunpack.c.l.b16 %v630
      %v1466 = vunpack.c.l.b16 %v631
      %v1467 = vunpack.c.h.b16 %v631
      %v1468 = vunpack.c.l.b16 %v632
      %v1469 = vunpack.c.l.b16 %v633
      %v1470 = vunpack.c.h.b16 %v633
      %v1471 = vunpack.c.l.b16 %v634
      %v1472 = vunpack.c.l.b16 %v635
      %v1473 = vunpack.c.h.b16 %v635
      %v1474 = vunpack.c.l.b16 %v636
      %v1475 = vunpack.c.l.b16 %v637
      %v1476 = vunpack.c.h.b16 %v637
      %v1477 = vunpack.c.l.b16 %v638
      %v1478 = vunpack.c.l.b16 %v639
      %v1479 = vunpack.c.h.b16 %v639
      %v1480 = vunpack.c.l.b16 %v640
      %v1481 = vunpack.c.l.b16 %v641
      %v1482 = vunpack.c.h.b16 %v641
      %v1483 = vunpack.c.l.b16 %v642
      %v1484 = vunpack.c.l.b16 %v643
      %v1485 = vunpack.c.h.b16 %v643
      %v1486 = vunpack.c.l.b16 %v644
      %v1487 = vunpack.c.l.b16 %v645
      %v1488 = vunpack.c.h.b16 %v645
      %v1489 = vunpack.c.l.b16 %v646
      %v1490 = vunpack.c.l.b16 %v647
      %v1491 = vunpack.c.h.b16 %v647
      %v1492 = vunpack.c.l.b16 %v648
      %v1493 = vunpack.c.l.b16 %v649
      %v1494 = vunpack.c.h.b16 %v649
      %v1495 = vunpack.c.l.b16 %v650
      %v1496 = vunpack.c.l.b16 %v651
      %v1497 = vunpack.c.h.b16 %v651
      %v1498 = vunpack.c.l.b16 %v652
      %v1499 = vunpack.c.l.b16 %v653
      %v1500 = vunpack.c.h.b16 %v653
      %v1501 = vunpack.c.l.b16 %v654
      %v1502 = vunpack.c.l.b16 %v655
      %v1503 = vunpack.c.h.b16 %v655
      %v1504 = vunpack.c.l.b16 %v656
      %v1505 = vunpack.c.l.b16 %v657
      %v1506 = vunpack.c.h.b16 %v657
      %v1507 = vunpack.c.l.b16 %v658
      %v1508 = vunpack.c.l.b16 %v659
      %v1509 = vunpack.c.h.b16 %v659
      %v1510 = vunpack.c.l.b16 %v660
      %v1511 = vunpack.c.l.b16 %v661
      %v1512 = vunpack.c.h.b16 %v661
      %v1513 = vunpack.c.l.b16 %v662
      %v1514 = vunpack.c.l.b16 %v663
      %v1515 = vunpack.c.h.b16 %v663
      %v1516 = vunpack.c.l.b16 %v664
      %v1517 = vunpack.c.l.b16 %v665
      %v1518 = vunpack.c.h.b16 %v665
      %v1519 = vunpack.c.l.b16 %v666
      %v1520 = vunpack.c.l.b16 %v667
      %v1521 = vunpack.c.h.b16 %v667
      %v1522 = vunpack.c.l.b16 %v668
      %v1523 = vunpack.c.l.b16 %v669
      %v1524 = vunpack.c.h.b16 %v669
      %v1525 = vunpack.c.l.b16 %v670
      %v1526 = vunpack.c.l.b16 %v671
      %v1527 = vunpack.c.h.b16 %v671
      %v1528 = vunpack.c.l.b16 %v672
      %v1529 = vunpack.c.l.b16 %v673
      %v1530 = vunpack.c.h.b16 %v673
      %v1531 = vunpack.c.l.b16 %v674
      %v1532 = vunpack.c.l.b16 %v675
      %v1533 = vunpack.c.h.b16 %v675
      %v1534 = vunpack.c.l.b16 %v676
      %v1535 = vunpack.c.l.b16 %v677
      %v1536 = vunpack.c.h.b16 %v677
      %v1537 = vunpack.c.l.b16 %v678
      %v1538 = vunpack.c.l.b16 %v679
      %v1539 = vunpack.c.h.b16 %v679
      %v1540 = vunpack.c.l.b16 %v680
      %v1541 = vunpack.c.l.b16 %v681
      %v1542 = vunpack.c.h.b16 %v681
      %v1543 = vunpack.c.l.b16 %v682
      %v1544 = vunpack.c.l.b16 %v683
      %v1545 = vunpack.c.h.b16 %v683
      %v1546 = vunpack.c.l.b16 %v684
      %v1547 = vunpack.c.l.b16 %v685
      %v1548 = vunpack.c.h.b16 %v685
      %v1549 = vunpack.c.l.b16 %v686
      %v1550 = vunpack.c.l.b16 %v687
      %v1551 = vunpack.c.h.b16 %v687
      %v1552 = vunpack.c.l.b16 %v688
      %v1553 = vunpack.c.l.b16 %v689
      %v1554 = vunpack.c.h.b16 %v689
      %v1555 = vunpack.c.l.b16 %v690
      %v1556 = vunpack.c.l.b16 %v691
      %v1557 = vunpack.c.h.b16 %v691
      %v1558 = vunpack.c.l.b16 %v692
      %v1559 = vunpack.c.l.b16 %v693
      %v1560 = vunpack.c.h.b16 %v693
      %v1561 = vunpack.c.l.b16 %v694
      %v1562 = vunpack.c.l.b16 %v695
      %v1563 = vunpack.c.h.b16 %v695
      %v1564 = vunpack.c.l.b16 %v696
      %v1565 = vunpack.c.l.b16 %v697
      %v1566 = vunpack.c.h.b16 %v697
      %v1567 = vunpack.c.l.b16 %v698
      %v1568 = vunpack.c.l.b16 %v699
      %v1569 = vunpack.c.h.b16 %v699
      %v1570 = vunpack.c.l.b16 %v700
      %v1571 = vunpack.c.l.b16 %v701
      %v1572 = vunpack.c.h.b16 %v701
      %v1573 = vunpack.c.l.b16 %v702
      %v1574 = vunpack.c.l.b16 %v703
      %v1575 = vunpack.c.h.b16 %v703
      %v1576 = vunpack.c.l.b16 %v704
      %v1577 = vunpack.c.l.b16 %v705
      %v1578 = vunpack.c.h.b16 %v705
      %v1579 = vunpack.c.l.b16 %v706
      %v1580 = vunpack.c.l.b16 %v707
      %v1581 = vunpack.c.h.b16 %v707
      %v1582 = vunpack.c.l.b16 %v708
      %v1583 = vunpack.c.l.b16 %v709
      %v1584 = vunpack.c.h.b16 %v709
      %v1585 = vunpack.c.l.b16 %v710
      %v1586 = vunpack.c.l.b16 %v711
      %v1587 = vunpack.c.h.b16 %v711
      %v1588 = vunpack.c.l.b16 %v712
      %v1589 = vunpack.c.l.b16 %v713
      %v1590 = vunpack.c.h.b16 %v713
      %v1591 = vunpack.c.l.b16 %v714
      %v1592 = vunpack.c.l.b16 %v715
      %v1593 = vunpack.c.h.b16 %v715
      %v1594 = vunpack.c.l.b16 %v716
      %v1595 = vunpack.c.l.b16 %v717
      %v1596 = vunpack.c.h.b16 %v717
      %v1597 = vunpack.c.l.b16 %v718
      %v1598 = vunpack.c.l.b16 %v719
      %v1599 = vunpack.c.h.b16 %v719
      %v1600 = vunpack.c.l.b16 %v720
      %v1601 = vunpack.c.l.b16 %v721
      %v1602 = vunpack.c.h.b16 %v721
      %v1603 = vunpack.c.l.b16 %v722
      %v1604 = vunpack.c.l.b16 %v723
      %v1605 = vunpack.c.h.b16 %v723
      %v1606 = vunpack.c.l.b16 %v724
      %v1607 = vunpack.c.l.b16 %v725
      %v1608 = vunpack.c.h.b16 %v725
      %v1609 = vunpack.c.l.b16 %v726
      %v1610 = vunpack.c.l.b16 %v727
      %v1611 = vunpack.c.h.b16 %v727
      %v1612 = vunpack.c.l.b16 %v728
      %v1613 = vunpack.c.l.b16 %v729
      %v1614 = vunpack.c.h.b16 %v729
      %v1615 = vunpack.c.l.b16 %v730
      %v1616 = vunpack.c.l.b16 %v731
      %v1617 = vunpack.c.h.b16 %v731
      %v1618 = vunpack.c.l.b16 %v732
      %v1619 = vunpack.c.l.b16 %v733
      %v1620 = vunpack.c.h.b16 %v733
      %v1621 = vunpack.c.l.b16 %v734
      %v1622 = vunpack.c.l.b16 %v735
      %v1623 = vunpack.c.h.b16 %v735
      %v1624 = vunpack.c.l.b16 %v736
      %v1625 = vunpack.c.l.b16 %v737
      %v1626 = vunpack.c.h.b16 %v737
      %v1627 = vunpack.c.l.b16 %v738
      %v1628 = vunpack.c.l.b16 %v739
      %v1629 = vunpack.c.h.b16 %v739
      %v1630 = vunpack.c.l.b16 %v740
      %v1631 = vunpack.c.l.b16 %v741
      %v1632 = vunpack.c.h.b16 %v741
      %v1633 = vunpack.c.l.b16 %v742
      %v1634 = vunpack.c.l.b16 %v743
      %v1635 = vunpack.c.h.b16 %v743
      %v1636 = vunpack.c.l.b16 %v744
      %v1637 = vunpack.c.l.b16 %v745
      %v1638 = vunpack.c.h.b16 %v745
      %v1639 = vunpack.c.l.b16 %v746
      %v1640 = vunpack.c.l.b16 %v747
      %v1641 = vunpack.c.h.b16 %v747
      %v1642 = vunpack.c.l.b16 %v748
      %v1643 = vunpack.c.l.b16 %v749
      %v1644 = vunpack.c.h.b16 %v749
      %v1645 = vunpack.c.l.b16 %v750
      %v1646 = vunpack.c.l.b16 %v751
      %v1647 = vunpack.c.h.b16 %v751
      %v1648 = vunpack.c.l.b16 %v752
      %v1649 = vunpack.c.l.b16 %v753
      %v1650 = vunpack.c.h.b16 %v753
      %v1651 = vunpack.c.l.b16 %v754
      %v1652 = vunpack.c.l.b16 %v755
      %v1653 = vunpack.c.h.b16 %v755
      %v1654 = vunpack.c.l.b16 %v756
      %v1655 = vunpack.c.l.b16 %v757
      %v1656 = vunpack.c.h.b16 %v757
      %v1657 = vunpack.c.l.b16 %v758
      %v1658 = vunpack.c.l.b16 %v759
      %v1659 = vunpack.c.h.b16 %v759
      %v1660 = vunpack.c.l.b16 %v760
      %v1661 = vunpack.c.l.b16 %v761
      %v1662 = vunpack.c.h.b16 %v761
      %v1663 = vunpack.c.l.b16 %v762
      %v1664 = vunpack.c.l.b16 %v763
      %v1665 = vunpack.c.h.b16 %v763
      %v1666 = vunpack.c.l.b16 %v764
      %v1667 = vunpack.c.l.b16 %v765
      %v1668 = vunpack.c.h.b16 %v765
      %v1669 = vunpack.c.l.b16 %v766
      %v1670 = vunpack.c.l.b16 %v767
      %v1671 = vunpack.c.h.b16 %v767
      %v1672 = vunpack.c.l.b16 %v768
      %v1673 = vunpack.c.l.b16 %v769
      %v1674 = vunpack.c.h.b16 %v769
      %v1675 = vunpack.c.l.b16 %v770
      %v1676 = vunpack.c.l.b16 %v771
      %v1677 = vunpack.c.h.b16 %v771
      %v1678 = vunpack.c.l.b16 %v772
      %v1679 = vunpack.c.l.b16 %v773
      %v1680 = vunpack.c.h.b16 %v773
      %v1681 = vunpack.c.l.b16 %v774
      %v1682 = vunpack.c.l.b16 %v775
      %v1683 = vunpack.c.h.b16 %v775
      %v1684 = vunpack.c.l.b16 %v776
      %v1685 = vunpack.c.l.b16 %v777
      %v1686 = vunpack.c.h.b16 %v777
      %v1687 = vunpack.c.l.b16 %v778
      %v1688 = vunpack.c.l.b16 %v779
      %v1689 = vunpack.c.h.b16 %v779
      %v1690 = vunpack.c.l.b16 %v780
      %v1691 = vunpack.c.l.b16 %v781
      %v1692 = vunpack.c.h.b16 %v781
      %v1693 = vunpack.c.l.b16 %v782
      %v1694 = vunpack.c.l.b16 %v783
      %v1695 = vunpack.c.h.b16 %v783
      %v1696 = vunpack.c.l.b16 %v784
      %v1697 = vunpack.c.l.b16 %v785
      %v1698 = vunpack.c.h.b16 %v785
      %v1699 = vunpack.c.l.b16 %v786
      %v1700 = vunpack.c.l.b16 %v787
      %v1701 = vunpack.c.h.b16 %v787
      %v1702 = vunpack.c.l.b16 %v788
      %v1703 = vunpack.c.l.b16 %v789
      %v1704 = vunpack.c.h.b16 %v789
      %v1705 = vunpack.c.l.b16 %v790
      %v1706 = vunpack.c.l.b16 %v791
      %v1707 = vunpack.c.h.b16 %v791
      %v1708 = vunpack.c.l.b16 %v792
      %v1709 = vunpack.c.l.b16 %v793
      %v1710 = vunpack.c.h.b16 %v793
      %v1711 = vunpack.c.l.b16 %v794
      %v1712 = vunpack.c.l.b16 %v795
      %v1713 = vunpack.c.h.b16 %v795
      %v1714 = vunpack.c.l.b16 %v796
      %v1715 = vunpack.c.l.b16 %v797
      %v1716 = vunpack.c.h.b16 %v797
      %v1717 = vunpack.c.l.b16 %v798
      %v1718 = vunpack.c.l.b16 %v799
      %v1719 = vunpack.c.h.b16 %v799
      %v1720 = vunpack.c.l.b16 %v800
      %v1721 = vunpack.c.l.b16 %v801
      %v1722 = vunpack.c.h.b16 %v801
      %v1723 = vunpack.c.l.b16 %v802
      %v1724 = vunpack.c.l.b16 %v803
      %v1725 = vunpack.c.h.b16 %v803
      %v1726 = vunpack.c.l.b16 %v804
      %v1727 = vunpack.c.l.b16 %v805
      %v1728 = vunpack.c.h.b16 %v805
      %v1729 = vunpack.c.l.b16 %v806
      %v1730 = vunpack.c.l.b16 %v807
      %v1731 = vunpack.c.h.b16 %v807
      %v1732 = vunpack.c.l.b16 %v808
      %v1733 = vunpack.c.l.b16 %v809
      %v1734 = vunpack.c.h.b16 %v809
      %v1735 = vunpack.c.l.b16 %v810
      %v1736 = vunpack.c.l.b16 %v811
      %v1737 = vunpack.c.h.b16 %v811
      %v1738 = vunpack.c.l.b16 %v812
      %v1739 = vunpack.c.l.b16 %v813
      %v1740 = vunpack.c.h.b16 %v813
      %v1741 = vunpack.c.l.b16 %v814
      %v1742 = vunpack.c.l.b16 %v815
      %v1743 = vunpack.c.h.b16 %v815
      %v1744 = vunpack.c.l.b16 %v816
      %v1745 = vunpack.c.l.b16 %v817
      %v1746 = vunpack.c.h.b16 %v817
      %v1747 = vunpack.c.l.b16 %v818
      %v1748 = vunpack.c.l.b16 %v819
      %v1749 = vunpack.c.h.b16 %v819
      %v1750 = vunpack.c.l.b16 %v820
      %v1751 = vunpack.c.l.b16 %v821
      %v1752 = vunpack.c.h.b16 %v821
      %v1753 = vunpack.c.l.b16 %v822
      %v1754 = vunpack.c.l.b16 %v823
      %v1755 = vunpack.c.h.b16 %v823
      %v1756 = vunpack.c.l.b16 %v824
      %v1757 = vunpack.c.l.b16 %v825
      %v1758 = vunpack.c.h.b16 %v825
      %v1759 = vunpack.c.l.b16 %v826
      %v1760 = vunpack.c.l.b16 %v827
      %v1761 = vunpack.c.h.b16 %v827
      %v1762 = vunpack.c.l.b16 %v828
      %v1763 = vunpack.c.l.b16 %v829
      %v1764 = vunpack.c.h.b16 %v829
      %v1765 = vunpack.c.l.b16 %v830
      %v1766 = vunpack.c.l.b16 %v831
      %v1767 = vunpack.c.h.b16 %v831
      %v1768 = vunpack.c.l.b16 %v832
      %v1769 = vunpack.c.l.b16 %v833
      %v1770 = vunpack.c.h.b16 %v833
      %v1771 = vunpack.c.l.b16 %v834
      %v1772 = vunpack.c.l.b16 %v835
      %v1773 = vunpack.c.h.b16 %v835
      %v1774 = vunpack.c.l.b16 %v836
      %v1775 = vunpack.c.l.b16 %v837
      %v1776 = vunpack.c.h.b16 %v837
      %v1777 = vunpack.c.l.b16 %v838
      %v1778 = vunpack.c.l.b16 %v839
      %v1779 = vunpack.c.h.b16 %v839
      %v1780 = vunpack.c.l.b16 %v840
      %v1781 = vunpack.c.l.b16 %v841
      %v1782 = vunpack.c.h.b16 %v841
      %v1783 = vunpack.c.l.b16 %v842
      %v1784 = vunpack.c.l.b16 %v843
      %v1785 = vunpack.c.h.b16 %v843
      %v1786 = vunpack.c.l.b16 %v844
      %v1787 = vunpack.c.l.b16 %v845
      %v1788 = vunpack.c.h.b16 %v845
      %v1789 = vunpack.c.l.b16 %v846
      %v1790 = vunpack.c.l.b16 %v847
      %v1791 = vunpack.c.h.b16 %v847
      %v1792 = vunpack.c.l.b16 %v848
      %v1793 = vunpack.c.l.b16 %v849
      %v1794 = vunpack.c.h.b16 %v849
      %v1795 = vunpack.c.l.b16 %v850
      %v1796 = vunpack.c.l.b16 %v851
      %v1797 = vunpack.c.h.b16 %v851
      %v1798 = vunpack.c.l.b16 %v852
      %v1799 = vunpack.c.l.b16 %v853
      %v1800 = vunpack.c.h.b16 %v853
      %v1801 = vunpack.c.l.b16 %v854
      %v1802 = vunpack.c.l.b16 %v855
      %v1803 = vunpack.c.h.b16 %v855
      %v1804 = vunpack.c.l.b16 %v856
      %v1805 = vunpack.c.l.b16 %v857
      %v1806 = vunpack.c.h.b16 %v857
      %v1807 = vunpack.c.l.b16 %v858
      %v1808 = vunpack.c.l.b16 %v859
      %v1809 = vunpack.c.h.b16 %v859
      %v1810 = vunpack.c.l.b16 %v860
      %v1811 = vunpack.c.l.b16 %v861
      %v1812 = vunpack.c.h.b16 %v861
      %v1813 = vunpack.c.l.b16 %v862
      %v1814 = vunpack.c.l.b16 %v863
      %v1815 = vunpack.c.h.b16 %v863
      %v1816 = vunpack.c.l.b16 %v864
      %v1817 = vunpack.c.l.b16 %v865
      %v1818 = vunpack.c.h.b16 %v865
      %v1819 = vunpack.c.l.b16 %v866
      %v1820 = vunpack.c.l.b16 %v867
      %v1821 = vunpack.c.h.b16 %v867
      %v1822 = vunpack.c.l.b16 %v868
      %v1823 = vunpack.c.l.b16 %v869
      %v1824 = vunpack.c.h.b16 %v869
      %v1825 = vunpack.c.l.b16 %v870
      %v1826 = vunpack.c.l.b16 %v871
      %v1827 = vunpack.c.h.b16 %v871
      %v1828 = vunpack.c.l.b16 %v872
      %v1829 = vunpack.c.l.b16 %v873
      %v1830 = vunpack.c.h.b16 %v873
      %v1831 = vunpack.c.l.b16 %v874
      %v1832 = vunpack.c.l.b16 %v875
      %v1833 = vunpack.c.h.b16 %v875
      %v1834 = vunpack.c.l.b16 %v876
      %v1835 = vunpack.c.l.b16 %v877
      %v1836 = vunpack.c.h.b16 %v877
      %v1837 = vunpack.c.l.b16 %v878
      %v1838 = vunpack.c.l.b16 %v879
      %v1839 = vunpack.c.h.b16 %v879
      %v1840 = vunpack.c.l.b16 %v880
      %v1841 = vunpack.c.l.b16 %v881
      %v1842 = vunpack.c.h.b16 %v881
      %v1843 = vunpack.c.l.b16 %v882
      %v1844 = vunpack.c.l.b16 %v883
      %v1845 = vunpack.c.h.b16 %v883
      %v1846 = vunpack.c.l.b16 %v884
      %v1847 = vunpack.c.l.b16 %v885
      %v1848 = vunpack.c.h.b16 %v885
      %v1849 = vunpack.c.l.b16 %v886
      %v1850 = vunpack.c.l.b16 %v887
      %v1851 = vunpack.c.h.b16 %v887
      %v1852 = vunpack.c.l.b16 %v888
      %v1853 = vunpack.c.l.b16 %v889
      %v1854 = vunpack.c.h.b16 %v889
      %v1855 = vunpack.c.l.b16 %v890
      %v1856 = vunpack.c.l.b16 %v891
      %v1857 = vunpack.c.h.b16 %v891
      %v1858 = vunpack.c.l.b16 %v892
      %v1859 = vunpack.c.l.b16 %v893
      %v1860 = vunpack.c.h.b16 %v893
      %v1861 = vunpack.c.l.b16 %v894
      %v1862 = vunpack.c.l.b16 %v895
      %v1863 = vunpack.c.h.b16 %v895
      %v1864 = vunpack.c.l.b16 %v896
      %v1865 = vunpack.c.l.b16 %v897
      %v1866 = vunpack.c.h.b16 %v897
      %v1867 = vunpack.c.l.b16 %v898
      %v1868 = vunpack.c.l.b16 %v899
      %v1869 = vunpack.c.h.b16 %v899
      %v1870 = vunpack.c.l.b16 %v900
      %v1871 = vunpack.c.l.b16 %v901
      %v1872 = vunpack.c.h.b16 %v901
      %v1873 = vunpack.c.l.b16 %v902
      %v1874 = vunpack.c.l.b16 %v903
      %v1875 = vunpack.c.h.b16 %v903
      %v1876 = vunpack.c.l.b16 %v904
      %v1877 = vunpack.c.l.b16 %v905
      %v1878 = vunpack.c.h.b16 %v905
      %v1879 = vunpack.c.l.b16 %v906
      %v1880 = vunpack.c.l.b16 %v907
      %v1881 = vunpack.c.h.b16 %v907
      %v1882 = vunpack.c.l.b16 %v908
      %v1883 = vunpack.c.l.b16 %v909
      %v1884 = vunpack.c.h.b16 %v909
      %v1885 = vunpack.c.l.b16 %v910
      %v1886 = vunpack.c.l.b16 %v911
      %v1887 = vunpack.c.h.b16 %v911
      %v1888 = vunpack.c.l.b16 %v912
      %v1889 = vunpack.c.l.b16 %v913
      %v1890 = vunpack.c.h.b16 %v913
      %v1891 = vunpack.c.l.b16 %v914
      %v1892 = vpack.c.b16 %v1319, %v1316
      %v1893 = vpack.c.b16 %v1320, %v1317
      %v1894 = vpack.c.b16 %v1321, %v1318
      %v1895 = vpack.c.b16 %v1325, %v1322
      %v1896 = vpack.c.b16 %v1326, %v1323
      %v1897 = vpack.c.b16 %v1327, %v1324
      %v1898 = vpack.c.b16 %v1331, %v1328
      %v1899 = vpack.c.b16 %v1332, %v1329
      %v1900 = vpack.c.b16 %v1333, %v1330
      %v1901 = vpack.c.b16 %v1337, %v1334
      %v1902 = vpack.c.b16 %v1338, %v1335
      %v1903 = vpack.c.b16 %v1339, %v1336
      %v1904 = vpack.c.b16 %v1343, %v1340
      %v1905 = vpack.c.b16 %v1344, %v1341
      %v1906 = vpack.c.b16 %v1345, %v1342
      %v1907 = vpack.c.b16 %v1349, %v1346
      %v1908 = vpack.c.b16 %v1350, %v1347
      %v1909 = vpack.c.b16 %v1351, %v1348
      %v1910 = vpack.c.b16 %v1355, %v1352
      %v1911 = vpack.c.b16 %v1356, %v1353
      %v1912 = vpack.c.b16 %v1357, %v1354
      %v1913 = vpack.c.b16 %v1361, %v1358
      %v1914 = vpack.c.b16 %v1362, %v1359
      %v1915 = vpack.c.b16 %v1363, %v1360
      %v1916 = vpack.c.b16 %v1367, %v1364
      %v1917 = vpack.c.b16 %v1368, %v1365
      %v1918 = vpack.c.b16 %v1369, %v1366
      %v1919 = vpack.c.b16 %v1373, %v1370
      %v1920 = vpack.c.b16 %v1374, %v1371
      %v1921 = vpack.c.b16 %v1375, %v1372
      %v1922 = vpack.c.b16 %v1379, %v1376
      %v1923 = vpack.c.b16 %v1380, %v1377
      %v1924 = vpack.c.b16 %v1381, %v1378
      %v1925 = vpack.c.b16 %v1385, %v1382
      %v1926 = vpack.c.b16 %v1386, %v1383
      %v1927 = vpack.c.b16 %v1387, %v1384
      %v1928 = vpack.c.b16 %v1391, %v1388
      %v1929 = vpack.c.b16 %v1392, %v1389
      %v1930 = vpack.c.b16 %v1393, %v1390
      %v1931 = vpack.c.b16 %v1397, %v1394
      %v1932 = vpack.c.b16 %v1398, %v1395
      %v1933 = vpack.c.b16 %v1399, %v1396
      %v1934 = vpack.c.b16 %v1403, %v1400
      %v1935 = vpack.c.b16 %v1404, %v1401
      %v1936 = vpack.c.b16 %v1405, %v1402
      %v1937 = vpack.c.b16 %v1409, %v1406
      %v1938 = vpack.c.b16 %v1410, %v1407
      %v1939 = vpack.c.b16 %v1411, %v1408
      %v1940 = vpack.c.b16 %v1415, %v1412
      %v1941 = vpack.c.b16 %v1416, %v1413
      %v1942 = vpack.c.b16 %v1417, %v1414
      %v1943 = vpack.c.b16 %v1421, %v1418
      %v1944 = vpack.c.b16 %v1422, %v1419
      %v1945 = vpack.c.b16 %v1423, %v1420
      %v1946 = vpack.c.b16 %v1427, %v1424
      %v1947 = vpack.c.b16 %v1428, %v1425
      %v1948 = vpack.c.b16 %v1429, %v1426
      %v1949 = vpack.c.b16 %v1433, %v1430
      %v1950 = vpack.c.b16 %v1434, %v1431
      %v1951 = vpack.c.b16 %v1435, %v1432
      %v1952 = vpack.c.b16 %v1439, %v1436
      %v1953 = vpack.c.b16 %v1440, %v1437
      %v1954 = vpack.c.b16 %v1441, %v1438
      %v1955 = vpack.c.b16 %v1445, %v1442
      %v1956 = vpack.c.b16 %v1446, %v1443
      %v1957 = vpack.c.b16 %v1447, %v1444
      %v1958 = vpack.c.b16 %v1451, %v1448
      %v1959 = vpack.c.b16 %v1452, %v1449
      %v1960 = vpack.c.b16 %v1453, %v1450
      %v1961 = vpack.c.b16 %v1457, %v1454
      %v1962 = vpack.c.b16 %v1458, %v1455
      %v1963 = vpack.c.b16 %v1459, %v1456
      %v1964 = vpack.c.b16 %v1463, %v1460
      %v1965 = vpack.c.b16 %v1464, %v1461
      %v1966 = vpack.c.b16 %v1465, %v1462
      %v1967 = vpack.c.b16 %v1469, %v1466
      %v1968 = vpack.c.b16 %v1470, %v1467
      %v1969 = vpack.c.b16 %v1471, %v1468
      %v1970 = vpack.c.b16 %v1475, %v1472
      %v1971 = vpack.c.b16 %v1476, %v1473
      %v1972 = vpack.c.b16 %v1477, %v1474
      %v1973 = vpack.c.b16 %v1481, %v1478
      %v1974 = vpack.c.b16 %v1482, %v1479
      %v1975 = vpack.c.b16 %v1483, %v1480
      %v1976 = vpack.c.b16 %v1487, %v1484
      %v1977 = vpack.c.b16 %v1488, %v1485
      %v1978 = vpack.c.b16 %v1489, %v1486
      %v1979 = vpack.c.b16 %v1493, %v1490
      %v1980 = vpack.c.b16 %v1494, %v1491
      %v1981 = vpack.c.b16 %v1495, %v1492
      %v1982 = vpack.c.b16 %v1499, %v1496
      %v1983 = vpack.c.b16 %v1500, %v1497
      %v1984 = vpack.c.b16 %v1501, %v1498
      %v1985 = vpack.c.b16 %v1505, %v1502
      %v1986 = vpack.c.b16 %v1506, %v1503
      %v1987 = vpack.c.b16 %v1507, %v1504
      %v1988 = vpack.c.b16 %v1511, %v1508
      %v1989 = vpack.c.b16 %v1512, %v1509
      %v1990 = vpack.c.b16 %v1513, %v1510
      %v1991 = vpack.c.b16 %v1517, %v1514
      %v1992 = vpack.c.b16 %v1518, %v1515
      %v1993 = vpack.c.b16 %v1519, %v1516
      %v1994 = vpack.c.b16 %v1523, %v1520
      %v1995 = vpack.c.b16 %v1524, %v1521
      %v1996 = vpack.c.b16 %v1525, %v1522
      %v1997 = vpack.c.b16 %v1529, %v1526
      %v1998 = vpack.c.b16 %v1530, %v1527
      %v1999 = vpack.c.b16 %v1531, %v1528
      %v2000 = vpack.c.b16 %v1535, %v1532
      %v2001 = vpack.c.b16 %v1536, %v1533
      %v2002 = vpack.c.b16 %v1537, %v1534
      %v2003 = vpack.c.b16 %v1541, %v1538
      %v2004 = vpack.c.b16 %v1542, %v1539
      %v2005 = vpack.c.b16 %v1543, %v1540
      %v2006 = vpack.c.b16 %v1547, %v1544
      %v2007 = vpack.c.b16 %v1548, %v1545
      %v2008 = vpack.c.b16 %v1549, %v1546
      %v2009 = vpack.c.b16 %v1553, %v1550
      %v2010 = vpack.c.b16 %v1554, %v1551
      %v2011 = vpack.c.b16 %v1555, %v1552
      %v2012 = vpack.c.b16 %v1559, %v1556
      %v2013 = vpack.c.b16 %v1560, %v1557
      %v2014 = vpack.c.b16 %v1561, %v1558
      %v2015 = vpack.c.b16 %v1565, %v1562
      %v2016 = vpack.c.b16 %v1566, %v1563
      %v2017 = vpack.c.b16 %v1567, %v1564
      %v2018 = vpack.c.b16 %v1571, %v1568
      %v2019 = vpack.c.b16 %v1572, %v1569
      %v2020 = vpack.c.b16 %v1573, %v1570
      %v2021 = vpack.c.b16 %v1577, %v1574
      %v2022 = vpack.c.b16 %v1578, %v1575
      %v2023 = vpack.c.b16 %v1579, %v1576
      %v2024 = vpack.c.b16 %v1583, %v1580
      %v2025 = vpack.c.b16 %v1584, %v1581
      %v2026 = vpack.c.b16 %v1585, %v1582
      %v2027 = vpack.c.b16 %v1589, %v1586
      %v2028 = vpack.c.b16 %v1590, %v1587
      %v2029 = vpack.c.b16 %v1591, %v1588
      %v2030 = vpack.c.b16 %v1595, %v1592
      %v2031 = vpack.c.b16 %v1596, %v1593
      %v2032 = vpack.c.b16 %v1597, %v1594
      %v2033 = vpack.c.b16 %v1601, %v1598
      %v2034 = vpack.c.b16 %v1602, %v1599
      %v2035 = vpack.c.b16 %v1603, %v1600
      %v2036 = vpack.c.b16 %v1607, %v1604
      %v2037 = vpack.c.b16 %v1608, %v1605
      %v2038 = vpack.c.b16 %v1609, %v1606
      %v2039 = vpack.c.b16 %v1613, %v1610
      %v2040 = vpack.c.b16 %v1614, %v1611
      %v2041 = vpack.c.b16 %v1615, %v1612
      %v2042 = vpack.c.b16 %v1619, %v1616
      %v2043 = vpack.c.b16 %v1620, %v1617
      %v2044 = vpack.c.b16 %v1621, %v1618
      %v2045 = vpack.c.b16 %v1625, %v1622
      %v2046 = vpack.c.b16 %v1626, %v1623
      %v2047 = vpack.c.b16 %v1627, %v1624
      %v2048 = vpack.c.b16 %v1631, %v1628
      %v2049 = vpack.c.b16 %v1632, %v1629
      %v2050 = vpack.c.b16 %v1633, %v1630
      %v2051 = vpack.c.b16 %v1637, %v1634
      %v2052 = vpack.c.b16 %v1638, %v1635
      %v2053 = vpack.c.b16 %v1639, %v1636
      %v2054 = vpack.c.b16 %v1643, %v1640
      %v2055 = vpack.c.b16 %v1644, %v1641
      %v2056 = vpack.c.b16 %v1645, %v1642
      %v2057 = vpack.c.b16 %v1649, %v1646
      %v2058 = vpack.c.b16 %v1650, %v1647
      %v2059 = vpack.c.b16 %v1651, %v1648
      %v2060 = vpack.c.b16 %v1655, %v1652
      %v2061 = vpack.c.b16 %v1656, %v1653
      %v2062 = vpack.c.b16 %v1657, %v1654
      %v2063 = vpack.c.b16 %v1661, %v1658
      %v2064 = vpack.c.b16 %v1662, %v1659
      %v2065 = vpack.c.b16 %v1663, %v1660
      %v2066 = vpack.c.b16 %v1667, %v1664
      %v2067 = vpack.c.b16 %v1668, %v1665
      %v2068 = vpack.c.b16 %v1669, %v1666
      %v2069 = vpack.c.b16 %v1673, %v1670
      %v2070 = vpack.c.b16 %v1674, %v1671
      %v2071 = vpack.c.b16 %v1675, %v1672
      %v2072 = vpack.c.b16 %v1679, %v1676
      %v2073 = vpack.c.b16 %v1680, %v1677
      %v2074 = vpack.c.b16 %v1681, %v1678
      %v2075 = vpack.c.b16 %v1685, %v1682
      %v2076 = vpack.c.b16 %v1686, %v1683
      %v2077 = vpack.c.b16 %v1687, %v1684
      %v2078 = vpack.c.b16 %v1691, %v1688
      %v2079 = vpack.c.b16 %v1692, %v1689
      %v2080 = vpack.c.b16 %v1693, %v1690
      %v2081 = vpack.c.b16 %v1697, %v1694
      %v2082 = vpack.c.b16 %v1698, %v1695
      %v2083 = vpack.c.b16 %v1699, %v1696
      %v2084 = vpack.c.b16 %v1703, %v1700
      %v2085 = vpack.c.b16 %v1704, %v1701
      %v2086 = vpack.c.b16 %v1705, %v1702
      %v2087 = vpack.c.b16 %v1709, %v1706
      %v2088 = vpack.c.b16 %v1710, %v1707
      %v2089 = vpack.c.b16 %v1711, %v1708
      %v2090 = vpack.c.b16 %v1715, %v1712
      %v2091 = vpack.c.b16 %v1716, %v1713
      %v2092 = vpack.c.b16 %v1717, %v1714
      %v2093 = vpack.c.b16 %v1721, %v1718
      %v2094 = vpack.c.b16 %v1722, %v1719
      %v2095 = vpack.c.b16 %v1723, %v1720
      %v2096 = vpack.c.b16 %v1727, %v1724
      %v2097 = vpack.c.b16 %v1728, %v1725
      %v2098 = vpack.c.b16 %v1729, %v1726
      %v2099 = vpack.c.b16 %v1733, %v1730
      %v2100 = vpack.c.b16 %v1734, %v1731
      %v2101 = vpack.c.b16 %v1735, %v1732
      %v2102 = vpack.c.b16 %v1739, %v1736
      %v2103 = vpack.c.b16 %v1740, %v1737
      %v2104 = vpack.c.b16 %v1741, %v1738
      %v2105 = vpack.c.b16 %v1745, %v1742
      %v2106 = vpack.c.b16 %v1746, %v1743
      %v2107 = vpack.c.b16 %v1747, %v1744
      %v2108 = vpack.c.b16 %v1751, %v1748
      %v2109 = vpack.c.b16 %v1752, %v1749
      %v2110 = vpack.c.b16 %v1753, %v1750
      %v2111 = vpack.c.b16 %v1757, %v1754
      %v2112 = vpack.c.b16 %v1758, %v1755
      %v2113 = vpack.c.b16 %v1759, %v1756
      %v2114 = vpack.c.b16 %v1763, %v1760
      %v2115 = vpack.c.b16 %v1764, %v1761
      %v2116 = vpack.c.b16 %v1765, %v1762
      %v2117 = vpack.c.b16 %v1769, %v1766
      %v2118 = vpack.c.b16 %v1770, %v1767
      %v2119 = vpack.c.b16 %v1771, %v1768
      %v2120 = vpack.c.b16 %v1775, %v1772
      %v2121 = vpack.c.b16 %v1776, %v1773
      %v2122 = vpack.c.b16 %v1777, %v1774
      %v2123 = vpack.c.b16 %v1781, %v1778
      %v2124 = vpack.c.b16 %v1782, %v1779
      %v2125 = vpack.c.b16 %v1783, %v1780
      %v2126 = vpack.c.b16 %v1787, %v1784
      %v2127 = vpack.c.b16 %v1788, %v1785
      %v2128 = vpack.c.b16 %v1789, %v1786
      %v2129 = vpack.c.b16 %v1793, %v1790
      %v2130 = vpack.c.b16 %v1794, %v1791
      %v2131 = vpack.c.b16 %v1795, %v1792
      %v2132 = vpack.c.b16 %v1799, %v1796
      %v2133 = vpack.c.b16 %v1800, %v1797
      %v2134 = vpack.c.b16 %v1801, %v1798
      %v2135 = vpack.c.b16 %v1805, %v1802
      %v2136 = vpack.c.b16 %v1806, %v1803
      %v2137 = vpack.c.b16 %v1807, %v1804
      %v2138 = vpack.c.b16 %v1811, %v1808
      %v2139 = vpack.c.b16 %v1812, %v1809
      %v2140 = vpack.c.b16 %v1813, %v1810
      %v2141 = vpack.c.b16 %v1817, %v1814
      %v2142 = vpack.c.b16 %v1818, %v1815
      %v2143 = vpack.c.b16 %v1819, %v1816
      %v2144 = vpack.c.b16 %v1823, %v1820
      %v2145 = vpack.c.b16 %v1824, %v1821
      %v2146 = vpack.c.b16 %v1825, %v1822
      %v2147 = vpack.c.b16 %v1829, %v1826
      %v2148 = vpack.c.b16 %v1830, %v1827
      %v2149 = vpack.c.b16 %v1831, %v1828
      %v2150 = vpack.c.b16 %v1835, %v1832
      %v2151 = vpack.c.b16 %v1836, %v1833
      %v2152 = vpack.c.b16 %v1837, %v1834
      %v2153 = vpack.c.b16 %v1841, %v1838
      %v2154 = vpack.c.b16 %v1842, %v1839
      %v2155 = vpack.c.b16 %v1843, %v1840
      %v2156 = vpack.c.b16 %v1847, %v1844
      %v2157 = vpack.c.b16 %v1848, %v1845
      %v2158 = vpack.c.b16 %v1849, %v1846
      %v2159 = vpack.c.b16 %v1853, %v1850
      %v2160 = vpack.c.b16 %v1854, %v1851
      %v2161 = vpack.c.b16 %v1855, %v1852
      %v2162 = vpack.c.b16 %v1859, %v1856
      %v2163 = vpack.c.b16 %v1860, %v1857
      %v2164 = vpack.c.b16 %v1861, %v1858
      %v2165 = vpack.c.b16 %v1865, %v1862
      %v2166 = vpack.c.b16 %v1866, %v1863
      %v2167 = vpack.c.b16 %v1867, %v1864
      %v2168 = vpack.c.b16 %v1871, %v1868
      %v2169 = vpack.c.b16 %v1872, %v1869
      %v2170 = vpack.c.b16 %v1873, %v1870
      %v2171 = vpack.c.b16 %v1877, %v1874
      %v2172 = vpack.c.b16 %v1878, %v1875
      %v2173 = vpack.c.b16 %v1879, %v1876
      %v2174 = vpack.c.b16 %v1883, %v1880
      %v2175 = vpack.c.b16 %v1884, %v1881
      %v2176 = vpack.c.b16 %v1885, %v1882
      %v2177 = vpack.c.b16 %v1889, %v1886
      %v2178 = vpack.c.b16 %v1890, %v1887
      %v2179 = vpack.c.b16 %v1891, %v1888
      %2468 = vmatprep.subr.bf16.mxu0 %v1914
      %2469 = vmatpush1.bf16.msra.mxu0 %v1913
      %2470 = vmatprep.subr.bf16.mxu0 %v1911
      %2471 = vmatpush1.bf16.msra.mxu0 %v1910
      %2472 = vmatprep.subr.bf16.mxu0 %v1908
      %2473 = vmatpush1.bf16.msra.mxu0 %v1907
      %2474 = vmatprep.subr.bf16.mxu0 %v1905
      %2475 = vmatpush1.bf16.msra.mxu0 %v1904
      %2476 = vmatprep.subr.bf16.mxu0 %v1902
      %2477 = vmatpush1.bf16.msra.mxu0 %v1901
      %2478 = vmatprep.subr.bf16.mxu0 %v1899
      %2479 = vmatpush1.bf16.msra.mxu0 %v1898
      %2480 = vmatprep.subr.bf16.mxu0 %v1896
      %2481 = vmatpush1.bf16.msra.mxu0 %v1895
      %2482 = vmatprep.subr.bf16.mxu0 %v1893
      %2483 = vmatpush1.bf16.msra.mxu0 %v1892
      %2484 = vmatprep.subr.bf16.mxu0 %v1938
      %2485 = vmatpush2.bf16.msra.mxu0 %v1937
      %2486 = vmatprep.subr.bf16.mxu0 %v1935
      %2487 = vmatpush2.bf16.msra.mxu0 %v1934
      %2488 = vmatprep.subr.bf16.mxu0 %v1932
      %2489 = vmatpush2.bf16.msra.mxu0 %v1931
      %2490 = vmatprep.subr.bf16.mxu0 %v1929
      %2491 = vmatpush2.bf16.msra.mxu0 %v1928
      %2492 = vmatprep.subr.bf16.mxu0 %v1926
      %2493 = vmatpush2.bf16.msra.mxu0 %v1925
      %2494 = vmatprep.subr.bf16.mxu0 %v1923
      %2495 = vmatpush2.bf16.msra.mxu0 %v1922
      %2496 = vmatprep.subr.bf16.mxu0 %v1920
      %2497 = vmatpush2.bf16.msra.mxu0 %v1919
      %2498 = vmatprep.subr.bf16.mxu0 %v1917
      %2499 = vmatpush2.bf16.msra.mxu0 %v1916
      %2500 = vmatprep.mubr.bf16.mxu0 %v424
      %2501 = vmatmul.mubr.bf16.gmra.mxu0 %v423
      %v2502 = vpop.f32.mrf.mxu0
      %v2503 = vadd.f32 %v920, %v2502
      %v2504 = vpop.f32.mrf.mxu0
      %v2505 = vadd.f32 %v924, %v2504
      %v2506 = vpop.f32.mrf.mxu0
      %v2507 = vadd.f32 %v920, %v2506
      %v2508 = vpop.f32.mrf.mxu0
      %v2509 = vadd.f32 %v924, %v2508
      %2510 = vdwg.mxu0
      %2511 = vmatprep.subr.bf16.mxu0 %v1962
      %2512 = vmatpush1.bf16.msra.mxu0 %v1961
      %2513 = vmatprep.subr.bf16.mxu0 %v1959
      %2514 = vmatpush1.bf16.msra.mxu0 %v1958
      %2515 = vmatprep.subr.bf16.mxu0 %v1956
      %2516 = vmatpush1.bf16.msra.mxu0 %v1955
      %2517 = vmatprep.subr.bf16.mxu0 %v1953
      %2518 = vmatpush1.bf16.msra.mxu0 %v1952
      %2519 = vmatprep.subr.bf16.mxu0 %v1950
      %2520 = vmatpush1.bf16.msra.mxu0 %v1949
      %2521 = vmatprep.subr.bf16.mxu0 %v1947
      %2522 = vmatpush1.bf16.msra.mxu0 %v1946
      %2523 = vmatprep.subr.bf16.mxu0 %v1944
      %2524 = vmatpush1.bf16.msra.mxu0 %v1943
      %2525 = vmatprep.subr.bf16.mxu0 %v1941
      %2526 = vmatpush1.bf16.msra.mxu0 %v1940
      %2527 = vmatprep.subr.bf16.mxu0 %v1986
      %2528 = vmatpush2.bf16.msra.mxu0 %v1985
      %2529 = vmatprep.subr.bf16.mxu0 %v1983
      %2530 = vmatpush2.bf16.msra.mxu0 %v1982
      %2531 = vmatprep.subr.bf16.mxu0 %v1980
      %2532 = vmatpush2.bf16.msra.mxu0 %v1979
      %2533 = vmatprep.subr.bf16.mxu0 %v1977
      %2534 = vmatpush2.bf16.msra.mxu0 %v1976
      %2535 = vmatprep.subr.bf16.mxu0 %v1974
      %2536 = vmatpush2.bf16.msra.mxu0 %v1973
      %2537 = vmatprep.subr.bf16.mxu0 %v1971
      %2538 = vmatpush2.bf16.msra.mxu0 %v1970
      %2539 = vmatprep.subr.bf16.mxu0 %v1968
      %2540 = vmatpush2.bf16.msra.mxu0 %v1967
      %2541 = vmatprep.subr.bf16.mxu0 %v1965
      %2542 = vmatpush2.bf16.msra.mxu0 %v1964
      %2543 = vmatprep.mubr.bf16.mxu0 %v456
      %2544 = vmatmul.mubr.bf16.gmra.mxu0 %v444
      %v2545 = vpop.f32.mrf.mxu0
      %v2546 = vadd.f32 %v2503, %v2545
      %v2547 = vpop.f32.mrf.mxu0
      %v2548 = vadd.f32 %v2505, %v2547
      %v2549 = vpop.f32.mrf.mxu0
      %v2550 = vadd.f32 %v2507, %v2549
      %v2551 = vpop.f32.mrf.mxu0
      %v2552 = vadd.f32 %v2509, %v2551
      %2553 = vdwg.mxu0
      %2554 = vmatprep.subr.bf16.mxu0 %v2010
      %2555 = vmatpush1.bf16.msra.mxu0 %v2009
      %2556 = vmatprep.subr.bf16.mxu0 %v2007
      %2557 = vmatpush1.bf16.msra.mxu0 %v2006
      %2558 = vmatprep.subr.bf16.mxu0 %v2004
      %2559 = vmatpush1.bf16.msra.mxu0 %v2003
      %2560 = vmatprep.subr.bf16.mxu0 %v2001
      %2561 = vmatpush1.bf16.msra.mxu0 %v2000
      %2562 = vmatprep.subr.bf16.mxu0 %v1998
      %2563 = vmatpush1.bf16.msra.mxu0 %v1997
      %2564 = vmatprep.subr.bf16.mxu0 %v1995
      %2565 = vmatpush1.bf16.msra.mxu0 %v1994
      %2566 = vmatprep.subr.bf16.mxu0 %v1992
      %2567 = vmatpush1.bf16.msra.mxu0 %v1991
      %2568 = vmatprep.subr.bf16.mxu0 %v1989
      %2569 = vmatpush1.bf16.msra.mxu0 %v1988
      %2570 = vmatprep.subr.bf16.mxu0 %v2034
      %2571 = vmatpush2.bf16.msra.mxu0 %v2033
      %2572 = vmatprep.subr.bf16.mxu0 %v2031
      %2573 = vmatpush2.bf16.msra.mxu0 %v2030
      %2574 = vmatprep.subr.bf16.mxu0 %v2028
      %2575 = vmatpush2.bf16.msra.mxu0 %v2027
      %2576 = vmatprep.subr.bf16.mxu0 %v2025
      %2577 = vmatpush2.bf16.msra.mxu0 %v2024
      %2578 = vmatprep.subr.bf16.mxu0 %v2022
      %2579 = vmatpush2.bf16.msra.mxu0 %v2021
      %2580 = vmatprep.subr.bf16.mxu0 %v2019
      %2581 = vmatpush2.bf16.msra.mxu0 %v2018
      %2582 = vmatprep.subr.bf16.mxu0 %v2016
      %2583 = vmatpush2.bf16.msra.mxu0 %v2015
      %2584 = vmatprep.subr.bf16.mxu0 %v2013
      %2585 = vmatpush2.bf16.msra.mxu0 %v2012
      %2586 = vmatprep.mubr.bf16.mxu0 %v470
      %2587 = vmatmul.mubr.bf16.gmra.mxu0 %v467
      %v2588 = vpop.f32.mrf.mxu0
      %v2589 = vadd.f32 %v2546, %v2588
      %v2590 = vpop.f32.mrf.mxu0
      %v2591 = vadd.f32 %v2548, %v2590
      %v2592 = vpop.f32.mrf.mxu0
      %v2593 = vadd.f32 %v2550, %v2592
      %v2594 = vpop.f32.mrf.mxu0
      %v2595 = vadd.f32 %v2552, %v2594
      %2596 = vdwg.mxu0
      %2597 = vmatprep.subr.bf16.mxu0 %v2058
      %2598 = vmatpush1.bf16.msra.mxu0 %v2057
      %2599 = vmatprep.subr.bf16.mxu0 %v2055
      %2600 = vmatpush1.bf16.msra.mxu0 %v2054
      %2601 = vmatprep.subr.bf16.mxu0 %v2052
      %2602 = vmatpush1.bf16.msra.mxu0 %v2051
      %2603 = vmatprep.subr.bf16.mxu0 %v2049
      %2604 = vmatpush1.bf16.msra.mxu0 %v2048
      %2605 = vmatprep.subr.bf16.mxu0 %v2046
      %2606 = vmatpush1.bf16.msra.mxu0 %v2045
      %2607 = vmatprep.subr.bf16.mxu0 %v2043
      %2608 = vmatpush1.bf16.msra.mxu0 %v2042
      %2609 = vmatprep.subr.bf16.mxu0 %v2040
      %2610 = vmatpush1.bf16.msra.mxu0 %v2039
      %2611 = vmatprep.subr.bf16.mxu0 %v2037
      %2612 = vmatpush1.bf16.msra.mxu0 %v2036
      %2613 = vmatprep.subr.bf16.mxu0 %v2082
      %2614 = vmatpush2.bf16.msra.mxu0 %v2081
      %2615 = vmatprep.subr.bf16.mxu0 %v2079
      %2616 = vmatpush2.bf16.msra.mxu0 %v2078
      %2617 = vmatprep.subr.bf16.mxu0 %v2076
      %2618 = vmatpush2.bf16.msra.mxu0 %v2075
      %2619 = vmatprep.subr.bf16.mxu0 %v2073
      %2620 = vmatpush2.bf16.msra.mxu0 %v2072
      %2621 = vmatprep.subr.bf16.mxu0 %v2070
      %2622 = vmatpush2.bf16.msra.mxu0 %v2069
      %2623 = vmatprep.subr.bf16.mxu0 %v2067
      %2624 = vmatpush2.bf16.msra.mxu0 %v2066
      %2625 = vmatprep.subr.bf16.mxu0 %v2064
      %2626 = vmatpush2.bf16.msra.mxu0 %v2063
      %2627 = vmatprep.subr.bf16.mxu0 %v2061
      %2628 = vmatpush2.bf16.msra.mxu0 %v2060
      %2629 = vmatprep.mubr.bf16.mxu0 %v484
      %2630 = vmatmul.mubr.bf16.gmra.mxu0 %v483
      %v2631 = vpop.f32.mrf.mxu0
      %v2632 = vadd.f32 %v2589, %v2631
      %v2633 = vpop.f32.mrf.mxu0
      %v2634 = vadd.f32 %v2591, %v2633
      %v2635 = vpop.f32.mrf.mxu0
      %v2636 = vadd.f32 %v2593, %v2635
      %v2637 = vpop.f32.mrf.mxu0
      %v2638 = vadd.f32 %v2595, %v2637
      %2639 = vdwg.mxu0
      %2640 = vmatprep.subr.bf16.mxu0 %v2106
      %2641 = vmatpush1.bf16.msra.mxu0 %v2105
      %2642 = vmatprep.subr.bf16.mxu0 %v2103
      %2643 = vmatpush1.bf16.msra.mxu0 %v2102
      %2644 = vmatprep.subr.bf16.mxu0 %v2100
      %2645 = vmatpush1.bf16.msra.mxu0 %v2099
      %2646 = vmatprep.subr.bf16.mxu0 %v2097
      %2647 = vmatpush1.bf16.msra.mxu0 %v2096
      %2648 = vmatprep.subr.bf16.mxu0 %v2094
      %2649 = vmatpush1.bf16.msra.mxu0 %v2093
      %2650 = vmatprep.subr.bf16.mxu0 %v2091
      %2651 = vmatpush1.bf16.msra.mxu0 %v2090
      %2652 = vmatprep.subr.bf16.mxu0 %v2088
      %2653 = vmatpush1.bf16.msra.mxu0 %v2087
      %2654 = vmatprep.subr.bf16.mxu0 %v2085
      %2655 = vmatpush1.bf16.msra.mxu0 %v2084
      %2656 = vmatprep.subr.bf16.mxu0 %v2130
      %2657 = vmatpush2.bf16.msra.mxu0 %v2129
      %2658 = vmatprep.subr.bf16.mxu0 %v2127
      %2659 = vmatpush2.bf16.msra.mxu0 %v2126
      %2660 = vmatprep.subr.bf16.mxu0 %v2124
      %2661 = vmatpush2.bf16.msra.mxu0 %v2123
      %2662 = vmatprep.subr.bf16.mxu0 %v2121
      %2663 = vmatpush2.bf16.msra.mxu0 %v2120
      %2664 = vmatprep.subr.bf16.mxu0 %v2118
      %2665 = vmatpush2.bf16.msra.mxu0 %v2117
      %2666 = vmatprep.subr.bf16.mxu0 %v2115
      %2667 = vmatpush2.bf16.msra.mxu0 %v2114
      %2668 = vmatprep.subr.bf16.mxu0 %v2112
      %2669 = vmatpush2.bf16.msra.mxu0 %v2111
      %2670 = vmatprep.subr.bf16.mxu0 %v2109
      %2671 = vmatpush2.bf16.msra.mxu0 %v2108
      %2672 = vmatprep.mubr.bf16.mxu0 %v515
      %2673 = vmatmul.mubr.bf16.gmra.mxu0 %v503
      %v2674 = vpop.f32.mrf.mxu0
      %v2675 = vadd.f32 %v2632, %v2674
      %v2676 = vpop.f32.mrf.mxu0
      %v2677 = vadd.f32 %v2634, %v2676
      %v2678 = vpop.f32.mrf.mxu0
      %v2679 = vadd.f32 %v2636, %v2678
      %v2680 = vpop.f32.mrf.mxu0
      %v2681 = vadd.f32 %v2638, %v2680
      %2682 = vdwg.mxu0
      %2683 = vmatprep.subr.bf16.mxu0 %v2154
      %2684 = vmatpush1.bf16.msra.mxu0 %v2153
      %2685 = vmatprep.subr.bf16.mxu0 %v2151
      %2686 = vmatpush1.bf16.msra.mxu0 %v2150
      %2687 = vmatprep.subr.bf16.mxu0 %v2148
      %2688 = vmatpush1.bf16.msra.mxu0 %v2147
      %2689 = vmatprep.subr.bf16.mxu0 %v2145
      %2690 = vmatpush1.bf16.msra.mxu0 %v2144
      %2691 = vmatprep.subr.bf16.mxu0 %v2142
      %2692 = vmatpush1.bf16.msra.mxu0 %v2141
      %2693 = vmatprep.subr.bf16.mxu0 %v2139
      %2694 = vmatpush1.bf16.msra.mxu0 %v2138
      %2695 = vmatprep.subr.bf16.mxu0 %v2136
      %2696 = vmatpush1.bf16.msra.mxu0 %v2135
      %2697 = vmatprep.subr.bf16.mxu0 %v2133
      %2698 = vmatpush1.bf16.msra.mxu0 %v2132
      %2699 = vmatprep.subr.bf16.mxu0 %v2178
      %2700 = vmatpush2.bf16.msra.mxu0 %v2177
      %2701 = vmatprep.subr.bf16.mxu0 %v2175
      %2702 = vmatpush2.bf16.msra.mxu0 %v2174
      %2703 = vmatprep.subr.bf16.mxu0 %v2172
      %2704 = vmatpush2.bf16.msra.mxu0 %v2171
      %2705 = vmatprep.subr.bf16.mxu0 %v2169
      %2706 = vmatpush2.bf16.msra.mxu0 %v2168
      %2707 = vmatprep.subr.bf16.mxu0 %v2166
      %2708 = vmatpush2.bf16.msra.mxu0 %v2165
      %2709 = vmatprep.subr.bf16.mxu0 %v2163
      %2710 = vmatpush2.bf16.msra.mxu0 %v2162
      %2711 = vmatprep.subr.bf16.mxu0 %v2160
      %2712 = vmatpush2.bf16.msra.mxu0 %v2159
      %2713 = vmatprep.subr.bf16.mxu0 %v2157
      %2714 = vmatpush2.bf16.msra.mxu0 %v2156
      %2715 = vmatprep.mubr.bf16.mxu0 %v528
      %2716 = vmatmul.mubr.bf16.gmra.mxu0 %v525
      %v2717 = vpop.f32.mrf.mxu0
      %v2718 = vadd.f32 %v2675, %v2717
      %v2719 = vpop.f32.mrf.mxu0
      %v2720 = vadd.f32 %v2677, %v2719
      %v2721 = vpop.f32.mrf.mxu0
      %v2722 = vadd.f32 %v2679, %v2721
      %v2723 = vpop.f32.mrf.mxu0
      %v2724 = vadd.f32 %v2681, %v2723
      %2725 = vdwg.mxu0
      %2726 = vmatprep.subr.bf16.mxu0 0
      %2727 = vmatpush1.bf16.msra.mxu0 %v1915
      %2728 = vmatprep.subr.bf16.mxu0 0
      %2729 = vmatpush1.bf16.msra.mxu0 %v1912
      %2730 = vmatprep.subr.bf16.mxu0 0
      %2731 = vmatpush1.bf16.msra.mxu0 %v1909
      %2732 = vmatprep.subr.bf16.mxu0 0
      %2733 = vmatpush1.bf16.msra.mxu0 %v1906
      %2734 = vmatprep.subr.bf16.mxu0 0
      %2735 = vmatpush1.bf16.msra.mxu0 %v1903
      %2736 = vmatprep.subr.bf16.mxu0 0
      %2737 = vmatpush1.bf16.msra.mxu0 %v1900
      %2738 = vmatprep.subr.bf16.mxu0 0
      %2739 = vmatpush1.bf16.msra.mxu0 %v1897
      %2740 = vmatprep.subr.bf16.mxu0 0
      %2741 = vmatpush1.bf16.msra.mxu0 %v1894
      %2742 = vmatprep.subr.bf16.mxu0 0
      %2743 = vmatpush2.bf16.msra.mxu0 %v1939
      %2744 = vmatprep.subr.bf16.mxu0 0
      %2745 = vmatpush2.bf16.msra.mxu0 %v1936
      %2746 = vmatprep.subr.bf16.mxu0 0
      %2747 = vmatpush2.bf16.msra.mxu0 %v1933
      %2748 = vmatprep.subr.bf16.mxu0 0
      %2749 = vmatpush2.bf16.msra.mxu0 %v1930
      %2750 = vmatprep.subr.bf16.mxu0 0
      %2751 = vmatpush2.bf16.msra.mxu0 %v1927
      %2752 = vmatprep.subr.bf16.mxu0 0
      %2753 = vmatpush2.bf16.msra.mxu0 %v1924
      %2754 = vmatprep.subr.bf16.mxu0 0
      %2755 = vmatpush2.bf16.msra.mxu0 %v1921
      %2756 = vmatprep.subr.bf16.mxu0 0
      %2757 = vmatpush2.bf16.msra.mxu0 %v1918
      %2758 = vmatprep.mubr.bf16.mxu0 %v424
      %2759 = vmatmul.mubr.bf16.gmra.mxu0 %v423
      %v2760 = vpop.f32.mrf.mxu0
      %v2761 = vadd.f32 %v928, %v2760
      %v2762 = vpop.f32.mrf.mxu0
      %v2763 = vpop.f32.mrf.mxu0
      %v2764 = vadd.f32 %v928, %v2763
      %v2765 = vpop.f32.mrf.mxu0
      %2766 = vdwg.mxu0
      %2767 = vmatprep.subr.bf16.mxu0 0
      %2768 = vmatpush1.bf16.msra.mxu0 %v1963
      %2769 = vmatprep.subr.bf16.mxu0 0
      %2770 = vmatpush1.bf16.msra.mxu0 %v1960
      %2771 = vmatprep.subr.bf16.mxu0 0
      %2772 = vmatpush1.bf16.msra.mxu0 %v1957
      %2773 = vmatprep.subr.bf16.mxu0 0
      %2774 = vmatpush1.bf16.msra.mxu0 %v1954
      %2775 = vmatprep.subr.bf16.mxu0 0
      %2776 = vmatpush1.bf16.msra.mxu0 %v1951
      %2777 = vmatprep.subr.bf16.mxu0 0
      %2778 = vmatpush1.bf16.msra.mxu0 %v1948
      %2779 = vmatprep.subr.bf16.mxu0 0
      %2780 = vmatpush1.bf16.msra.mxu0 %v1945
      %2781 = vmatprep.subr.bf16.mxu0 0
      %2782 = vmatpush1.bf16.msra.mxu0 %v1942
      %2783 = vmatprep.subr.bf16.mxu0 0
      %2784 = vmatpush2.bf16.msra.mxu0 %v1987
      %2785 = vmatprep.subr.bf16.mxu0 0
      %2786 = vmatpush2.bf16.msra.mxu0 %v1984
      %2787 = vmatprep.subr.bf16.mxu0 0
      %2788 = vmatpush2.bf16.msra.mxu0 %v1981
      %2789 = vmatprep.subr.bf16.mxu0 0
      %2790 = vmatpush2.bf16.msra.mxu0 %v1978
      %2791 = vmatprep.subr.bf16.mxu0 0
      %2792 = vmatpush2.bf16.msra.mxu0 %v1975
      %2793 = vmatprep.subr.bf16.mxu0 0
      %2794 = vmatpush2.bf16.msra.mxu0 %v1972
      %2795 = vmatprep.subr.bf16.mxu0 0
      %2796 = vmatpush2.bf16.msra.mxu0 %v1969
      %2797 = vmatprep.subr.bf16.mxu0 0
      %2798 = vmatpush2.bf16.msra.mxu0 %v1966
      %2799 = vmatprep.mubr.bf16.mxu0 %v456
      %2800 = vmatmul.mubr.bf16.gmra.mxu0 %v444
      %v2801 = vpop.f32.mrf.mxu0
      %v2802 = vadd.f32 %v2761, %v2801
      %v2803 = vpop.f32.mrf.mxu0
      %v2804 = vpop.f32.mrf.mxu0
      %v2805 = vadd.f32 %v2764, %v2804
      %v2806 = vpop.f32.mrf.mxu0
      %2807 = vdwg.mxu0
      %2808 = vmatprep.subr.bf16.mxu0 0
      %2809 = vmatpush1.bf16.msra.mxu0 %v2011
      %2810 = vmatprep.subr.bf16.mxu0 0
      %2811 = vmatpush1.bf16.msra.mxu0 %v2008
      %2812 = vmatprep.subr.bf16.mxu0 0
      %2813 = vmatpush1.bf16.msra.mxu0 %v2005
      %2814 = vmatprep.subr.bf16.mxu0 0
      %2815 = vmatpush1.bf16.msra.mxu0 %v2002
      %2816 = vmatprep.subr.bf16.mxu0 0
      %2817 = vmatpush1.bf16.msra.mxu0 %v1999
      %2818 = vmatprep.subr.bf16.mxu0 0
      %2819 = vmatpush1.bf16.msra.mxu0 %v1996
      %2820 = vmatprep.subr.bf16.mxu0 0
      %2821 = vmatpush1.bf16.msra.mxu0 %v1993
      %2822 = vmatprep.subr.bf16.mxu0 0
      %2823 = vmatpush1.bf16.msra.mxu0 %v1990
      %2824 = vmatprep.subr.bf16.mxu0 0
      %2825 = vmatpush2.bf16.msra.mxu0 %v2035
      %2826 = vmatprep.subr.bf16.mxu0 0
      %2827 = vmatpush2.bf16.msra.mxu0 %v2032
      %2828 = vmatprep.subr.bf16.mxu0 0
      %2829 = vmatpush2.bf16.msra.mxu0 %v2029
      %2830 = vmatprep.subr.bf16.mxu0 0
      %2831 = vmatpush2.bf16.msra.mxu0 %v2026
      %2832 = vmatprep.subr.bf16.mxu0 0
      %2833 = vmatpush2.bf16.msra.mxu0 %v2023
      %2834 = vmatprep.subr.bf16.mxu0 0
      %2835 = vmatpush2.bf16.msra.mxu0 %v2020
      %2836 = vmatprep.subr.bf16.mxu0 0
      %2837 = vmatpush2.bf16.msra.mxu0 %v2017
      %2838 = vmatprep.subr.bf16.mxu0 0
      %2839 = vmatpush2.bf16.msra.mxu0 %v2014
      %2840 = vmatprep.mubr.bf16.mxu0 %v470
      %2841 = vmatmul.mubr.bf16.gmra.mxu0 %v467
      %v2842 = vpop.f32.mrf.mxu0
      %v2843 = vadd.f32 %v2802, %v2842
      %v2844 = vpop.f32.mrf.mxu0
      %v2845 = vpop.f32.mrf.mxu0
      %v2846 = vadd.f32 %v2805, %v2845
      %v2847 = vpop.f32.mrf.mxu0
      %2848 = vdwg.mxu0
      %2849 = vmatprep.subr.bf16.mxu0 0
      %2850 = vmatpush1.bf16.msra.mxu0 %v2059
      %2851 = vmatprep.subr.bf16.mxu0 0
      %2852 = vmatpush1.bf16.msra.mxu0 %v2056
      %2853 = vmatprep.subr.bf16.mxu0 0
      %2854 = vmatpush1.bf16.msra.mxu0 %v2053
      %2855 = vmatprep.subr.bf16.mxu0 0
      %2856 = vmatpush1.bf16.msra.mxu0 %v2050
      %2857 = vmatprep.subr.bf16.mxu0 0
      %2858 = vmatpush1.bf16.msra.mxu0 %v2047
      %2859 = vmatprep.subr.bf16.mxu0 0
      %2860 = vmatpush1.bf16.msra.mxu0 %v2044
      %2861 = vmatprep.subr.bf16.mxu0 0
      %2862 = vmatpush1.bf16.msra.mxu0 %v2041
      %2863 = vmatprep.subr.bf16.mxu0 0
      %2864 = vmatpush1.bf16.msra.mxu0 %v2038
      %2865 = vmatprep.subr.bf16.mxu0 0
      %2866 = vmatpush2.bf16.msra.mxu0 %v2083
      %2867 = vmatprep.subr.bf16.mxu0 0
      %2868 = vmatpush2.bf16.msra.mxu0 %v2080
      %2869 = vmatprep.subr.bf16.mxu0 0
      %2870 = vmatpush2.bf16.msra.mxu0 %v2077
      %2871 = vmatprep.subr.bf16.mxu0 0
      %2872 = vmatpush2.bf16.msra.mxu0 %v2074
      %2873 = vmatprep.subr.bf16.mxu0 0
      %2874 = vmatpush2.bf16.msra.mxu0 %v2071
      %2875 = vmatprep.subr.bf16.mxu0 0
      %2876 = vmatpush2.bf16.msra.mxu0 %v2068
      %2877 = vmatprep.subr.bf16.mxu0 0
      %2878 = vmatpush2.bf16.msra.mxu0 %v2065
      %2879 = vmatprep.subr.bf16.mxu0 0
      %2880 = vmatpush2.bf16.msra.mxu0 %v2062
      %2881 = vmatprep.mubr.bf16.mxu0 %v484
      %2882 = vmatmul.mubr.bf16.gmra.mxu0 %v483
      %v2883 = vpop.f32.mrf.mxu0
      %v2884 = vadd.f32 %v2843, %v2883
      %v2885 = vpop.f32.mrf.mxu0
      %v2886 = vpop.f32.mrf.mxu0
      %v2887 = vadd.f32 %v2846, %v2886
      %v2888 = vpop.f32.mrf.mxu0
      %2889 = vdwg.mxu0
      %2890 = vmatprep.subr.bf16.mxu0 0
      %2891 = vmatpush1.bf16.msra.mxu0 %v2107
      %2892 = vmatprep.subr.bf16.mxu0 0
      %2893 = vmatpush1.bf16.msra.mxu0 %v2104
      %2894 = vmatprep.subr.bf16.mxu0 0
      %2895 = vmatpush1.bf16.msra.mxu0 %v2101
      %2896 = vmatprep.subr.bf16.mxu0 0
      %2897 = vmatpush1.bf16.msra.mxu0 %v2098
      %2898 = vmatprep.subr.bf16.mxu0 0
      %2899 = vmatpush1.bf16.msra.mxu0 %v2095
      %2900 = vmatprep.subr.bf16.mxu0 0
      %2901 = vmatpush1.bf16.msra.mxu0 %v2092
      %2902 = vmatprep.subr.bf16.mxu0 0
      %2903 = vmatpush1.bf16.msra.mxu0 %v2089
      %2904 = vmatprep.subr.bf16.mxu0 0
      %2905 = vmatpush1.bf16.msra.mxu0 %v2086
      %2906 = vmatprep.subr.bf16.mxu0 0
      %2907 = vmatpush2.bf16.msra.mxu0 %v2131
      %2908 = vmatprep.subr.bf16.mxu0 0
      %2909 = vmatpush2.bf16.msra.mxu0 %v2128
      %2910 = vmatprep.subr.bf16.mxu0 0
      %2911 = vmatpush2.bf16.msra.mxu0 %v2125
      %2912 = vmatprep.subr.bf16.mxu0 0
      %2913 = vmatpush2.bf16.msra.mxu0 %v2122
      %2914 = vmatprep.subr.bf16.mxu0 0
      %2915 = vmatpush2.bf16.msra.mxu0 %v2119
      %2916 = vmatprep.subr.bf16.mxu0 0
      %2917 = vmatpush2.bf16.msra.mxu0 %v2116
      %2918 = vmatprep.subr.bf16.mxu0 0
      %2919 = vmatpush2.bf16.msra.mxu0 %v2113
      %2920 = vmatprep.subr.bf16.mxu0 0
      %2921 = vmatpush2.bf16.msra.mxu0 %v2110
      %2922 = vmatprep.mubr.bf16.mxu0 %v515
      %2923 = vmatmul.mubr.bf16.gmra.mxu0 %v503
      %v2924 = vpop.f32.mrf.mxu0
      %v2925 = vadd.f32 %v2884, %v2924
      %v2926 = vpop.f32.mrf.mxu0
      %v2927 = vpop.f32.mrf.mxu0
      %v2928 = vadd.f32 %v2887, %v2927
      %v2929 = vpop.f32.mrf.mxu0
      %2930 = vdwg.mxu0
      %2931 = vmatprep.subr.bf16.mxu0 0
      %2932 = vmatpush1.bf16.msra.mxu0 %v2155
      %2933 = vmatprep.subr.bf16.mxu0 0
      %2934 = vmatpush1.bf16.msra.mxu0 %v2152
      %2935 = vmatprep.subr.bf16.mxu0 0
      %2936 = vmatpush1.bf16.msra.mxu0 %v2149
      %2937 = vmatprep.subr.bf16.mxu0 0
      %2938 = vmatpush1.bf16.msra.mxu0 %v2146
      %2939 = vmatprep.subr.bf16.mxu0 0
      %2940 = vmatpush1.bf16.msra.mxu0 %v2143
      %2941 = vmatprep.subr.bf16.mxu0 0
      %2942 = vmatpush1.bf16.msra.mxu0 %v2140
      %2943 = vmatprep.subr.bf16.mxu0 0
      %2944 = vmatpush1.bf16.msra.mxu0 %v2137
      %2945 = vmatprep.subr.bf16.mxu0 0
      %2946 = vmatpush1.bf16.msra.mxu0 %v2134
      %2947 = vmatprep.subr.bf16.mxu0 0
      %2948 = vmatpush2.bf16.msra.mxu0 %v2179
      %2949 = vmatprep.subr.bf16.mxu0 0
      %2950 = vmatpush2.bf16.msra.mxu0 %v2176
      %2951 = vmatprep.subr.bf16.mxu0 0
      %2952 = vmatpush2.bf16.msra.mxu0 %v2173
      %2953 = vmatprep.subr.bf16.mxu0 0
      %2954 = vmatpush2.bf16.msra.mxu0 %v2170
      %2955 = vmatprep.subr.bf16.mxu0 0
      %2956 = vmatpush2.bf16.msra.mxu0 %v2167
      %2957 = vmatprep.subr.bf16.mxu0 0
      %2958 = vmatpush2.bf16.msra.mxu0 %v2164
      %2959 = vmatprep.subr.bf16.mxu0 0
      %2960 = vmatpush2.bf16.msra.mxu0 %v2161
      %2961 = vmatprep.subr.bf16.mxu0 0
      %2962 = vmatpush2.bf16.msra.mxu0 %v2158
      %2963 = vmatprep.mubr.bf16.mxu0 %v528
      %2964 = vmatmul.mubr.bf16.gmra.mxu0 %v525
      %v2965 = vpop.f32.mrf.mxu0
      %v2966 = vadd.f32 %v2925, %v2965
      %v2967 = vpop.f32.mrf.mxu0
      %v2968 = vpop.f32.mrf.mxu0
      %v2969 = vadd.f32 %v2928, %v2968
      %v2970 = vpop.f32.mrf.mxu0
      %2971 = vdwg.mxu0
      %v2972 = vld [vmem:[%s239] sm:$0xff]
      %v2973 = vld [vmem:[%s239 + $0x8] sm:$0xff]
      %v2974 = vxor.u32 %v2718, 2147483648
      %v2975 = vxor.u32 %v2722, 2147483648
      %v2976 = vmul.f32 %v2974, 1.442695
      %v2977 = vpow.pop %v2976
      %v2978 = vmul.f32 %v2975, 1.442695
      %v2979 = vpow.pop %v2978
      %v2980 = vadd.f32 %v2977, 1.0
      %v2981 = vadd.f32 %v2979, 1.0
      %v2982 = vrcp.pop %v2980
      %v2983 = vmul.f32 1.0, %v2982
      %v2984 = vrcp.pop %v2981
      %v2985 = vmul.f32 1.0, %v2984
      %v2986 = vxor.u32 %v2720, 2147483648
      %v2987 = vxor.u32 %v2724, 2147483648
      %v2988 = vmul.f32 %v2986, 1.442695
      %v2989 = vpow.pop %v2988
      %v2990 = vmul.f32 %v2987, 1.442695
      %v2991 = vpow.pop %v2990
      %v2992 = vadd.f32 %v2989, 1.0
      %v2993 = vadd.f32 %v2991, 1.0
      %v2994 = vrcp.pop %v2992
      %v2995 = vmul.f32 1.0, %v2994
      %v2996 = vrcp.pop %v2993
      %v2997 = vmul.f32 1.0, %v2996
      %v2998 = vmul.f32 %v2983, %v2972
      %v2999 = vmul.f32 %v2985, %v2973
      %v3000 = vld [vmem:[#allocation4] sm:$0x11]
      %v3001 = vsel %vm254, 0, %v3000
      %3002 = vst [vmem:[#allocation4] sm:$0x11] %v3001
      %v3003 = vld [vmem:[#allocation4 + $0x10] sm:$0x11]
      %v3004 = vsel %vm262, 0, %v3003
      %3005 = vst [vmem:[#allocation4 + $0x10] sm:$0x11] %v3004
      %v3006 = vld [vmem:[#allocation4] sm:$0xf]
      %v3007 = vsel %vm267, 0, %v3006
      %3008 = vst [vmem:[#allocation4] sm:$0xf] %v3007
      %3009 = vst.msk [vmem:[#allocation4 + $0x8] sm:$0xf] %vm271, 0
      %v3010 = vld [vmem:[#allocation4 + $0x10] sm:$0x1]
      %v3011 = vsel %vm274, 0, %v3010
      %3012 = vst [vmem:[#allocation4 + $0x10] sm:$0x1] %v3011
      %v3013 = vld [vmem:[#allocation4 + $0x4] sm:$0xf]
      %v3014 = vsel %vm279, 0, %v3013
      %3015 = vst [vmem:[#allocation4 + $0x4] sm:$0xf] %v3014
      %3016 = vst.msk [vmem:[#allocation4 + $0xc] sm:$0xf] %vm283, 0
      %v3017 = vld [vmem:[#allocation4 + $0x14] sm:$0x1]
      %v3018 = vsel %vm286, 0, %v3017
      %3019 = vst [vmem:[#allocation4 + $0x14] sm:$0x1] %v3018
      %v3020 = vpack.c.bf16 %v2999, %v2998
      %v3022 = vunpack.c.l.b16 %v3020
      %v3023 = vunpack.c.h.b16 %v3020
      %v3024 = vpack.c.b16 %v3022, %v3022
      %v3025 = vpack.c.b16 %v3023, %v3023
      %v3027 = vshrl.u32 %v3024, 16
      %v3029 = vrot.slane %v3027, 7
      %v3030 = vshll.u32 %v3024, 16
      %v3032 = vor.u32 %v3029, %v3030
      %v3033 = vrot.slane %v3029, 4
      %v3035 = vshrl.u32 %v3025, 16
      %v3037 = vrot.slane %v3035, 7
      %v3038 = vshll.u32 %v3025, 16
      %v3040 = vor.u32 %v3037, %v3038
      %v3041 = vsel %vm297, %v3033, %v3040
      %v3042 = vrot.slane %v3037, 4
      %3043 = vrot.lane.b32.xlu0 %v3032, 8
      %v3044 = vpop.permute.xlu0 %3043
      %3045 = vrot.lane.b32.xlu0 %v3041, 8
      %v3046 = vpop.permute.xlu0 %3045
      %3047 = vrot.lane.b32.xlu0 %v3042, 8
      %v3048 = vpop.permute.xlu0 %3047
      %v3049 = vrot.slane %v3044, 4
      %v3050 = vrot.slane %v3046, 4
      %v3051 = vrot.slane %v3048, 4
      %v3052 = vsel %vm324, %v3049, %v3044
      %v3053 = vsel %vm324, %v3050, %v3046
      %v3054 = vsel %vm324, %v3051, %v3048
      %v3058 = vld [vmem:[#allocation4] sm:$0xff]
      %v3059 = vsel %vm333, %v3052, %v3058
      %3060 = vst [vmem:[#allocation4] sm:$0xff] %v3059
      %3061 = vst.msk [vmem:[#allocation4 + $0x8] sm:$0xff] %vm338, %v3053
      %v3062 = vld [vmem:[#allocation4 + $0x10] sm:$0x11]
      %v3063 = vsel %vm342, %v3054, %v3062
      %3064 = vst [vmem:[#allocation4 + $0x10] sm:$0x11] %v3063
      %v3065 = vld [vmem:[#allocation4] sm:$0xff]
      %v3066 = vld [vmem:[#allocation4 + $0x8] sm:$0xff]
      %v3067 = vld [vmem:[#allocation4 + $0x10] sm:$0x11]
      %v3068 = vld [vmem:[#allocation4] sm:$0xee]
      %v3071 = vunpack.c.l.b16 %v3065
      %v3072 = vunpack.c.h.b16 %v3065
      %v3073 = vunpack.c.l.b16 %v3066
      %v3074 = vunpack.c.h.b16 %v3066
      %v3075 = vpack.c.b16 %v3073, %v3071
      %v3076 = vpack.c.b16 %v3074, %v3072
      %v3080 = vunpack.c.l.b16 %v3067
      %v3081 = vunpack.c.h.b16 %v3067
      %v3082 = vpack.c.b16 %v3080, %v3080
      %v3083 = vpack.c.b16 %v3081, %v3081
      %v3085 = vshrl.u32 %v3075, 16
      %v3087 = vshll.u32 %v3075, 16
      %v3089 = vrot.slane %v3087, 1
      %v3090 = vor.u32 %v3085, %v3089
      %v3092 = vshll.u32 %v3082, 16
      %v3094 = vrot.slane %v3092, 1
      %v3095 = vsel %vm432, %v3090, %v3094
      %v3097 = vshrl.u32 %v3076, 16
      %v3099 = vshll.u32 %v3076, 16
      %v3101 = vrot.slane %v3099, 1
      %v3102 = vor.u32 %v3097, %v3101
      %v3104 = vshll.u32 %v3083, 16
      %v3106 = vrot.slane %v3104, 1
      %v3107 = vsel %vm432, %v3102, %v3106
      %v3111 = vunpack.c.l.b16 %v3068
      %v3112 = vunpack.c.h.b16 %v3068
      %v3113 = vpack.c.b16 %v3073, %v3111
      %v3114 = vpack.c.b16 %v3074, %v3112
      %v3115 = vrot.slane %v3113, 1
      %v3116 = vrot.slane %v3082, 1
      %v3117 = vsel %vm464, %v3115, %v3116
      %v3118 = vrot.slane %v3114, 1
      %v3119 = vrot.slane %v3083, 1
      %v3120 = vsel %vm464, %v3118, %v3119
      %v3123 = vld [vmem:[%s3] sm:$0xf]
      %v3124 = vld [vmem:[%s3 + $0x4] sm:$0xf]
      %v3125 = vld [vmem:[%s3 + $0x8] sm:$0xf]
      %v3126 = vld [vmem:[%s3 + $0xc] sm:$0xf]
      %v3127 = vld [vmem:[%s3 + $0x10] sm:$0xf]
      %v3128 = vld [vmem:[%s3 + $0x14] sm:$0xf]
      %v3129 = vld [vmem:[%s3 + $0x18] sm:$0xf]
      %v3130 = vld [vmem:[%s3 + $0x1c] sm:$0xf]
      %v3131 = vld [vmem:[%s3 + $0x20] sm:$0xf]
      %v3132 = vld [vmem:[%s3 + $0x24] sm:$0xf]
      %v3133 = vld [vmem:[%s3 + $0x28] sm:$0xf]
      %v3134 = vld [vmem:[%s3 + $0x2c] sm:$0xf]
      %v3135 = vld [vmem:[%s3 + $0x30] sm:$0xf]
      %v3136 = vld [vmem:[%s3 + $0x34] sm:$0xf]
      %v3137 = vld [vmem:[%s3 + $0x38] sm:$0xf]
      %v3138 = vld [vmem:[%s3 + $0x3c] sm:$0xf]
      %v3139 = vld [vmem:[%s3 + $0x40] sm:$0xf]
      %v3140 = vld [vmem:[%s3 + $0x44] sm:$0xf]
      %v3141 = vld [vmem:[%s3 + $0x48] sm:$0xf]
      %v3142 = vld [vmem:[%s3 + $0x4c] sm:$0xf]
      %v3143 = vld [vmem:[%s3 + $0x50] sm:$0xf]
      %v3144 = vld [vmem:[%s3 + $0x54] sm:$0xf]
      %v3145 = vld [vmem:[%s3 + $0x58] sm:$0xf]
      %v3146 = vld [vmem:[%s3 + $0x5c] sm:$0xf]
      %v3147 = vld [vmem:[%s3 + $0x60] sm:$0xf]
      %v3148 = vld [vmem:[%s3 + $0x64] sm:$0xf]
      %v3149 = vld [vmem:[%s3 + $0x68] sm:$0xf]
      %v3150 = vld [vmem:[%s3 + $0x6c] sm:$0xf]
      %v3151 = vld [vmem:[%s3 + $0x70] sm:$0xf]
      %v3152 = vld [vmem:[%s3 + $0x74] sm:$0xf]
      %v3153 = vld [vmem:[%s3 + $0x78] sm:$0xf]
      %v3154 = vld [vmem:[%s3 + $0x7c] sm:$0xf]
      %v3155 = vld [vmem:[%s3 + $0x80] sm:$0xf]
      %v3156 = vld [vmem:[%s3 + $0x84] sm:$0xf]
      %v3157 = vld [vmem:[%s3 + $0x88] sm:$0xf]
      %v3158 = vld [vmem:[%s3 + $0x8c] sm:$0xf]
      %v3159 = vld [vmem:[%s3 + $0x90] sm:$0xf]
      %v3160 = vld [vmem:[%s3 + $0x94] sm:$0xf]
      %v3161 = vld [vmem:[%s3 + $0x98] sm:$0xf]
      %v3162 = vld [vmem:[%s3 + $0x9c] sm:$0xf]
      %v3163 = vld [vmem:[%s3 + $0xa0] sm:$0xf]
      %v3164 = vld [vmem:[%s3 + $0xa4] sm:$0xf]
      %v3165 = vld [vmem:[%s3 + $0xa8] sm:$0xf]
      %v3166 = vld [vmem:[%s3 + $0xac] sm:$0xf]
      %v3167 = vld [vmem:[%s3 + $0xb0] sm:$0xf]
      %v3168 = vld [vmem:[%s3 + $0xb4] sm:$0xf]
      %v3169 = vld [vmem:[%s3 + $0xb8] sm:$0xf]
      %v3170 = vld [vmem:[%s3 + $0xbc] sm:$0xf]
      %v3171 = vld [vmem:[%s3 + $0xc0] sm:$0xf]
      %v3172 = vld [vmem:[%s3 + $0xc4] sm:$0xf]
      %v3173 = vld [vmem:[%s3 + $0xc8] sm:$0xf]
      %v3174 = vld [vmem:[%s3 + $0xcc] sm:$0xf]
      %v3175 = vld [vmem:[%s3 + $0xd0] sm:$0xf]
      %v3176 = vld [vmem:[%s3 + $0xd4] sm:$0xf]
      %v3177 = vld [vmem:[%s3 + $0xd8] sm:$0xf]
      %v3178 = vld [vmem:[%s3 + $0xdc] sm:$0xf]
      %v3179 = vld [vmem:[%s3 + $0xe0] sm:$0xf]
      %v3180 = vld [vmem:[%s3 + $0xe4] sm:$0xf]
      %v3181 = vld [vmem:[%s3 + $0xe8] sm:$0xf]
      %v3182 = vld [vmem:[%s3 + $0xec] sm:$0xf]
      %v3183 = vld [vmem:[%s3 + $0xf0] sm:$0xf]
      %v3184 = vld [vmem:[%s3 + $0xf4] sm:$0xf]
      %v3185 = vld [vmem:[%s3 + $0xf8] sm:$0xf]
      %v3186 = vld [vmem:[%s3 + $0xfc] sm:$0xf]
      %v3187 = vld [vmem:[%s3 + $0x100] sm:$0xf]
      %v3188 = vld [vmem:[%s3 + $0x104] sm:$0xf]
      %v3189 = vld [vmem:[%s3 + $0x108] sm:$0xf]
      %v3190 = vld [vmem:[%s3 + $0x10c] sm:$0xf]
      %v3191 = vld [vmem:[%s3 + $0x110] sm:$0xf]
      %v3192 = vld [vmem:[%s3 + $0x114] sm:$0xf]
      %v3193 = vld [vmem:[%s3 + $0x118] sm:$0xf]
      %v3194 = vld [vmem:[%s3 + $0x11c] sm:$0xf]
      %v3195 = vld [vmem:[%s3 + $0x120] sm:$0xf]
      %v3196 = vld [vmem:[%s3 + $0x124] sm:$0xf]
      %v3197 = vld [vmem:[%s3 + $0x128] sm:$0xf]
      %v3198 = vld [vmem:[%s3 + $0x12c] sm:$0xf]
      %v3199 = vld [vmem:[%s3 + $0x130] sm:$0xf]
      %v3200 = vld [vmem:[%s3 + $0x134] sm:$0xf]
      %v3201 = vld [vmem:[%s3 + $0x138] sm:$0xf]
      %v3202 = vld [vmem:[%s3 + $0x13c] sm:$0xf]
      %v3203 = vld [vmem:[%s3 + $0x140] sm:$0xf]
      %v3204 = vld [vmem:[%s3 + $0x144] sm:$0xf]
      %v3205 = vld [vmem:[%s3 + $0x148] sm:$0xf]
      %v3206 = vld [vmem:[%s3 + $0x14c] sm:$0xf]
      %v3207 = vld [vmem:[%s3 + $0x150] sm:$0xf]
      %v3208 = vld [vmem:[%s3 + $0x154] sm:$0xf]
      %v3209 = vld [vmem:[%s3 + $0x158] sm:$0xf]
      %v3210 = vld [vmem:[%s3 + $0x15c] sm:$0xf]
      %v3211 = vld [vmem:[%s3 + $0x160] sm:$0xf]
      %v3212 = vld [vmem:[%s3 + $0x164] sm:$0xf]
      %v3213 = vld [vmem:[%s3 + $0x168] sm:$0xf]
      %v3214 = vld [vmem:[%s3 + $0x16c] sm:$0xf]
      %v3215 = vld [vmem:[%s3 + $0x170] sm:$0xf]
      %v3216 = vld [vmem:[%s3 + $0x174] sm:$0xf]
      %v3217 = vld [vmem:[%s3 + $0x178] sm:$0xf]
      %v3218 = vld [vmem:[%s3 + $0x17c] sm:$0xf]
      %v3315 = vunpack.c.l.b16 %v3123
      %v3316 = vunpack.c.l.b16 %v3124
      %v3317 = vunpack.c.l.b16 %v3125
      %v3318 = vunpack.c.l.b16 %v3126
      %v3319 = vunpack.c.l.b16 %v3127
      %v3320 = vunpack.c.l.b16 %v3128
      %v3321 = vunpack.c.l.b16 %v3129
      %v3322 = vunpack.c.l.b16 %v3130
      %v3323 = vunpack.c.l.b16 %v3131
      %v3324 = vunpack.c.l.b16 %v3132
      %v3325 = vunpack.c.l.b16 %v3133
      %v3326 = vunpack.c.l.b16 %v3134
      %v3327 = vunpack.c.l.b16 %v3135
      %v3328 = vunpack.c.l.b16 %v3136
      %v3329 = vunpack.c.l.b16 %v3137
      %v3330 = vunpack.c.l.b16 %v3138
      %v3331 = vunpack.c.l.b16 %v3139
      %v3332 = vunpack.c.l.b16 %v3140
      %v3333 = vunpack.c.l.b16 %v3141
      %v3334 = vunpack.c.l.b16 %v3142
      %v3335 = vunpack.c.l.b16 %v3143
      %v3336 = vunpack.c.l.b16 %v3144
      %v3337 = vunpack.c.l.b16 %v3145
      %v3338 = vunpack.c.l.b16 %v3146
      %v3339 = vunpack.c.l.b16 %v3147
      %v3340 = vunpack.c.l.b16 %v3148
      %v3341 = vunpack.c.l.b16 %v3149
      %v3342 = vunpack.c.l.b16 %v3150
      %v3343 = vunpack.c.l.b16 %v3151
      %v3344 = vunpack.c.l.b16 %v3152
      %v3345 = vunpack.c.l.b16 %v3153
      %v3346 = vunpack.c.l.b16 %v3154
      %v3347 = vunpack.c.l.b16 %v3155
      %v3348 = vunpack.c.l.b16 %v3156
      %v3349 = vunpack.c.l.b16 %v3157
      %v3350 = vunpack.c.l.b16 %v3158
      %v3351 = vunpack.c.l.b16 %v3159
      %v3352 = vunpack.c.l.b16 %v3160
      %v3353 = vunpack.c.l.b16 %v3161
      %v3354 = vunpack.c.l.b16 %v3162
      %v3355 = vunpack.c.l.b16 %v3163
      %v3356 = vunpack.c.l.b16 %v3164
      %v3357 = vunpack.c.l.b16 %v3165
      %v3358 = vunpack.c.l.b16 %v3166
      %v3359 = vunpack.c.l.b16 %v3167
      %v3360 = vunpack.c.l.b16 %v3168
      %v3361 = vunpack.c.l.b16 %v3169
      %v3362 = vunpack.c.l.b16 %v3170
      %v3363 = vunpack.c.l.b16 %v3171
      %v3364 = vunpack.c.l.b16 %v3172
      %v3365 = vunpack.c.l.b16 %v3173
      %v3366 = vunpack.c.l.b16 %v3174
      %v3367 = vunpack.c.l.b16 %v3175
      %v3368 = vunpack.c.l.b16 %v3176
      %v3369 = vunpack.c.l.b16 %v3177
      %v3370 = vunpack.c.l.b16 %v3178
      %v3371 = vunpack.c.l.b16 %v3179
      %v3372 = vunpack.c.l.b16 %v3180
      %v3373 = vunpack.c.l.b16 %v3181
      %v3374 = vunpack.c.l.b16 %v3182
      %v3375 = vunpack.c.l.b16 %v3183
      %v3376 = vunpack.c.l.b16 %v3184
      %v3377 = vunpack.c.l.b16 %v3185
      %v3378 = vunpack.c.l.b16 %v3186
      %v3379 = vunpack.c.l.b16 %v3187
      %v3380 = vunpack.c.l.b16 %v3188
      %v3381 = vunpack.c.l.b16 %v3189
      %v3382 = vunpack.c.l.b16 %v3190
      %v3383 = vunpack.c.l.b16 %v3191
      %v3384 = vunpack.c.l.b16 %v3192
      %v3385 = vunpack.c.l.b16 %v3193
      %v3386 = vunpack.c.l.b16 %v3194
      %v3387 = vunpack.c.l.b16 %v3195
      %v3388 = vunpack.c.l.b16 %v3196
      %v3389 = vunpack.c.l.b16 %v3197
      %v3390 = vunpack.c.l.b16 %v3198
      %v3391 = vunpack.c.l.b16 %v3199
      %v3392 = vunpack.c.l.b16 %v3200
      %v3393 = vunpack.c.l.b16 %v3201
      %v3394 = vunpack.c.l.b16 %v3202
      %v3395 = vunpack.c.l.b16 %v3203
      %v3396 = vunpack.c.l.b16 %v3204
      %v3397 = vunpack.c.l.b16 %v3205
      %v3398 = vunpack.c.l.b16 %v3206
      %v3399 = vunpack.c.l.b16 %v3207
      %v3400 = vunpack.c.l.b16 %v3208
      %v3401 = vunpack.c.l.b16 %v3209
      %v3402 = vunpack.c.l.b16 %v3210
      %v3403 = vunpack.c.l.b16 %v3211
      %v3404 = vunpack.c.l.b16 %v3212
      %v3405 = vunpack.c.l.b16 %v3213
      %v3406 = vunpack.c.l.b16 %v3214
      %v3407 = vunpack.c.l.b16 %v3215
      %v3408 = vunpack.c.l.b16 %v3216
      %v3409 = vunpack.c.l.b16 %v3217
      %v3410 = vunpack.c.l.b16 %v3218
      %v3411 = vpack.c.b16 %v3316, %v3315
      %v3412 = vpack.c.b16 %v3318, %v3317
      %v3413 = vpack.c.b16 %v3320, %v3319
      %v3414 = vpack.c.b16 %v3322, %v3321
      %v3415 = vpack.c.b16 %v3324, %v3323
      %v3416 = vpack.c.b16 %v3326, %v3325
      %v3417 = vpack.c.b16 %v3328, %v3327
      %v3418 = vpack.c.b16 %v3330, %v3329
      %v3419 = vpack.c.b16 %v3332, %v3331
      %v3420 = vpack.c.b16 %v3334, %v3333
      %v3421 = vpack.c.b16 %v3336, %v3335
      %v3422 = vpack.c.b16 %v3338, %v3337
      %v3423 = vpack.c.b16 %v3340, %v3339
      %v3424 = vpack.c.b16 %v3342, %v3341
      %v3425 = vpack.c.b16 %v3344, %v3343
      %v3426 = vpack.c.b16 %v3346, %v3345
      %v3427 = vpack.c.b16 %v3348, %v3347
      %v3428 = vpack.c.b16 %v3350, %v3349
      %v3429 = vpack.c.b16 %v3352, %v3351
      %v3430 = vpack.c.b16 %v3354, %v3353
      %v3431 = vpack.c.b16 %v3356, %v3355
      %v3432 = vpack.c.b16 %v3358, %v3357
      %v3433 = vpack.c.b16 %v3360, %v3359
      %v3434 = vpack.c.b16 %v3362, %v3361
      %v3435 = vpack.c.b16 %v3364, %v3363
      %v3436 = vpack.c.b16 %v3366, %v3365
      %v3437 = vpack.c.b16 %v3368, %v3367
      %v3438 = vpack.c.b16 %v3370, %v3369
      %v3439 = vpack.c.b16 %v3372, %v3371
      %v3440 = vpack.c.b16 %v3374, %v3373
      %v3441 = vpack.c.b16 %v3376, %v3375
      %v3442 = vpack.c.b16 %v3378, %v3377
      %v3443 = vpack.c.b16 %v3380, %v3379
      %v3444 = vpack.c.b16 %v3382, %v3381
      %v3445 = vpack.c.b16 %v3384, %v3383
      %v3446 = vpack.c.b16 %v3386, %v3385
      %v3447 = vpack.c.b16 %v3388, %v3387
      %v3448 = vpack.c.b16 %v3390, %v3389
      %v3449 = vpack.c.b16 %v3392, %v3391
      %v3450 = vpack.c.b16 %v3394, %v3393
      %v3451 = vpack.c.b16 %v3396, %v3395
      %v3452 = vpack.c.b16 %v3398, %v3397
      %v3453 = vpack.c.b16 %v3400, %v3399
      %v3454 = vpack.c.b16 %v3402, %v3401
      %v3455 = vpack.c.b16 %v3404, %v3403
      %v3456 = vpack.c.b16 %v3406, %v3405
      %v3457 = vpack.c.b16 %v3408, %v3407
      %v3458 = vpack.c.b16 %v3410, %v3409
      %3507 = vmatprep.subr.bf16.mxu0 0
      %3508 = vmatpush1.bf16.msra.mxu0 %v3418
      %3509 = vmatprep.subr.bf16.mxu0 0
      %3510 = vmatpush1.bf16.msra.mxu0 %v3417
      %3511 = vmatprep.subr.bf16.mxu0 0
      %3512 = vmatpush1.bf16.msra.mxu0 %v3416
      %3513 = vmatprep.subr.bf16.mxu0 0
      %3514 = vmatpush1.bf16.msra.mxu0 %v3415
      %3515 = vmatprep.subr.bf16.mxu0 0
      %3516 = vmatpush1.bf16.msra.mxu0 %v3414
      %3517 = vmatprep.subr.bf16.mxu0 0
      %3518 = vmatpush1.bf16.msra.mxu0 %v3413
      %3519 = vmatprep.subr.bf16.mxu0 0
      %3520 = vmatpush1.bf16.msra.mxu0 %v3412
      %3521 = vmatprep.subr.bf16.mxu0 0
      %3522 = vmatpush1.bf16.msra.mxu0 %v3411
      %3523 = vmatprep.subr.bf16.mxu0 0
      %3524 = vmatpush2.bf16.msra.mxu0 %v3426
      %3525 = vmatprep.subr.bf16.mxu0 0
      %3526 = vmatpush2.bf16.msra.mxu0 %v3425
      %3527 = vmatprep.subr.bf16.mxu0 0
      %3528 = vmatpush2.bf16.msra.mxu0 %v3424
      %3529 = vmatprep.subr.bf16.mxu0 0
      %3530 = vmatpush2.bf16.msra.mxu0 %v3423
      %3531 = vmatprep.subr.bf16.mxu0 0
      %3532 = vmatpush2.bf16.msra.mxu0 %v3422
      %3533 = vmatprep.subr.bf16.mxu0 0
      %3534 = vmatpush2.bf16.msra.mxu0 %v3421
      %3535 = vmatprep.subr.bf16.mxu0 0
      %3536 = vmatpush2.bf16.msra.mxu0 %v3420
      %3537 = vmatprep.subr.bf16.mxu0 0
      %3538 = vmatpush2.bf16.msra.mxu0 %v3419
      %3539 = vmatprep.mubr.bf16.mxu0 %v3076
      %3540 = vmatmul.mubr.bf16.gmra.mxu0 %v3075
      %v3541 = vpop.f32.mrf.mxu0
      %v3542 = vadd.f32 0.0, %v3541
      %v3543 = vpop.f32.mrf.mxu0
      %v3544 = vpop.f32.mrf.mxu0
      %v3545 = vadd.f32 0.0, %v3544
      %v3546 = vpop.f32.mrf.mxu0
      %3547 = vdwg.mxu0
      %3548 = vmatprep.subr.bf16.mxu0 0
      %3549 = vmatpush1.bf16.msra.mxu0 %v3434
      %3550 = vmatprep.subr.bf16.mxu0 0
      %3551 = vmatpush1.bf16.msra.mxu0 %v3433
      %3552 = vmatprep.subr.bf16.mxu0 0
      %3553 = vmatpush1.bf16.msra.mxu0 %v3432
      %3554 = vmatprep.subr.bf16.mxu0 0
      %3555 = vmatpush1.bf16.msra.mxu0 %v3431
      %3556 = vmatprep.subr.bf16.mxu0 0
      %3557 = vmatpush1.bf16.msra.mxu0 %v3430
      %3558 = vmatprep.subr.bf16.mxu0 0
      %3559 = vmatpush1.bf16.msra.mxu0 %v3429
      %3560 = vmatprep.subr.bf16.mxu0 0
      %3561 = vmatpush1.bf16.msra.mxu0 %v3428
      %3562 = vmatprep.subr.bf16.mxu0 0
      %3563 = vmatpush1.bf16.msra.mxu0 %v3427
      %3564 = vmatprep.subr.bf16.mxu0 0
      %3565 = vmatpush2.bf16.msra.mxu0 %v3442
      %3566 = vmatprep.subr.bf16.mxu0 0
      %3567 = vmatpush2.bf16.msra.mxu0 %v3441
      %3568 = vmatprep.subr.bf16.mxu0 0
      %3569 = vmatpush2.bf16.msra.mxu0 %v3440
      %3570 = vmatprep.subr.bf16.mxu0 0
      %3571 = vmatpush2.bf16.msra.mxu0 %v3439
      %3572 = vmatprep.subr.bf16.mxu0 0
      %3573 = vmatpush2.bf16.msra.mxu0 %v3438
      %3574 = vmatprep.subr.bf16.mxu0 0
      %3575 = vmatpush2.bf16.msra.mxu0 %v3437
      %3576 = vmatprep.subr.bf16.mxu0 0
      %3577 = vmatpush2.bf16.msra.mxu0 %v3436
      %3578 = vmatprep.subr.bf16.mxu0 0
      %3579 = vmatpush2.bf16.msra.mxu0 %v3435
      %3580 = vmatprep.mubr.bf16.mxu0 %v3107
      %3581 = vmatmul.mubr.bf16.gmra.mxu0 %v3095
      %v3582 = vpop.f32.mrf.mxu0
      %v3583 = vadd.f32 %v3542, %v3582
      %v3584 = vpop.f32.mrf.mxu0
      %v3585 = vpop.f32.mrf.mxu0
      %v3586 = vadd.f32 %v3545, %v3585
      %v3587 = vpop.f32.mrf.mxu0
      %3588 = vdwg.mxu0
      %3589 = vmatprep.subr.bf16.mxu0 0
      %3590 = vmatpush1.bf16.msra.mxu0 %v3450
      %3591 = vmatprep.subr.bf16.mxu0 0
      %3592 = vmatpush1.bf16.msra.mxu0 %v3449
      %3593 = vmatprep.subr.bf16.mxu0 0
      %3594 = vmatpush1.bf16.msra.mxu0 %v3448
      %3595 = vmatprep.subr.bf16.mxu0 0
      %3596 = vmatpush1.bf16.msra.mxu0 %v3447
      %3597 = vmatprep.subr.bf16.mxu0 0
      %3598 = vmatpush1.bf16.msra.mxu0 %v3446
      %3599 = vmatprep.subr.bf16.mxu0 0
      %3600 = vmatpush1.bf16.msra.mxu0 %v3445
      %3601 = vmatprep.subr.bf16.mxu0 0
      %3602 = vmatpush1.bf16.msra.mxu0 %v3444
      %3603 = vmatprep.subr.bf16.mxu0 0
      %3604 = vmatpush1.bf16.msra.mxu0 %v3443
      %3605 = vmatprep.subr.bf16.mxu0 0
      %3606 = vmatpush2.bf16.msra.mxu0 %v3458
      %3607 = vmatprep.subr.bf16.mxu0 0
      %3608 = vmatpush2.bf16.msra.mxu0 %v3457
      %3609 = vmatprep.subr.bf16.mxu0 0
      %3610 = vmatpush2.bf16.msra.mxu0 %v3456
      %3611 = vmatprep.subr.bf16.mxu0 0
      %3612 = vmatpush2.bf16.msra.mxu0 %v3455
      %3613 = vmatprep.subr.bf16.mxu0 0
      %3614 = vmatpush2.bf16.msra.mxu0 %v3454
      %3615 = vmatprep.subr.bf16.mxu0 0
      %3616 = vmatpush2.bf16.msra.mxu0 %v3453
      %3617 = vmatprep.subr.bf16.mxu0 0
      %3618 = vmatpush2.bf16.msra.mxu0 %v3452
      %3619 = vmatprep.subr.bf16.mxu0 0
      %3620 = vmatpush2.bf16.msra.mxu0 %v3451
      %3621 = vmatprep.mubr.bf16.mxu0 %v3120
      %3622 = vmatmul.mubr.bf16.gmra.mxu0 %v3117
      %v3623 = vpop.f32.mrf.mxu0
      %v3624 = vadd.f32 %v3583, %v3623
      %v3625 = vpop.f32.mrf.mxu0
      %v3626 = vpop.f32.mrf.mxu0
      %v3627 = vadd.f32 %v3586, %v3626
      %v3628 = vpop.f32.mrf.mxu0
      %3629 = vdwg.mxu0
      %v3630 = vadd.f32 %v2966, %v3624
      %v3631 = vadd.f32 %v2969, %v3627
      %v3632 = vtanh.pop %v3630
      %v3633 = vtanh.pop %v3631
      %v3634 = vsub.f32 1.0, %v2995
      %v3635 = vsub.f32 1.0, %v2997
      %v3636 = vmul.f32 %v3634, %v2972
      %v3637 = vmul.f32 %v3635, %v2973
      %v3638 = vmul.f32 %v2995, %v3632
      %v3639 = vmul.f32 %v2997, %v3633
      %v3640 = vadd.f32 %v3636, %v3638
      %v3641 = vadd.f32 %v3637, %v3639
      %3642 = vst [vmem:[%s244] sm:$0xff] %v3640
      %3643 = vst [vmem:[%s244 + $0x8] sm:$0xff] %v3641
      %p3644 = scmp.lt.s32.totalorder %s16, 1
      %s3645 = scalar_select %p3644, %s16, 1
      %s3646 = smul.addr %s3645, 2
      %s3647 = smul.addr %s3646, 8
      %s3648 = scalar_lea.vmem %s5, %s3647
      // Predicated region
      $region41: #{encoder_decoder.4} parent=39 // pred_check
        %p3649 = pneg %p149
      $region42: #{encoder_decoder.4} parent=39 // pred_check_branch
        %3651 = sbr.rel (%p3649) target = $region44
      $region43: #{encoder_decoder.4} parent=39 // pred_region
        _
      $region44: #{encoder_decoder.4} parent=39 // pred_fallthru
        _
    $region40: #{encoder_decoder.4} parent=5 // pred_fallthru
      _
    %p3652 = scmp.le.s32.totalorder 2, %s11
    // Predicated region
    $region45: #{encoder_decoder.4} parent=5 // pred_check
      %p3653 = pneg %p3652
    $region46: #{encoder_decoder.4} parent=5 // pred_check_branch
      %3655 = sbr.rel (%p3653) target = $region48
    $region47: #{encoder_decoder.4} parent=5 // pred_region
      %s3656 = ssub.s32 %s11, 2
      // Predicated region
      $region49: #{encoder_decoder.4} parent=47 // pred_check
        %p3657 = pneg %p155
      $region50: #{encoder_decoder.4} parent=47 // pred_check_branch
        %3659 = sbr.rel (%p3657) target = $region52
      $region51: #{encoder_decoder.4} parent=47 // pred_region
        %p3660 = scmp.lt.s32.totalorder %s17, 1
        %s3661 = scalar_select %p3660, %s17, 1
        %s3662 = smul.addr %s3661, 2
        %s3663 = smul.addr %s3662, 8
        %s3664 = scalar_lea.vmem %s5, %s3663
      $region52: #{encoder_decoder.4} parent=47 // pred_fallthru
        _
    $region48: #{encoder_decoder.4} parent=5 // pred_fallthru
      _
  $region6: #{encoder_decoder.4} parent=0 // loop_footer
    %s15 = sadd.s32 1, %s11
  $region7: #{encoder_decoder.4} parent=0 // loop_footer_branch
    %10 = sbr.rel target = $region3
  $region8: #{encoder_decoder.4} parent=0 // loop_exit
    _

</llo_original>
